<compile_context>
chip_gen: v7x
topology: tpu7x:2x2x1
jax: 0.10.0
libtpu: 0.0.40
codegen_flags: <defaults>
</compile_context>

<pallas_src>
import functools

import jax
import jax.numpy as jnp
from jax.experimental import pallas as pl
from jax.experimental.pallas import tpu as pltpu


_MIB = 1024 * 1024


# ---------------------------------------------------------------------------
# Generation-dependent configuration
# ---------------------------------------------------------------------------

def _vmem_capacity_bytes():
    try:
        info = pltpu.get_tpu_info()
        for attr in ("vmem_capacity_bytes", "vmem_bytes", "vmem_size_bytes"):
            v = getattr(info, attr, None)
            if v:
                return int(v)
    except Exception:
        pass
    return 64 * _MIB  # conservative (v7x-sized) fallback


def _tpu_config():
    vmem = _vmem_capacity_bytes()
    if vmem >= 100 * _MIB:
        # v5e / v6e: 128 MiB physical VMEM, single TensorCore.
        return {
            "vmem_limit": 96 * _MIB,
            "tk_big": 8192,    # first layer K tile  -> 16 MiB bf16 weight tile
            "tn_first": 1024,  # full N of the first layer (one TC anyway)
            "tn_last": 8192,   # last layer N tile   -> 16 MiB bf16 weight tile
        }
    # v7x: 64 MiB physical VMEM, 2 TensorCores -> split N of the first layer so
    # dimension_semantics=("parallel","parallel","arbitrary") shards the weight
    # stream across both cores.
    return {
        "vmem_limit": 44 * _MIB,
        "tk_big": 8192,
        "tn_first": 512,
        "tn_last": 4096,
    }


_CFG = _tpu_config()


# ---------------------------------------------------------------------------
# Tiling helpers
# ---------------------------------------------------------------------------

def _pick_tile(dim, pref, align):
    """Largest tile <= pref that divides `dim` and is a multiple of `align`."""
    if dim <= pref:
        return dim
    t = (pref // align) * align
    while t >= align:
        if dim % t == 0:
            return t
        t -= align
    raise ValueError(
        f"no {align}-aligned tile <= {pref} divides dim={dim}; "
        "would require staging the full dimension in VMEM")


def _max_tm(tk, tn, budget):
    """Largest tm whose double-buffered footprint fits the VMEM budget.

    2*(tm,tk) f32 x-tile + 2*(tk,tn) bf16 W-tile + 2*(1,tn) f32 bias
    + 2*(tm,tn) f32 out-tile <= budget.
    """
    fixed = 2 * tk * tn * 2 + 2 * tn * 4
    per_tm = 2 * tk * 4 + 2 * tn * 4
    avail = budget - fixed
    if avail <= 0:
        return 16
    return max(16, avail // per_tm)


def _choose_tm(m, cap):
    """Pick tm (power-of-two multiple of 16) bounded by `cap` and batch size."""
    m16 = ((m + 15) // 16) * 16
    tm = 16
    for c in (16, 32, 64, 128, 256, 512, 1024):
        if c <= cap:
            tm = c
        if c >= m16:
            break
    return tm


# ---------------------------------------------------------------------------
# Big layers: tiled  y = act(x @ W + b)  (first and last Linear of the model)
# ---------------------------------------------------------------------------

def _linear_act_kernel(x_ref, w_ref, b_ref, o_ref, *, activation, single_k):
    def finish(z):
        if activation == "relu":
            z = jnp.maximum(z, 0.0)
        elif activation == "sigmoid":
            z = jax.nn.sigmoid(z)
        return z.astype(o_ref.dtype)

    if single_k:
        # K grid of 1: write directly, no zero-init / read-modify-write.
        z = jnp.dot(x_ref[...].astype(jnp.bfloat16), w_ref[...],
                    preferred_element_type=jnp.float32) + b_ref[...]
        o_ref[...] = finish(z)
    else:
        k = pl.program_id(2)

        @pl.when(k == 0)
        def _():
            o_ref[...] = jnp.zeros_like(o_ref)

        # bf16 operands on the MXU, accumulate in the resident f32 output block.
        o_ref[...] += jnp.dot(x_ref[...].astype(jnp.bfloat16), w_ref[...],
                              preferred_element_type=jnp.float32)

        @pl.when(k == pl.num_programs(2) - 1)
        def _():
            o_ref[...] = finish(o_ref[...] + b_ref[...])


def linear_act(x, w, b, activation, *, tm, tk_pref, tn_pref):
    """Fused y = activation(x @ w + b).  x: (M,K) f32, w: (K,N) bf16, b: (1,N) f32."""
    M, K = x.shape
    Kw, N = w.shape
    assert K == Kw and b.shape == (1, N)
    assert M % tm == 0

    tk = _pick_tile(K, tk_pref, 128)
    tn = _pick_tile(N, tn_pref, 128)
    single_k = (K == tk)

    kernel = functools.partial(_linear_act_kernel,
                               activation=activation, single_k=single_k)

    return pl.pallas_call(
        kernel,
        out_shape=jax.ShapeDtypeStruct((M, N), jnp.float32),
        grid_spec=pltpu.PrefetchScalarGridSpec(
            num_scalar_prefetch=0,
            grid=(M // tm, N // tn, K // tk),             # reduction axis last
            in_specs=[
                pl.BlockSpec((tm, tk), lambda i, j, k: (i, k)),   # x tile (f32)
                pl.BlockSpec((tk, tn), lambda i, j, k: (k, j)),   # W tile (bf16)
                pl.BlockSpec((1, tn), lambda i, j, k: (0, j)),    # bias tile
            ],
            out_specs=pl.BlockSpec((tm, tn), lambda i, j, k: (i, j)),
        ),
        compiler_params=pltpu.CompilerParams(
            dimension_semantics=("parallel", "parallel", "arbitrary"),
            vmem_limit_bytes=_CFG["vmem_limit"],
        ),
    )(x, w, b)


# ---------------------------------------------------------------------------
# Middle four layers fused into one kernel (all weights resident in VMEM)
# ---------------------------------------------------------------------------

def _fused_mid_kernel(x_ref, w1, b1, w2, b2, w3, b3, w4, b4, o_ref):
    h = x_ref[...].astype(jnp.bfloat16)
    z = None
    for w_ref, b_ref in ((w1, b1), (w2, b2), (w3, b3), (w4, b4)):
        z = jnp.dot(h, w_ref[...], preferred_element_type=jnp.float32) + b_ref[...]
        z = jnp.maximum(z, 0.0)                 # all four middle layers use ReLU
        h = z.astype(jnp.bfloat16)
    o_ref[...] = z.astype(o_ref.dtype)


def fused_middle(x, layers, *, tm):
    """Apply four Linear+ReLU layers (1024->512->256->512->1024) in one pallas_call."""
    M, K = x.shape
    assert M % tm == 0
    n_out = layers[-1][0].shape[1]

    args = [x]
    in_specs = [pl.BlockSpec((tm, K), lambda i: (i, 0))]
    for w, b in layers:
        args.append(w)
        in_specs.append(pl.BlockSpec(w.shape, lambda i: (0, 0)))   # resident weights
        args.append(b)
        in_specs.append(pl.BlockSpec(b.shape, lambda i: (0, 0)))

    return pl.pallas_call(
        _fused_mid_kernel,
        out_shape=jax.ShapeDtypeStruct((M, n_out), jnp.float32),
        grid_spec=pltpu.PrefetchScalarGridSpec(
            num_scalar_prefetch=0,
            grid=(M // tm,),
            in_specs=in_specs,
            out_specs=pl.BlockSpec((tm, n_out), lambda i: (i, 0)),
        ),
        compiler_params=pltpu.CompilerParams(
            dimension_semantics=("parallel",),
            vmem_limit_bytes=_CFG["vmem_limit"],
        ),
    )(*args)


# ---------------------------------------------------------------------------
# Autoencoder parameters + forward
# ---------------------------------------------------------------------------

def _init_linear(key, fan_in, fan_out):
    """PyTorch-style uniform(-1/sqrt(fan_in), +1/sqrt(fan_in)); W stored as bf16."""
    kw, kb = jax.random.split(key)
    bound = 1.0 / (fan_in ** 0.5)
    w = jax.random.uniform(kw, (fan_in, fan_out), jnp.float32, -bound, bound)
    b = jax.random.uniform(kb, (1, fan_out), jnp.float32, -bound, bound)
    return w.astype(jnp.bfloat16), b


def make_autoencoder_params(key, in_dim):
    # encoder: in -> 1024 -> 512 -> 256 ; decoder: 256 -> 512 -> 1024 -> in
    dims = [in_dim, 1024, 512, 256, 512, 1024, in_dim]
    keys = jax.random.split(key, len(dims) - 1)
    return [_init_linear(keys[i], dims[i], dims[i + 1]) for i in range(len(dims) - 1)]


_ACTS = ("relu", "relu", "relu", "relu", "relu", "sigmoid")


def autoencoder_forward(params, x):
    M = x.shape[0]
    w0, b0 = params[0]     # Linear(IN, 1024)
    w5, b5 = params[5]     # Linear(1024, IN)

    tk0 = _pick_tile(w0.shape[0], _CFG["tk_big"], 128)
    tn0 = _pick_tile(w0.shape[1], _CFG["tn_first"], 128)
    tk5 = _pick_tile(w5.shape[0], _CFG["tk_big"], 128)
    tn5 = _pick_tile(w5.shape[1], _CFG["tn_last"], 128)

    budget = _CFG["vmem_limit"]
    tm = _choose_tm(M, min(_max_tm(tk0, tn0, budget), _max_tm(tk5, tn5, budget)))

    m_pad = (-M) % tm            # pad batch to a multiple of tm (>= 16)
    if m_pad:
        x = jnp.pad(x, ((0, m_pad), (0, 0)))

    # TODO(synk): at very large batch sizes, emit the last layer's output in bf16
    # to halve the (M, IN) HBM writeback; kept f32 here to match the module dtype.
    h = linear_act(x, w0, b0, "relu", tm=tm, tk_pref=tk0, tn_pref=tn0)
    h = fused_middle(h, params[1:5], tm=min(tm, 256))
    y = linear_act(h, w5, b5, "sigmoid", tm=tm, tk_pref=tk5, tn_pref=tn5)
    return y[:M]


def autoencoder_reference(params, x):
    """Pure-jnp reference using the same bf16 weights / bf16 MXU operands."""
    for (w, b), act in zip(params, _ACTS):
        z = jnp.dot(x.astype(jnp.bfloat16), w, preferred_element_type=jnp.float32) + b
        x = jnp.maximum(z, 0.0) if act == "relu" else jax.nn.sigmoid(z)
    return x


if __name__ == "__main__":
    # Small smoke-test shapes: batch=2, input dim scaled down 147456 -> 3072
    # (hidden dims 1024/512/256 kept exactly as in the module).  The real
    # IN=147456 is divisible by all chosen tile sizes and works unchanged.
    BATCH = 2
    IN_DIM = 3072

    key = jax.random.PRNGKey(0)
    k_params, k_x = jax.random.split(key)

    params = make_autoencoder_params(k_params, IN_DIM)
    x = jax.random.uniform(k_x, (BATCH, IN_DIM), jnp.float32)

    y = jax.block_until_ready(autoencoder_forward(params, x))
    y_ref = jax.block_until_ready(autoencoder_reference(params, x))

    assert y.shape == (BATCH, IN_DIM), y.shape
    max_err = float(jnp.max(jnp.abs(y - y_ref)))
    assert max_err < 2e-3, f"mismatch vs reference: {max_err}"

    print("KERNEL_OK")
</pallas_src>

<mosaic_0001>
module attributes {stable_mosaic.version = 11 : i64} {
  func.func @_linear_act_kernel(%arg0: i32, %arg1: i32, %arg2: i32, %arg3: memref<16x3072xf32, #tpu.memory_space<vmem>>, %arg4: memref<3072x512xbf16, #tpu.memory_space<vmem>>, %arg5: memref<1x512xf32, #tpu.memory_space<vmem>>, %arg6: memref<16x512xf32, #tpu.memory_space<vmem>>) attributes {dimension_semantics = [#tpu.dimension_semantics<parallel>, #tpu.dimension_semantics<parallel>, #tpu.dimension_semantics<arbitrary>], iteration_bounds = array<i64: 1, 2, 1>, scalar_prefetch = 0 : i64, scratch_operands = 0 : i64, tpu.core_type = #tpu.core_type<tc>, window_params = [{transform_indices = @transform_0, window_bounds = array<i64: 16, 3072>}, {transform_indices = @transform_1, window_bounds = array<i64: 3072, 512>}, {transform_indices = @transform_2, window_bounds = array<i64: 1, 512>}, {transform_indices = @transform_3, window_bounds = array<i64: 16, 512>}]} {
    %c0 = arith.constant 0 : index
    %c0_0 = arith.constant 0 : index
    %0 = vector.load %arg3[%c0, %c0_0] : memref<16x3072xf32, #tpu.memory_space<vmem>>, vector<16x3072xf32>
    %1 = arith.truncf %0 : vector<16x3072xf32> to vector<16x3072xbf16>
    %c0_1 = arith.constant 0 : index
    %c0_2 = arith.constant 0 : index
    %2 = vector.load %arg4[%c0_1, %c0_2] : memref<3072x512xbf16, #tpu.memory_space<vmem>>, vector<3072x512xbf16>
    %cst = arith.constant dense<0.000000e+00> : vector<16x512xf32>
    %3 = tpu.matmul %1, %2, %cst {dimension_numbers = #tpu.dot_dimension_numbers<[1], [0], [0], [1], [0, 0, 1, 1], [], []>} : vector<16x3072xbf16>, vector<3072x512xbf16>, vector<16x512xf32> -> vector<16x512xf32>
    %c0_3 = arith.constant 0 : index
    %c0_4 = arith.constant 0 : index
    %4 = vector.load %arg5[%c0_3, %c0_4] : memref<1x512xf32, #tpu.memory_space<vmem>>, vector<1x512xf32>
    %5 = vector.broadcast %4 : vector<1x512xf32> to vector<16x512xf32>
    %6 = arith.addf %3, %5 : vector<16x512xf32>
    %cst_5 = arith.constant 0.000000e+00 : f32
    %7 = vector.broadcast %cst_5 : f32 to vector<16x512xf32>
    %8 = arith.maximumf %6, %7 : vector<16x512xf32>
    %c0_6 = arith.constant 0 : index
    %c0_7 = arith.constant 0 : index
    %9 = vector.load %arg6[%c0_6, %c0_7] : memref<16x512xf32, #tpu.memory_space<vmem>>, vector<16x512xf32>
    tpu.vector_store %arg6[%c0_6, %c0_7], %8 {strides = array<i32>} : memref<16x512xf32, #tpu.memory_space<vmem>>, vector<16x512xf32>,
    return
  }
  func.func @transform_0(%arg0: i32, %arg1: i32, %arg2: i32) -> (i32, i32) {
    %c0_i32 = arith.constant 0 : i32
    return %arg0, %arg2 : i32, i32
  }
  func.func @transform_1(%arg0: i32, %arg1: i32, %arg2: i32) -> (i32, i32) {
    %c0_i32 = arith.constant 0 : i32
    return %arg2, %arg1 : i32, i32
  }
  func.func @transform_2(%arg0: i32, %arg1: i32, %arg2: i32) -> (i32, i32) {
    %c0_i32 = arith.constant 0 : i32
    %c0_i32_0 = arith.constant 0 : i32
    return %c0_i32, %arg1 : i32, i32
  }
  func.func @transform_3(%arg0: i32, %arg1: i32, %arg2: i32) -> (i32, i32) {
    %c0_i32 = arith.constant 0 : i32
    return %arg0, %arg1 : i32, i32
  }
}

</mosaic_0001>

<llo_original>
// kernel: tpu_custom_call.1
$region0: #{tpu_custom_call.1}
  #allocation0 [shape = 'u32[]', space=smem, size = 0x4, offset = 0x4, fixed_abs, tag = 'smem constant byte address 0x4 - core index']
  #allocation1 [shape = 'u32[144,128]{1,0:T(1,128)}', space=vmem, size = 0x12000, scoped, tag = 'internal scratch']
  %s0 = inlined_call_operand.hbm [shape: f32[16,3072], index: 0, kind: input, shape index: {}]
  %s1 = inlined_call_operand.hbm [shape: bf16[3072,1024], index: 1, kind: input, shape index: {}]
  %s2 = inlined_call_operand.hbm [shape: f32[1,1024], index: 2, kind: input, shape index: {}]
  %s3 = inlined_call_operand.hbm [shape: f32[16,1024], index: 3, kind: output, shape index: {}]
  %s4 = sld [smem:[#allocation0]]
  $region57: #{tpu_custom_call.1} parent=0
    _
  %s6 = ssub.s32 1, %s4
  %s7 = scalar_select 0, %s6, %s4
  $region1: #{tpu_custom_call.1} parent=0
    #allocation2 [shape = 'u8[196608]{0}', space=vmem, size = 0x30000, scoped, tag = 'input window, operand 0, single buffered']
    #allocation3 [shape = 's32[2]{0}', space=sflag, size = 0x8, scoped, tag = 'scoped memory for tpu_custom_call.1']
    #allocation4 [shape = 's32[2]{0}', space=sflag, size = 0x8, scoped, tag = 'scoped memory for tpu_custom_call.1']
    #allocation5 [shape = 'u8[6291456]{0}', space=vmem, size = 0x600000, scoped, tag = 'input window, operand 1']
    #allocation6 [shape = 's32[2]{0}', space=sflag, size = 0x8, scoped, tag = 'scoped memory for tpu_custom_call.1']
    #allocation7 [shape = 'u8[4096]{0}', space=vmem, size = 0x1000, scoped, tag = 'input window, operand 2']
    #allocation8 [shape = 'u8[65536]{0}', space=vmem, size = 0x10000, scoped, tag = 'output window, operand 0']
    %8 = vsyncpa [#allocation3], 0
    %9 = vsyncpa [#allocation6], 0
    %s10 = scalar_lea.sflag [#allocation6], 1
    %11 = vsyncpa %s10, 0
    %12 = vsyncpa [#allocation4], 0
    %s13 = scalar_lea.sflag [#allocation4], 1
    %14 = vsyncpa %s13, 0
    loop: start=0, step=1, limit=4
    $region2: #{tpu_custom_call.1} parent=1 // loop_pre_header
      _
    $region3: #{tpu_custom_call.1} parent=1 // loop_header
      %s16 = sphi 0, %s20
      %p17 = scmp.ge.s32.totalorder %s16, 4
      %s23 = sphi 0, %s42
      %s24 = sphi 0, %s38
      %s25 = sphi 0, %s34
      %s26 = sphi 0, %s23
      %s27 = sphi 0, %s24
      %s28 = sphi 0, %s25
      %s29 = sphi 0, %s26
      %s30 = sphi 0, %s27
      %s31 = sphi 0, %s28
      %s47 = sphi 0, %s49
      %s50 = sphi 0, %s47
      %s51 = sphi 0, %s50
      %s67 = sphi 0, %s51
      %s75 = sphi 0, %s77
      %s78 = sphi 0, %s75
      %s79 = sphi 0, %s78
      %s95 = sphi 0, %s79
      %s101 = sphi 0, %s103
      %s104 = sphi 0, %s101
      %s105 = sphi 0, %s104
      %s121 = sphi 0, %s105
      %s129 = sphi 0, %s131
      %s132 = sphi 0, %s129
      %s133 = sphi 0, %s132
      %s149 = sphi 0, %s133
    $region4: #{tpu_custom_call.1} parent=1 // loop_header_branch
      %19 = sbr.rel (%p17) target = $region8
    $region5: #{tpu_custom_call.1} parent=1 // loop_body
      %s21 = ssub.s32 %s16, 1
      %s22 = ssub.s32 %s16, 2
      %s32 = sadd.s32 1, %s25
      %p33 = scmp.ge.s32.totalorder %s32, 1
      %s34 = scalar_select %p33, 0, %s32
      %s35 = sadd.s32 1, %s24
      %s36 = scalar_select %p33, %s35, %s24
      %p37 = scmp.ge.s32.totalorder %s36, 2
      %s38 = scalar_select %p37, 0, %s36
      %s39 = sadd.s32 1, %s23
      %s40 = scalar_select %p37, %s39, %s23
      %p41 = scmp.ge.s32.totalorder %s40, 1
      %s42 = scalar_select %p41, 0, %s40
      %s43 = ssub.s32 %s23, %s42
      %s44 = ssub.s32 %s25, %s34
      %s45 = sor.u32 %s43, %s44
      %p46 = scmp.eq.s32.totalorder %s45, 0
      %s48 = sadd.s32 %s47, 1
      %s49 = scalar_select %p46, %s47, %s48
      %p52 = pneg %p46
      %p53 = scmp.eq.s32.totalorder %s16, 1
      %p54 = por %p52, %p53
      %p55 = scmp.ne.s32.totalorder %s47, %s50
      %p56 = scmp.eq.s32.totalorder %s16, 0
      %p57 = por %p55, %p56
      %p58 = scmp.ne.s32.totalorder %s47, %s50
      %p59 = scmp.eq.s32.totalorder %s21, 1
      %p60 = por %p58, %p59
      %p61 = scmp.ne.s32.totalorder %s50, %s51
      %p62 = scmp.eq.s32.totalorder %s21, 0
      %p63 = por %p61, %p62
      %p64 = scmp.ne.s32.totalorder %s50, %s51
      %p65 = scmp.eq.s32.totalorder %s22, 1
      %p66 = por %p64, %p65
      %p68 = scmp.ne.s32.totalorder %s51, %s67
      %p69 = scmp.eq.s32.totalorder %s22, 0
      %p70 = por %p68, %p69
      %s71 = ssub.s32 %s25, %s34
      %s72 = ssub.s32 %s24, %s38
      %s73 = sor.u32 %s71, %s72
      %p74 = scmp.eq.s32.totalorder %s73, 0
      %s76 = sadd.s32 %s75, 1
      %s77 = scalar_select %p74, %s75, %s76
      %p80 = pneg %p74
      %p81 = scmp.eq.s32.totalorder %s16, 1
      %p82 = por %p80, %p81
      %p83 = scmp.ne.s32.totalorder %s75, %s78
      %p84 = scmp.eq.s32.totalorder %s16, 0
      %p85 = por %p83, %p84
      %p86 = scmp.ne.s32.totalorder %s75, %s78
      %p87 = scmp.eq.s32.totalorder %s21, 1
      %p88 = por %p86, %p87
      %p89 = scmp.ne.s32.totalorder %s78, %s79
      %p90 = scmp.eq.s32.totalorder %s21, 0
      %p91 = por %p89, %p90
      %p92 = scmp.ne.s32.totalorder %s78, %s79
      %p93 = scmp.eq.s32.totalorder %s22, 1
      %p94 = por %p92, %p93
      %p96 = scmp.ne.s32.totalorder %s79, %s95
      %p97 = scmp.eq.s32.totalorder %s22, 0
      %p98 = por %p96, %p97
      %s99 = ssub.s32 %s24, %s38
      %p100 = scmp.eq.s32.totalorder %s99, 0
      %s102 = sadd.s32 %s101, 1
      %s103 = scalar_select %p100, %s101, %s102
      %p106 = pneg %p100
      %p107 = scmp.eq.s32.totalorder %s16, 1
      %p108 = por %p106, %p107
      %p109 = scmp.ne.s32.totalorder %s101, %s104
      %p110 = scmp.eq.s32.totalorder %s16, 0
      %p111 = por %p109, %p110
      %p112 = scmp.ne.s32.totalorder %s101, %s104
      %p113 = scmp.eq.s32.totalorder %s21, 1
      %p114 = por %p112, %p113
      %p115 = scmp.ne.s32.totalorder %s104, %s105
      %p116 = scmp.eq.s32.totalorder %s21, 0
      %p117 = por %p115, %p116
      %p118 = scmp.ne.s32.totalorder %s104, %s105
      %p119 = scmp.eq.s32.totalorder %s22, 1
      %p120 = por %p118, %p119
      %p122 = scmp.ne.s32.totalorder %s105, %s121
      %p123 = scmp.eq.s32.totalorder %s22, 0
      %p124 = por %p122, %p123
      %s125 = ssub.s32 %s23, %s42
      %s126 = ssub.s32 %s24, %s38
      %s127 = sor.u32 %s125, %s126
      %p128 = scmp.eq.s32.totalorder %s127, 0
      %s130 = sadd.s32 %s129, 1
      %s131 = scalar_select %p128, %s129, %s130
      %p134 = pneg %p128
      %p135 = scmp.eq.s32.totalorder %s16, 1
      %p136 = por %p134, %p135
      %p137 = scmp.ne.s32.totalorder %s129, %s132
      %p138 = scmp.eq.s32.totalorder %s16, 0
      %p139 = por %p137, %p138
      %p140 = scmp.ne.s32.totalorder %s129, %s132
      %p141 = scmp.eq.s32.totalorder %s21, 1
      %p142 = por %p140, %p141
      %p143 = scmp.ne.s32.totalorder %s132, %s133
      %p144 = scmp.eq.s32.totalorder %s21, 0
      %p145 = por %p143, %p144
      %p146 = scmp.ne.s32.totalorder %s132, %s133
      %p147 = scmp.eq.s32.totalorder %s22, 1
      %p148 = por %p146, %p147
      %p150 = scmp.ne.s32.totalorder %s133, %s149
      %p151 = scmp.eq.s32.totalorder %s22, 0
      %p152 = por %p150, %p151
      %p153 = scmp.le.s32.totalorder 1, %s16
      %p154 = scmp.lt.s32.totalorder %s16, 3
      %p155 = pnand %p153, %p154
      %p156 = pneg %p155
      // Predicated region
      $region9: #{tpu_custom_call.1} parent=5 // pred_check
        _
      $region10: #{tpu_custom_call.1} parent=5 // pred_check_branch
        %158 = sbr.rel (%p155) target = $region12
      $region11: #{tpu_custom_call.1} parent=5 // pred_region
        %s159 = ssub.s32 %s16, 1
        // Predicated region
        $region13: #{tpu_custom_call.1} parent=11 // pred_check
          %p160 = pneg %p63
        $region14: #{tpu_custom_call.1} parent=11 // pred_check_branch
          %162 = sbr.rel (%p160) target = $region16
        $region15: #{tpu_custom_call.1} parent=11 // pred_region
          %s163 = smul.u32 2, %s26
          %s164 = smul.u32 24, %s28
          %s166 = ssub.s32 6144, 6144
          %167 = vsyncadd [#allocation3], %s166
          %s168 = smul.addr %s163, 24
          %s169 = sadd.s32 %s164, %s168
          %s170 = smul.addr %s169, 128
          %s171 = scalar_lea.hbm %s0, %s170
          %s172 = sshll.u32 [#allocation2], 4
          %s173 = int_to_ptr.vmem [resolvable:$true] %s172
          %178 = dma.hbm_to_vmem [thread:$0]  %s171, 6144, %s173, [#allocation3], 3072, 3072, 192
        $region16: #{tpu_custom_call.1} parent=11 // pred_fallthru
          _
      $region12: #{tpu_custom_call.1} parent=5 // pred_fallthru
        _
      %p179 = scmp.lt.s32.totalorder %s16, 2
      // Predicated region
      $region17: #{tpu_custom_call.1} parent=5 // pred_check
        %p180 = pneg %p179
      $region18: #{tpu_custom_call.1} parent=5 // pred_check_branch
        %182 = sbr.rel (%p180) target = $region20
      $region19: #{tpu_custom_call.1} parent=5 // pred_region
        // Predicated region
        $region21: #{tpu_custom_call.1} parent=19 // pred_check
          %p183 = pneg %p85
        $region22: #{tpu_custom_call.1} parent=19 // pred_check_branch
          %185 = sbr.rel (%p183) target = $region24
        $region23: #{tpu_custom_call.1} parent=19 // pred_region
          %s186 = sand.u32 %s16, 1
          %s187 = scalar_lea.sflag [#allocation6], %s186
          %s188 = sand.u32 %s75, 1
          %s189 = smul.addr %s188, 6144
          %s190 = scalar_lea.vmem [#allocation5], %s189
          %s191 = smul.u32 384, %s25
          %s192 = smul.u32 4, %s24
          %s194 = ssub.s32 98304, 98304
          %195 = vsyncadd %s187, %s194
          %s196 = smul.addr %s191, 8
          %s197 = sadd.s32 %s192, %s196
          %s198 = smul.addr %s197, 64
          %s199 = scalar_lea.hbm %s1, %s198
          %s200 = sshll.u32 %s190, 4
          %s201 = int_to_ptr.vmem [resolvable:$true] %s200
          %206 = dma.hbm_to_vmem [thread:$0]  %s199, 98304, %s201, %s187, 512, 256, 16
        $region24: #{tpu_custom_call.1} parent=19 // pred_fallthru
          _
        // Predicated region
        $region25: #{tpu_custom_call.1} parent=19 // pred_check
          %p207 = pneg %p111
        $region26: #{tpu_custom_call.1} parent=19 // pred_check_branch
          %209 = sbr.rel (%p207) target = $region28
        $region27: #{tpu_custom_call.1} parent=19 // pred_region
          %s210 = sand.u32 %s16, 1
          %s211 = scalar_lea.sflag [#allocation6], %s210
          %s212 = sand.u32 %s101, 1
          %s213 = smul.addr %s212, 4
          %s214 = scalar_lea.vmem [#allocation7], %s213
          %s215 = smul.u32 4, %s24
          %s217 = ssub.s32 64, 64
          %218 = vsyncadd %s211, %s217
          %s219 = smul.addr %s215, 16
          %s220 = scalar_lea.hbm %s2, %s219
          %s222 = sshll.u32 %s214, 4
          %s223 = int_to_ptr.vmem [resolvable:$true] %s222
          %225 = dma.hbm_to_vmem [thread:$0]  %s220, 64, %s223, %s211
        $region28: #{tpu_custom_call.1} parent=19 // pred_fallthru
          _
      $region20: #{tpu_custom_call.1} parent=5 // pred_fallthru
        _
      %p226 = scmp.le.s32.totalorder 1, %s16
      %p227 = scmp.lt.s32.totalorder %s16, 3
      %p228 = pnand %p226, %p227
      %p229 = pneg %p228
      // Predicated region
      $region29: #{tpu_custom_call.1} parent=5 // pred_check
        _
      $region30: #{tpu_custom_call.1} parent=5 // pred_check_branch
        %231 = sbr.rel (%p228) target = $region32
      $region31: #{tpu_custom_call.1} parent=5 // pred_region
        %s232 = ssub.s32 %s16, 1
        // Predicated region
        $region33: #{tpu_custom_call.1} parent=31 // pred_check
          %p233 = pneg %p63
        $region34: #{tpu_custom_call.1} parent=31 // pred_check_branch
          %235 = sbr.rel (%p233) target = $region36
        $region35: #{tpu_custom_call.1} parent=31 // pred_region
          %236 = dma.done [#allocation3], 6144
        $region36: #{tpu_custom_call.1} parent=31 // pred_fallthru
          _
        %s237 = sand.u32 %s21, 1
        %s238 = scalar_lea.sflag [#allocation6], %s237
        %s239 = sand.u32 %s78, 1
        %s240 = smul.addr %s239, 6144
        %s241 = scalar_lea.vmem [#allocation5], %s240
        // Predicated region
        $region37: #{tpu_custom_call.1} parent=31 // pred_check
          %p242 = pneg %p91
        $region38: #{tpu_custom_call.1} parent=31 // pred_check_branch
          %244 = sbr.rel (%p242) target = $region40
        $region39: #{tpu_custom_call.1} parent=31 // pred_region
          %245 = dma.done %s238, 98304
        $region40: #{tpu_custom_call.1} parent=31 // pred_fallthru
          _
        %s246 = sand.u32 %s21, 1
        %s247 = scalar_lea.sflag [#allocation6], %s246
        %s248 = sand.u32 %s104, 1
        %s249 = smul.addr %s248, 4
        %s250 = scalar_lea.vmem [#allocation7], %s249
        // Predicated region
        $region41: #{tpu_custom_call.1} parent=31 // pred_check
          %p251 = pneg %p117
        $region42: #{tpu_custom_call.1} parent=31 // pred_check_branch
          %253 = sbr.rel (%p251) target = $region44
        $region43: #{tpu_custom_call.1} parent=31 // pred_region
          %254 = dma.done %s247, 64
        $region44: #{tpu_custom_call.1} parent=31 // pred_fallthru
          _
        %p255 = pneg %p63
        %p256 = pneg %p60
        %s257 = sand.u32 %s21, 1
        %s258 = scalar_lea.sflag [#allocation6], %s257
        %s259 = sand.u32 %s78, 1
        %s260 = smul.addr %s259, 6144
        %s261 = scalar_lea.vmem [#allocation5], %s260
        %p262 = pneg %p91
        %p263 = pneg %p88
        %s264 = sand.u32 %s21, 1
        %s265 = scalar_lea.sflag [#allocation6], %s264
        %s266 = sand.u32 %s104, 1
        %s267 = smul.addr %s266, 4
        %s268 = scalar_lea.vmem [#allocation7], %s267
        %p269 = pneg %p117
        %p270 = pneg %p114
        %p271 = pneg %p145
        %p272 = pneg %p142
        %s273 = sand.u32 %s132, 1
        %s274 = scalar_lea.sflag [#allocation4], %s273
        %s275 = sand.u32 %s132, 1
        %s276 = smul.addr %s275, 64
        %s277 = scalar_lea.vmem [#allocation8], %s276
        %s278 = smul.u32 2, %s26
        %s279 = smul.u32 24, %s28
        %s280 = smul.u32 384, %s28
        %s281 = smul.u32 4, %s27
        %s282 = smul.u32 4, %s27
        %s283 = smul.u32 2, %s26
        %s284 = smul.u32 4, %s27
        %v285 = vld [vmem:[#allocation2] sm:$0xff]
        %v286 = vld [vmem:[#allocation2 + $0x8] sm:$0xff]
        %v287 = vld [vmem:[#allocation2 + $0x10] sm:$0xff]
        %v288 = vld [vmem:[#allocation2 + $0x18] sm:$0xff]
        %v289 = vld [vmem:[#allocation2 + $0x20] sm:$0xff]
        %v290 = vld [vmem:[#allocation2 + $0x28] sm:$0xff]
        %v291 = vld [vmem:[#allocation2 + $0x30] sm:$0xff]
        %v292 = vld [vmem:[#allocation2 + $0x38] sm:$0xff]
        %v293 = vld [vmem:[#allocation2 + $0x40] sm:$0xff]
        %v294 = vld [vmem:[#allocation2 + $0x48] sm:$0xff]
        %v295 = vld [vmem:[#allocation2 + $0x50] sm:$0xff]
        %v296 = vld [vmem:[#allocation2 + $0x58] sm:$0xff]
        %v297 = vld [vmem:[#allocation2 + $0x60] sm:$0xff]
        %v298 = vld [vmem:[#allocation2 + $0x68] sm:$0xff]
        %v299 = vld [vmem:[#allocation2 + $0x70] sm:$0xff]
        %v300 = vld [vmem:[#allocation2 + $0x78] sm:$0xff]
        %v301 = vld [vmem:[#allocation2 + $0x80] sm:$0xff]
        %v302 = vld [vmem:[#allocation2 + $0x88] sm:$0xff]
        %v303 = vld [vmem:[#allocation2 + $0x90] sm:$0xff]
        %v304 = vld [vmem:[#allocation2 + $0x98] sm:$0xff]
        %v305 = vld [vmem:[#allocation2 + $0xa0] sm:$0xff]
        %v306 = vld [vmem:[#allocation2 + $0xa8] sm:$0xff]
        %v307 = vld [vmem:[#allocation2 + $0xb0] sm:$0xff]
        %v308 = vld [vmem:[#allocation2 + $0xb8] sm:$0xff]
        %v309 = vld [vmem:[#allocation2 + $0xc0] sm:$0xff]
        %v310 = vld [vmem:[#allocation2 + $0xc8] sm:$0xff]
        %v311 = vld [vmem:[#allocation2 + $0xd0] sm:$0xff]
        %v312 = vld [vmem:[#allocation2 + $0xd8] sm:$0xff]
        %v313 = vld [vmem:[#allocation2 + $0xe0] sm:$0xff]
        %v314 = vld [vmem:[#allocation2 + $0xe8] sm:$0xff]
        %v315 = vld [vmem:[#allocation2 + $0xf0] sm:$0xff]
        %v316 = vld [vmem:[#allocation2 + $0xf8] sm:$0xff]
        %v317 = vld [vmem:[#allocation2 + $0x100] sm:$0xff]
        %v318 = vld [vmem:[#allocation2 + $0x108] sm:$0xff]
        %v319 = vld [vmem:[#allocation2 + $0x110] sm:$0xff]
        %v320 = vld [vmem:[#allocation2 + $0x118] sm:$0xff]
        %v321 = vld [vmem:[#allocation2 + $0x120] sm:$0xff]
        %v322 = vld [vmem:[#allocation2 + $0x128] sm:$0xff]
        %v323 = vld [vmem:[#allocation2 + $0x130] sm:$0xff]
        %v324 = vld [vmem:[#allocation2 + $0x138] sm:$0xff]
        %v325 = vld [vmem:[#allocation2 + $0x140] sm:$0xff]
        %v326 = vld [vmem:[#allocation2 + $0x148] sm:$0xff]
        %v327 = vld [vmem:[#allocation2 + $0x150] sm:$0xff]
        %v328 = vld [vmem:[#allocation2 + $0x158] sm:$0xff]
        %v329 = vld [vmem:[#allocation2 + $0x160] sm:$0xff]
        %v330 = vld [vmem:[#allocation2 + $0x168] sm:$0xff]
        %v331 = vld [vmem:[#allocation2 + $0x170] sm:$0xff]
        %v332 = vld [vmem:[#allocation2 + $0x178] sm:$0xff]
        %v333 = vpack.c.bf16 %v309, %v285
        %v334 = vpack.c.bf16 %v310, %v286
        %v335 = vpack.c.bf16 %v311, %v287
        %v336 = vpack.c.bf16 %v312, %v288
        %v337 = vpack.c.bf16 %v313, %v289
        %v338 = vpack.c.bf16 %v314, %v290
        %v339 = vpack.c.bf16 %v315, %v291
        %v340 = vpack.c.bf16 %v316, %v292
        %v341 = vpack.c.bf16 %v317, %v293
        %v342 = vpack.c.bf16 %v318, %v294
        %v343 = vpack.c.bf16 %v319, %v295
        %v344 = vpack.c.bf16 %v320, %v296
        %v345 = vpack.c.bf16 %v321, %v297
        %v346 = vpack.c.bf16 %v322, %v298
        %v347 = vpack.c.bf16 %v323, %v299
        %v348 = vpack.c.bf16 %v324, %v300
        %v349 = vpack.c.bf16 %v325, %v301
        %v350 = vpack.c.bf16 %v326, %v302
        %v351 = vpack.c.bf16 %v327, %v303
        %v352 = vpack.c.bf16 %v328, %v304
        %v353 = vpack.c.bf16 %v329, %v305
        %v354 = vpack.c.bf16 %v330, %v306
        %v355 = vpack.c.bf16 %v331, %v307
        %v356 = vpack.c.bf16 %v332, %v308
        %v357 = vld [vmem:[%s241] sm:$0xff]
        %v358 = vld [vmem:[%s241 + $0x8] sm:$0xff]
        %v359 = vld [vmem:[%s241 + $0x10] sm:$0xff]
        %v360 = vld [vmem:[%s241 + $0x18] sm:$0xff]
        %v361 = vld [vmem:[%s241 + $0x20] sm:$0xff]
        %v362 = vld [vmem:[%s241 + $0x28] sm:$0xff]
        %v363 = vld [vmem:[%s241 + $0x30] sm:$0xff]
        %v364 = vld [vmem:[%s241 + $0x38] sm:$0xff]
        %v365 = vld [vmem:[%s241 + $0x40] sm:$0xff]
        %v366 = vld [vmem:[%s241 + $0x48] sm:$0xff]
        %v367 = vld [vmem:[%s241 + $0x50] sm:$0xff]
        %v368 = vld [vmem:[%s241 + $0x58] sm:$0xff]
        %v369 = vld [vmem:[%s241 + $0x60] sm:$0xff]
        %v370 = vld [vmem:[%s241 + $0x68] sm:$0xff]
        %v371 = vld [vmem:[%s241 + $0x70] sm:$0xff]
        %v372 = vld [vmem:[%s241 + $0x78] sm:$0xff]
        %v373 = vld [vmem:[%s241 + $0x80] sm:$0xff]
        %v374 = vld [vmem:[%s241 + $0x88] sm:$0xff]
        %v375 = vld [vmem:[%s241 + $0x90] sm:$0xff]
        %v376 = vld [vmem:[%s241 + $0x98] sm:$0xff]
        %v377 = vld [vmem:[%s241 + $0xa0] sm:$0xff]
        %v378 = vld [vmem:[%s241 + $0xa8] sm:$0xff]
        %v379 = vld [vmem:[%s241 + $0xb0] sm:$0xff]
        %v380 = vld [vmem:[%s241 + $0xb8] sm:$0xff]
        %v381 = vld [vmem:[%s241 + $0xc0] sm:$0xff]
        %v382 = vld [vmem:[%s241 + $0xc8] sm:$0xff]
        %v383 = vld [vmem:[%s241 + $0xd0] sm:$0xff]
        %v384 = vld [vmem:[%s241 + $0xd8] sm:$0xff]
        %v385 = vld [vmem:[%s241 + $0xe0] sm:$0xff]
        %v386 = vld [vmem:[%s241 + $0xe8] sm:$0xff]
        %v387 = vld [vmem:[%s241 + $0xf0] sm:$0xff]
        %v388 = vld [vmem:[%s241 + $0xf8] sm:$0xff]
        %v389 = vld [vmem:[%s241 + $0x100] sm:$0xff]
        %v390 = vld [vmem:[%s241 + $0x108] sm:$0xff]
        %v391 = vld [vmem:[%s241 + $0x110] sm:$0xff]
        %v392 = vld [vmem:[%s241 + $0x118] sm:$0xff]
        %v393 = vld [vmem:[%s241 + $0x120] sm:$0xff]
        %v394 = vld [vmem:[%s241 + $0x128] sm:$0xff]
        %v395 = vld [vmem:[%s241 + $0x130] sm:$0xff]
        %v396 = vld [vmem:[%s241 + $0x138] sm:$0xff]
        %v397 = vld [vmem:[%s241 + $0x140] sm:$0xff]
        %v398 = vld [vmem:[%s241 + $0x148] sm:$0xff]
        %v399 = vld [vmem:[%s241 + $0x150] sm:$0xff]
        %v400 = vld [vmem:[%s241 + $0x158] sm:$0xff]
        %v401 = vld [vmem:[%s241 + $0x160] sm:$0xff]
        %v402 = vld [vmem:[%s241 + $0x168] sm:$0xff]
        %v403 = vld [vmem:[%s241 + $0x170] sm:$0xff]
        %v404 = vld [vmem:[%s241 + $0x178] sm:$0xff]
        %v405 = vld [vmem:[%s241 + $0x180] sm:$0xff]
        %v406 = vld [vmem:[%s241 + $0x188] sm:$0xff]
        %v407 = vld [vmem:[%s241 + $0x190] sm:$0xff]
        %v408 = vld [vmem:[%s241 + $0x198] sm:$0xff]
        %v409 = vld [vmem:[%s241 + $0x1a0] sm:$0xff]
        %v410 = vld [vmem:[%s241 + $0x1a8] sm:$0xff]
        %v411 = vld [vmem:[%s241 + $0x1b0] sm:$0xff]
        %v412 = vld [vmem:[%s241 + $0x1b8] sm:$0xff]
        %v413 = vld [vmem:[%s241 + $0x1c0] sm:$0xff]
        %v414 = vld [vmem:[%s241 + $0x1c8] sm:$0xff]
        %v415 = vld [vmem:[%s241 + $0x1d0] sm:$0xff]
        %v416 = vld [vmem:[%s241 + $0x1d8] sm:$0xff]
        %v417 = vld [vmem:[%s241 + $0x1e0] sm:$0xff]
        %v418 = vld [vmem:[%s241 + $0x1e8] sm:$0xff]
        %v419 = vld [vmem:[%s241 + $0x1f0] sm:$0xff]
        %v420 = vld [vmem:[%s241 + $0x1f8] sm:$0xff]
        %v421 = vld [vmem:[%s241 + $0x200] sm:$0xff]
        %v422 = vld [vmem:[%s241 + $0x208] sm:$0xff]
        %v423 = vld [vmem:[%s241 + $0x210] sm:$0xff]
        %v424 = vld [vmem:[%s241 + $0x218] sm:$0xff]
        %v425 = vld [vmem:[%s241 + $0x220] sm:$0xff]
        %v426 = vld [vmem:[%s241 + $0x228] sm:$0xff]
        %v427 = vld [vmem:[%s241 + $0x230] sm:$0xff]
        %v428 = vld [vmem:[%s241 + $0x238] sm:$0xff]
        %v429 = vld [vmem:[%s241 + $0x240] sm:$0xff]
        %v430 = vld [vmem:[%s241 + $0x248] sm:$0xff]
        %v431 = vld [vmem:[%s241 + $0x250] sm:$0xff]
        %v432 = vld [vmem:[%s241 + $0x258] sm:$0xff]
        %v433 = vld [vmem:[%s241 + $0x260] sm:$0xff]
        %v434 = vld [vmem:[%s241 + $0x268] sm:$0xff]
        %v435 = vld [vmem:[%s241 + $0x270] sm:$0xff]
        %v436 = vld [vmem:[%s241 + $0x278] sm:$0xff]
        %v437 = vld [vmem:[%s241 + $0x280] sm:$0xff]
        %v438 = vld [vmem:[%s241 + $0x288] sm:$0xff]
        %v439 = vld [vmem:[%s241 + $0x290] sm:$0xff]
        %v440 = vld [vmem:[%s241 + $0x298] sm:$0xff]
        %v441 = vld [vmem:[%s241 + $0x2a0] sm:$0xff]
        %v442 = vld [vmem:[%s241 + $0x2a8] sm:$0xff]
        %v443 = vld [vmem:[%s241 + $0x2b0] sm:$0xff]
        %v444 = vld [vmem:[%s241 + $0x2b8] sm:$0xff]
        %v445 = vld [vmem:[%s241 + $0x2c0] sm:$0xff]
        %v446 = vld [vmem:[%s241 + $0x2c8] sm:$0xff]
        %v447 = vld [vmem:[%s241 + $0x2d0] sm:$0xff]
        %v448 = vld [vmem:[%s241 + $0x2d8] sm:$0xff]
        %v449 = vld [vmem:[%s241 + $0x2e0] sm:$0xff]
        %v450 = vld [vmem:[%s241 + $0x2e8] sm:$0xff]
        %v451 = vld [vmem:[%s241 + $0x2f0] sm:$0xff]
        %v452 = vld [vmem:[%s241 + $0x2f8] sm:$0xff]
        %v453 = vld [vmem:[%s241 + $0x300] sm:$0xff]
        %v454 = vld [vmem:[%s241 + $0x308] sm:$0xff]
        %v455 = vld [vmem:[%s241 + $0x310] sm:$0xff]
        %v456 = vld [vmem:[%s241 + $0x318] sm:$0xff]
        %v457 = vld [vmem:[%s241 + $0x320] sm:$0xff]
        %v458 = vld [vmem:[%s241 + $0x328] sm:$0xff]
        %v459 = vld [vmem:[%s241 + $0x330] sm:$0xff]
        %v460 = vld [vmem:[%s241 + $0x338] sm:$0xff]
        %v461 = vld [vmem:[%s241 + $0x340] sm:$0xff]
        %v462 = vld [vmem:[%s241 + $0x348] sm:$0xff]
        %v463 = vld [vmem:[%s241 + $0x350] sm:$0xff]
        %v464 = vld [vmem:[%s241 + $0x358] sm:$0xff]
        %v465 = vld [vmem:[%s241 + $0x360] sm:$0xff]
        %v466 = vld [vmem:[%s241 + $0x368] sm:$0xff]
        %v467 = vld [vmem:[%s241 + $0x370] sm:$0xff]
        %v468 = vld [vmem:[%s241 + $0x378] sm:$0xff]
        %v469 = vld [vmem:[%s241 + $0x380] sm:$0xff]
        %v470 = vld [vmem:[%s241 + $0x388] sm:$0xff]
        %v471 = vld [vmem:[%s241 + $0x390] sm:$0xff]
        %v472 = vld [vmem:[%s241 + $0x398] sm:$0xff]
        %v473 = vld [vmem:[%s241 + $0x3a0] sm:$0xff]
        %v474 = vld [vmem:[%s241 + $0x3a8] sm:$0xff]
        %v475 = vld [vmem:[%s241 + $0x3b0] sm:$0xff]
        %v476 = vld [vmem:[%s241 + $0x3b8] sm:$0xff]
        %v477 = vld [vmem:[%s241 + $0x3c0] sm:$0xff]
        %v478 = vld [vmem:[%s241 + $0x3c8] sm:$0xff]
        %v479 = vld [vmem:[%s241 + $0x3d0] sm:$0xff]
        %v480 = vld [vmem:[%s241 + $0x3d8] sm:$0xff]
        %v481 = vld [vmem:[%s241 + $0x3e0] sm:$0xff]
        %v482 = vld [vmem:[%s241 + $0x3e8] sm:$0xff]
        %v483 = vld [vmem:[%s241 + $0x3f0] sm:$0xff]
        %v484 = vld [vmem:[%s241 + $0x3f8] sm:$0xff]
        %v485 = vld [vmem:[%s241 + $0x400] sm:$0xff]
        %v486 = vld [vmem:[%s241 + $0x408] sm:$0xff]
        %v487 = vld [vmem:[%s241 + $0x410] sm:$0xff]
        %v488 = vld [vmem:[%s241 + $0x418] sm:$0xff]
        %v489 = vld [vmem:[%s241 + $0x420] sm:$0xff]
        %v490 = vld [vmem:[%s241 + $0x428] sm:$0xff]
        %v491 = vld [vmem:[%s241 + $0x430] sm:$0xff]
        %v492 = vld [vmem:[%s241 + $0x438] sm:$0xff]
        %v493 = vld [vmem:[%s241 + $0x440] sm:$0xff]
        %v494 = vld [vmem:[%s241 + $0x448] sm:$0xff]
        %v495 = vld [vmem:[%s241 + $0x450] sm:$0xff]
        %v496 = vld [vmem:[%s241 + $0x458] sm:$0xff]
        %v497 = vld [vmem:[%s241 + $0x460] sm:$0xff]
        %v498 = vld [vmem:[%s241 + $0x468] sm:$0xff]
        %v499 = vld [vmem:[%s241 + $0x470] sm:$0xff]
        %v500 = vld [vmem:[%s241 + $0x478] sm:$0xff]
        %v501 = vld [vmem:[%s241 + $0x480] sm:$0xff]
        %v502 = vld [vmem:[%s241 + $0x488] sm:$0xff]
        %v503 = vld [vmem:[%s241 + $0x490] sm:$0xff]
        %v504 = vld [vmem:[%s241 + $0x498] sm:$0xff]
        %v505 = vld [vmem:[%s241 + $0x4a0] sm:$0xff]
        %v506 = vld [vmem:[%s241 + $0x4a8] sm:$0xff]
        %v507 = vld [vmem:[%s241 + $0x4b0] sm:$0xff]
        %v508 = vld [vmem:[%s241 + $0x4b8] sm:$0xff]
        %v509 = vld [vmem:[%s241 + $0x4c0] sm:$0xff]
        %v510 = vld [vmem:[%s241 + $0x4c8] sm:$0xff]
        %v511 = vld [vmem:[%s241 + $0x4d0] sm:$0xff]
        %v512 = vld [vmem:[%s241 + $0x4d8] sm:$0xff]
        %v513 = vld [vmem:[%s241 + $0x4e0] sm:$0xff]
        %v514 = vld [vmem:[%s241 + $0x4e8] sm:$0xff]
        %v515 = vld [vmem:[%s241 + $0x4f0] sm:$0xff]
        %v516 = vld [vmem:[%s241 + $0x4f8] sm:$0xff]
        %v517 = vld [vmem:[%s241 + $0x500] sm:$0xff]
        %v518 = vld [vmem:[%s241 + $0x508] sm:$0xff]
        %v519 = vld [vmem:[%s241 + $0x510] sm:$0xff]
        %v520 = vld [vmem:[%s241 + $0x518] sm:$0xff]
        %v521 = vld [vmem:[%s241 + $0x520] sm:$0xff]
        %v522 = vld [vmem:[%s241 + $0x528] sm:$0xff]
        %v523 = vld [vmem:[%s241 + $0x530] sm:$0xff]
        %v524 = vld [vmem:[%s241 + $0x538] sm:$0xff]
        %v525 = vld [vmem:[%s241 + $0x540] sm:$0xff]
        %v526 = vld [vmem:[%s241 + $0x548] sm:$0xff]
        %v527 = vld [vmem:[%s241 + $0x550] sm:$0xff]
        %v528 = vld [vmem:[%s241 + $0x558] sm:$0xff]
        %v529 = vld [vmem:[%s241 + $0x560] sm:$0xff]
        %v530 = vld [vmem:[%s241 + $0x568] sm:$0xff]
        %v531 = vld [vmem:[%s241 + $0x570] sm:$0xff]
        %v532 = vld [vmem:[%s241 + $0x578] sm:$0xff]
        %v533 = vld [vmem:[%s241 + $0x580] sm:$0xff]
        %v534 = vld [vmem:[%s241 + $0x588] sm:$0xff]
        %v535 = vld [vmem:[%s241 + $0x590] sm:$0xff]
        %v536 = vld [vmem:[%s241 + $0x598] sm:$0xff]
        %v537 = vld [vmem:[%s241 + $0x5a0] sm:$0xff]
        %v538 = vld [vmem:[%s241 + $0x5a8] sm:$0xff]
        %v539 = vld [vmem:[%s241 + $0x5b0] sm:$0xff]
        %v540 = vld [vmem:[%s241 + $0x5b8] sm:$0xff]
        %v541 = vld [vmem:[%s241 + $0x5c0] sm:$0xff]
        %v542 = vld [vmem:[%s241 + $0x5c8] sm:$0xff]
        %v543 = vld [vmem:[%s241 + $0x5d0] sm:$0xff]
        %v544 = vld [vmem:[%s241 + $0x5d8] sm:$0xff]
        %v545 = vld [vmem:[%s241 + $0x5e0] sm:$0xff]
        %v546 = vld [vmem:[%s241 + $0x5e8] sm:$0xff]
        %v547 = vld [vmem:[%s241 + $0x5f0] sm:$0xff]
        %v548 = vld [vmem:[%s241 + $0x5f8] sm:$0xff]
        %v549 = vld [vmem:[%s241 + $0x600] sm:$0xff]
        %v550 = vld [vmem:[%s241 + $0x608] sm:$0xff]
        %v551 = vld [vmem:[%s241 + $0x610] sm:$0xff]
        %v552 = vld [vmem:[%s241 + $0x618] sm:$0xff]
        %v553 = vld [vmem:[%s241 + $0x620] sm:$0xff]
        %v554 = vld [vmem:[%s241 + $0x628] sm:$0xff]
        %v555 = vld [vmem:[%s241 + $0x630] sm:$0xff]
        %v556 = vld [vmem:[%s241 + $0x638] sm:$0xff]
        %v557 = vld [vmem:[%s241 + $0x640] sm:$0xff]
        %v558 = vld [vmem:[%s241 + $0x648] sm:$0xff]
        %v559 = vld [vmem:[%s241 + $0x650] sm:$0xff]
        %v560 = vld [vmem:[%s241 + $0x658] sm:$0xff]
        %v561 = vld [vmem:[%s241 + $0x660] sm:$0xff]
        %v562 = vld [vmem:[%s241 + $0x668] sm:$0xff]
        %v563 = vld [vmem:[%s241 + $0x670] sm:$0xff]
        %v564 = vld [vmem:[%s241 + $0x678] sm:$0xff]
        %v565 = vld [vmem:[%s241 + $0x680] sm:$0xff]
        %v566 = vld [vmem:[%s241 + $0x688] sm:$0xff]
        %v567 = vld [vmem:[%s241 + $0x690] sm:$0xff]
        %v568 = vld [vmem:[%s241 + $0x698] sm:$0xff]
        %v569 = vld [vmem:[%s241 + $0x6a0] sm:$0xff]
        %v570 = vld [vmem:[%s241 + $0x6a8] sm:$0xff]
        %v571 = vld [vmem:[%s241 + $0x6b0] sm:$0xff]
        %v572 = vld [vmem:[%s241 + $0x6b8] sm:$0xff]
        %v573 = vld [vmem:[%s241 + $0x6c0] sm:$0xff]
        %v574 = vld [vmem:[%s241 + $0x6c8] sm:$0xff]
        %v575 = vld [vmem:[%s241 + $0x6d0] sm:$0xff]
        %v576 = vld [vmem:[%s241 + $0x6d8] sm:$0xff]
        %v577 = vld [vmem:[%s241 + $0x6e0] sm:$0xff]
        %v578 = vld [vmem:[%s241 + $0x6e8] sm:$0xff]
        %v579 = vld [vmem:[%s241 + $0x6f0] sm:$0xff]
        %v580 = vld [vmem:[%s241 + $0x6f8] sm:$0xff]
        %v581 = vld [vmem:[%s241 + $0x700] sm:$0xff]
        %v582 = vld [vmem:[%s241 + $0x708] sm:$0xff]
        %v583 = vld [vmem:[%s241 + $0x710] sm:$0xff]
        %v584 = vld [vmem:[%s241 + $0x718] sm:$0xff]
        %v585 = vld [vmem:[%s241 + $0x720] sm:$0xff]
        %v586 = vld [vmem:[%s241 + $0x728] sm:$0xff]
        %v587 = vld [vmem:[%s241 + $0x730] sm:$0xff]
        %v588 = vld [vmem:[%s241 + $0x738] sm:$0xff]
        %v589 = vld [vmem:[%s241 + $0x740] sm:$0xff]
        %v590 = vld [vmem:[%s241 + $0x748] sm:$0xff]
        %v591 = vld [vmem:[%s241 + $0x750] sm:$0xff]
        %v592 = vld [vmem:[%s241 + $0x758] sm:$0xff]
        %v593 = vld [vmem:[%s241 + $0x760] sm:$0xff]
        %v594 = vld [vmem:[%s241 + $0x768] sm:$0xff]
        %v595 = vld [vmem:[%s241 + $0x770] sm:$0xff]
        %v596 = vld [vmem:[%s241 + $0x778] sm:$0xff]
        %v597 = vld [vmem:[%s241 + $0x780] sm:$0xff]
        %v598 = vld [vmem:[%s241 + $0x788] sm:$0xff]
        %v599 = vld [vmem:[%s241 + $0x790] sm:$0xff]
        %v600 = vld [vmem:[%s241 + $0x798] sm:$0xff]
        %v601 = vld [vmem:[%s241 + $0x7a0] sm:$0xff]
        %v602 = vld [vmem:[%s241 + $0x7a8] sm:$0xff]
        %v603 = vld [vmem:[%s241 + $0x7b0] sm:$0xff]
        %v604 = vld [vmem:[%s241 + $0x7b8] sm:$0xff]
        %v605 = vld [vmem:[%s241 + $0x7c0] sm:$0xff]
        %v606 = vld [vmem:[%s241 + $0x7c8] sm:$0xff]
        %v607 = vld [vmem:[%s241 + $0x7d0] sm:$0xff]
        %v608 = vld [vmem:[%s241 + $0x7d8] sm:$0xff]
        %v609 = vld [vmem:[%s241 + $0x7e0] sm:$0xff]
        %v610 = vld [vmem:[%s241 + $0x7e8] sm:$0xff]
        %v611 = vld [vmem:[%s241 + $0x7f0] sm:$0xff]
        %v612 = vld [vmem:[%s241 + $0x7f8] sm:$0xff]
        %v613 = vld [vmem:[%s241 + $0x800] sm:$0xff]
        %v614 = vld [vmem:[%s241 + $0x808] sm:$0xff]
        %v615 = vld [vmem:[%s241 + $0x810] sm:$0xff]
        %v616 = vld [vmem:[%s241 + $0x818] sm:$0xff]
        %v617 = vld [vmem:[%s241 + $0x820] sm:$0xff]
        %v618 = vld [vmem:[%s241 + $0x828] sm:$0xff]
        %v619 = vld [vmem:[%s241 + $0x830] sm:$0xff]
        %v620 = vld [vmem:[%s241 + $0x838] sm:$0xff]
        %v621 = vld [vmem:[%s241 + $0x840] sm:$0xff]
        %v622 = vld [vmem:[%s241 + $0x848] sm:$0xff]
        %v623 = vld [vmem:[%s241 + $0x850] sm:$0xff]
        %v624 = vld [vmem:[%s241 + $0x858] sm:$0xff]
        %v625 = vld [vmem:[%s241 + $0x860] sm:$0xff]
        %v626 = vld [vmem:[%s241 + $0x868] sm:$0xff]
        %v627 = vld [vmem:[%s241 + $0x870] sm:$0xff]
        %v628 = vld [vmem:[%s241 + $0x878] sm:$0xff]
        %v629 = vld [vmem:[%s241 + $0x880] sm:$0xff]
        %v630 = vld [vmem:[%s241 + $0x888] sm:$0xff]
        %v631 = vld [vmem:[%s241 + $0x890] sm:$0xff]
        %v632 = vld [vmem:[%s241 + $0x898] sm:$0xff]
        %v633 = vld [vmem:[%s241 + $0x8a0] sm:$0xff]
        %v634 = vld [vmem:[%s241 + $0x8a8] sm:$0xff]
        %v635 = vld [vmem:[%s241 + $0x8b0] sm:$0xff]
        %v636 = vld [vmem:[%s241 + $0x8b8] sm:$0xff]
        %v637 = vld [vmem:[%s241 + $0x8c0] sm:$0xff]
        %v638 = vld [vmem:[%s241 + $0x8c8] sm:$0xff]
        %v639 = vld [vmem:[%s241 + $0x8d0] sm:$0xff]
        %v640 = vld [vmem:[%s241 + $0x8d8] sm:$0xff]
        %v641 = vld [vmem:[%s241 + $0x8e0] sm:$0xff]
        %v642 = vld [vmem:[%s241 + $0x8e8] sm:$0xff]
        %v643 = vld [vmem:[%s241 + $0x8f0] sm:$0xff]
        %v644 = vld [vmem:[%s241 + $0x8f8] sm:$0xff]
        %v645 = vld [vmem:[%s241 + $0x900] sm:$0xff]
        %v646 = vld [vmem:[%s241 + $0x908] sm:$0xff]
        %v647 = vld [vmem:[%s241 + $0x910] sm:$0xff]
        %v648 = vld [vmem:[%s241 + $0x918] sm:$0xff]
        %v649 = vld [vmem:[%s241 + $0x920] sm:$0xff]
        %v650 = vld [vmem:[%s241 + $0x928] sm:$0xff]
        %v651 = vld [vmem:[%s241 + $0x930] sm:$0xff]
        %v652 = vld [vmem:[%s241 + $0x938] sm:$0xff]
        %v653 = vld [vmem:[%s241 + $0x940] sm:$0xff]
        %v654 = vld [vmem:[%s241 + $0x948] sm:$0xff]
        %v655 = vld [vmem:[%s241 + $0x950] sm:$0xff]
        %v656 = vld [vmem:[%s241 + $0x958] sm:$0xff]
        %v657 = vld [vmem:[%s241 + $0x960] sm:$0xff]
        %v658 = vld [vmem:[%s241 + $0x968] sm:$0xff]
        %v659 = vld [vmem:[%s241 + $0x970] sm:$0xff]
        %v660 = vld [vmem:[%s241 + $0x978] sm:$0xff]
        %v661 = vld [vmem:[%s241 + $0x980] sm:$0xff]
        %v662 = vld [vmem:[%s241 + $0x988] sm:$0xff]
        %v663 = vld [vmem:[%s241 + $0x990] sm:$0xff]
        %v664 = vld [vmem:[%s241 + $0x998] sm:$0xff]
        %v665 = vld [vmem:[%s241 + $0x9a0] sm:$0xff]
        %v666 = vld [vmem:[%s241 + $0x9a8] sm:$0xff]
        %v667 = vld [vmem:[%s241 + $0x9b0] sm:$0xff]
        %v668 = vld [vmem:[%s241 + $0x9b8] sm:$0xff]
        %v669 = vld [vmem:[%s241 + $0x9c0] sm:$0xff]
        %v670 = vld [vmem:[%s241 + $0x9c8] sm:$0xff]
        %v671 = vld [vmem:[%s241 + $0x9d0] sm:$0xff]
        %v672 = vld [vmem:[%s241 + $0x9d8] sm:$0xff]
        %v673 = vld [vmem:[%s241 + $0x9e0] sm:$0xff]
        %v674 = vld [vmem:[%s241 + $0x9e8] sm:$0xff]
        %v675 = vld [vmem:[%s241 + $0x9f0] sm:$0xff]
        %v676 = vld [vmem:[%s241 + $0x9f8] sm:$0xff]
        %v677 = vld [vmem:[%s241 + $0xa00] sm:$0xff]
        %v678 = vld [vmem:[%s241 + $0xa08] sm:$0xff]
        %v679 = vld [vmem:[%s241 + $0xa10] sm:$0xff]
        %v680 = vld [vmem:[%s241 + $0xa18] sm:$0xff]
        %v681 = vld [vmem:[%s241 + $0xa20] sm:$0xff]
        %v682 = vld [vmem:[%s241 + $0xa28] sm:$0xff]
        %v683 = vld [vmem:[%s241 + $0xa30] sm:$0xff]
        %v684 = vld [vmem:[%s241 + $0xa38] sm:$0xff]
        %v685 = vld [vmem:[%s241 + $0xa40] sm:$0xff]
        %v686 = vld [vmem:[%s241 + $0xa48] sm:$0xff]
        %v687 = vld [vmem:[%s241 + $0xa50] sm:$0xff]
        %v688 = vld [vmem:[%s241 + $0xa58] sm:$0xff]
        %v689 = vld [vmem:[%s241 + $0xa60] sm:$0xff]
        %v690 = vld [vmem:[%s241 + $0xa68] sm:$0xff]
        %v691 = vld [vmem:[%s241 + $0xa70] sm:$0xff]
        %v692 = vld [vmem:[%s241 + $0xa78] sm:$0xff]
        %v693 = vld [vmem:[%s241 + $0xa80] sm:$0xff]
        %v694 = vld [vmem:[%s241 + $0xa88] sm:$0xff]
        %v695 = vld [vmem:[%s241 + $0xa90] sm:$0xff]
        %v696 = vld [vmem:[%s241 + $0xa98] sm:$0xff]
        %v697 = vld [vmem:[%s241 + $0xaa0] sm:$0xff]
        %v698 = vld [vmem:[%s241 + $0xaa8] sm:$0xff]
        %v699 = vld [vmem:[%s241 + $0xab0] sm:$0xff]
        %v700 = vld [vmem:[%s241 + $0xab8] sm:$0xff]
        %v701 = vld [vmem:[%s241 + $0xac0] sm:$0xff]
        %v702 = vld [vmem:[%s241 + $0xac8] sm:$0xff]
        %v703 = vld [vmem:[%s241 + $0xad0] sm:$0xff]
        %v704 = vld [vmem:[%s241 + $0xad8] sm:$0xff]
        %v705 = vld [vmem:[%s241 + $0xae0] sm:$0xff]
        %v706 = vld [vmem:[%s241 + $0xae8] sm:$0xff]
        %v707 = vld [vmem:[%s241 + $0xaf0] sm:$0xff]
        %v708 = vld [vmem:[%s241 + $0xaf8] sm:$0xff]
        %v709 = vld [vmem:[%s241 + $0xb00] sm:$0xff]
        %v710 = vld [vmem:[%s241 + $0xb08] sm:$0xff]
        %v711 = vld [vmem:[%s241 + $0xb10] sm:$0xff]
        %v712 = vld [vmem:[%s241 + $0xb18] sm:$0xff]
        %v713 = vld [vmem:[%s241 + $0xb20] sm:$0xff]
        %v714 = vld [vmem:[%s241 + $0xb28] sm:$0xff]
        %v715 = vld [vmem:[%s241 + $0xb30] sm:$0xff]
        %v716 = vld [vmem:[%s241 + $0xb38] sm:$0xff]
        %v717 = vld [vmem:[%s241 + $0xb40] sm:$0xff]
        %v718 = vld [vmem:[%s241 + $0xb48] sm:$0xff]
        %v719 = vld [vmem:[%s241 + $0xb50] sm:$0xff]
        %v720 = vld [vmem:[%s241 + $0xb58] sm:$0xff]
        %v721 = vld [vmem:[%s241 + $0xb60] sm:$0xff]
        %v722 = vld [vmem:[%s241 + $0xb68] sm:$0xff]
        %v723 = vld [vmem:[%s241 + $0xb70] sm:$0xff]
        %v724 = vld [vmem:[%s241 + $0xb78] sm:$0xff]
        %v725 = vld [vmem:[%s241 + $0xb80] sm:$0xff]
        %v726 = vld [vmem:[%s241 + $0xb88] sm:$0xff]
        %v727 = vld [vmem:[%s241 + $0xb90] sm:$0xff]
        %v728 = vld [vmem:[%s241 + $0xb98] sm:$0xff]
        %v729 = vld [vmem:[%s241 + $0xba0] sm:$0xff]
        %v730 = vld [vmem:[%s241 + $0xba8] sm:$0xff]
        %v731 = vld [vmem:[%s241 + $0xbb0] sm:$0xff]
        %v732 = vld [vmem:[%s241 + $0xbb8] sm:$0xff]
        %v733 = vld [vmem:[%s241 + $0xbc0] sm:$0xff]
        %v734 = vld [vmem:[%s241 + $0xbc8] sm:$0xff]
        %v735 = vld [vmem:[%s241 + $0xbd0] sm:$0xff]
        %v736 = vld [vmem:[%s241 + $0xbd8] sm:$0xff]
        %v737 = vld [vmem:[%s241 + $0xbe0] sm:$0xff]
        %v738 = vld [vmem:[%s241 + $0xbe8] sm:$0xff]
        %v739 = vld [vmem:[%s241 + $0xbf0] sm:$0xff]
        %v740 = vld [vmem:[%s241 + $0xbf8] sm:$0xff]
        %v741 = vld [vmem:[%s241 + $0xc00] sm:$0xff]
        %v742 = vld [vmem:[%s241 + $0xc08] sm:$0xff]
        %v743 = vld [vmem:[%s241 + $0xc10] sm:$0xff]
        %v744 = vld [vmem:[%s241 + $0xc18] sm:$0xff]
        %v745 = vld [vmem:[%s241 + $0xc20] sm:$0xff]
        %v746 = vld [vmem:[%s241 + $0xc28] sm:$0xff]
        %v747 = vld [vmem:[%s241 + $0xc30] sm:$0xff]
        %v748 = vld [vmem:[%s241 + $0xc38] sm:$0xff]
        %v749 = vld [vmem:[%s241 + $0xc40] sm:$0xff]
        %v750 = vld [vmem:[%s241 + $0xc48] sm:$0xff]
        %v751 = vld [vmem:[%s241 + $0xc50] sm:$0xff]
        %v752 = vld [vmem:[%s241 + $0xc58] sm:$0xff]
        %v753 = vld [vmem:[%s241 + $0xc60] sm:$0xff]
        %v754 = vld [vmem:[%s241 + $0xc68] sm:$0xff]
        %v755 = vld [vmem:[%s241 + $0xc70] sm:$0xff]
        %v756 = vld [vmem:[%s241 + $0xc78] sm:$0xff]
        %v757 = vld [vmem:[%s241 + $0xc80] sm:$0xff]
        %v758 = vld [vmem:[%s241 + $0xc88] sm:$0xff]
        %v759 = vld [vmem:[%s241 + $0xc90] sm:$0xff]
        %v760 = vld [vmem:[%s241 + $0xc98] sm:$0xff]
        %v761 = vld [vmem:[%s241 + $0xca0] sm:$0xff]
        %v762 = vld [vmem:[%s241 + $0xca8] sm:$0xff]
        %v763 = vld [vmem:[%s241 + $0xcb0] sm:$0xff]
        %v764 = vld [vmem:[%s241 + $0xcb8] sm:$0xff]
        %v765 = vld [vmem:[%s241 + $0xcc0] sm:$0xff]
        %v766 = vld [vmem:[%s241 + $0xcc8] sm:$0xff]
        %v767 = vld [vmem:[%s241 + $0xcd0] sm:$0xff]
        %v768 = vld [vmem:[%s241 + $0xcd8] sm:$0xff]
        %v769 = vld [vmem:[%s241 + $0xce0] sm:$0xff]
        %v770 = vld [vmem:[%s241 + $0xce8] sm:$0xff]
        %v771 = vld [vmem:[%s241 + $0xcf0] sm:$0xff]
        %v772 = vld [vmem:[%s241 + $0xcf8] sm:$0xff]
        %v773 = vld [vmem:[%s241 + $0xd00] sm:$0xff]
        %v774 = vld [vmem:[%s241 + $0xd08] sm:$0xff]
        %v775 = vld [vmem:[%s241 + $0xd10] sm:$0xff]
        %v776 = vld [vmem:[%s241 + $0xd18] sm:$0xff]
        %v777 = vld [vmem:[%s241 + $0xd20] sm:$0xff]
        %v778 = vld [vmem:[%s241 + $0xd28] sm:$0xff]
        %v779 = vld [vmem:[%s241 + $0xd30] sm:$0xff]
        %v780 = vld [vmem:[%s241 + $0xd38] sm:$0xff]
        %v781 = vld [vmem:[%s241 + $0xd40] sm:$0xff]
        %v782 = vld [vmem:[%s241 + $0xd48] sm:$0xff]
        %v783 = vld [vmem:[%s241 + $0xd50] sm:$0xff]
        %v784 = vld [vmem:[%s241 + $0xd58] sm:$0xff]
        %v785 = vld [vmem:[%s241 + $0xd60] sm:$0xff]
        %v786 = vld [vmem:[%s241 + $0xd68] sm:$0xff]
        %v787 = vld [vmem:[%s241 + $0xd70] sm:$0xff]
        %v788 = vld [vmem:[%s241 + $0xd78] sm:$0xff]
        %v789 = vld [vmem:[%s241 + $0xd80] sm:$0xff]
        %v790 = vld [vmem:[%s241 + $0xd88] sm:$0xff]
        %v791 = vld [vmem:[%s241 + $0xd90] sm:$0xff]
        %v792 = vld [vmem:[%s241 + $0xd98] sm:$0xff]
        %v793 = vld [vmem:[%s241 + $0xda0] sm:$0xff]
        %v794 = vld [vmem:[%s241 + $0xda8] sm:$0xff]
        %v795 = vld [vmem:[%s241 + $0xdb0] sm:$0xff]
        %v796 = vld [vmem:[%s241 + $0xdb8] sm:$0xff]
        %v797 = vld [vmem:[%s241 + $0xdc0] sm:$0xff]
        %v798 = vld [vmem:[%s241 + $0xdc8] sm:$0xff]
        %v799 = vld [vmem:[%s241 + $0xdd0] sm:$0xff]
        %v800 = vld [vmem:[%s241 + $0xdd8] sm:$0xff]
        %v801 = vld [vmem:[%s241 + $0xde0] sm:$0xff]
        %v802 = vld [vmem:[%s241 + $0xde8] sm:$0xff]
        %v803 = vld [vmem:[%s241 + $0xdf0] sm:$0xff]
        %v804 = vld [vmem:[%s241 + $0xdf8] sm:$0xff]
        %v805 = vld [vmem:[%s241 + $0xe00] sm:$0xff]
        %v806 = vld [vmem:[%s241 + $0xe08] sm:$0xff]
        %v807 = vld [vmem:[%s241 + $0xe10] sm:$0xff]
        %v808 = vld [vmem:[%s241 + $0xe18] sm:$0xff]
        %v809 = vld [vmem:[%s241 + $0xe20] sm:$0xff]
        %v810 = vld [vmem:[%s241 + $0xe28] sm:$0xff]
        %v811 = vld [vmem:[%s241 + $0xe30] sm:$0xff]
        %v812 = vld [vmem:[%s241 + $0xe38] sm:$0xff]
        %v813 = vld [vmem:[%s241 + $0xe40] sm:$0xff]
        %v814 = vld [vmem:[%s241 + $0xe48] sm:$0xff]
        %v815 = vld [vmem:[%s241 + $0xe50] sm:$0xff]
        %v816 = vld [vmem:[%s241 + $0xe58] sm:$0xff]
        %v817 = vld [vmem:[%s241 + $0xe60] sm:$0xff]
        %v818 = vld [vmem:[%s241 + $0xe68] sm:$0xff]
        %v819 = vld [vmem:[%s241 + $0xe70] sm:$0xff]
        %v820 = vld [vmem:[%s241 + $0xe78] sm:$0xff]
        %v821 = vld [vmem:[%s241 + $0xe80] sm:$0xff]
        %v822 = vld [vmem:[%s241 + $0xe88] sm:$0xff]
        %v823 = vld [vmem:[%s241 + $0xe90] sm:$0xff]
        %v824 = vld [vmem:[%s241 + $0xe98] sm:$0xff]
        %v825 = vld [vmem:[%s241 + $0xea0] sm:$0xff]
        %v826 = vld [vmem:[%s241 + $0xea8] sm:$0xff]
        %v827 = vld [vmem:[%s241 + $0xeb0] sm:$0xff]
        %v828 = vld [vmem:[%s241 + $0xeb8] sm:$0xff]
        %v829 = vld [vmem:[%s241 + $0xec0] sm:$0xff]
        %v830 = vld [vmem:[%s241 + $0xec8] sm:$0xff]
        %v831 = vld [vmem:[%s241 + $0xed0] sm:$0xff]
        %v832 = vld [vmem:[%s241 + $0xed8] sm:$0xff]
        %v833 = vld [vmem:[%s241 + $0xee0] sm:$0xff]
        %v834 = vld [vmem:[%s241 + $0xee8] sm:$0xff]
        %v835 = vld [vmem:[%s241 + $0xef0] sm:$0xff]
        %v836 = vld [vmem:[%s241 + $0xef8] sm:$0xff]
        %v837 = vld [vmem:[%s241 + $0xf00] sm:$0xff]
        %v838 = vld [vmem:[%s241 + $0xf08] sm:$0xff]
        %v839 = vld [vmem:[%s241 + $0xf10] sm:$0xff]
        %v840 = vld [vmem:[%s241 + $0xf18] sm:$0xff]
        %v841 = vld [vmem:[%s241 + $0xf20] sm:$0xff]
        %v842 = vld [vmem:[%s241 + $0xf28] sm:$0xff]
        %v843 = vld [vmem:[%s241 + $0xf30] sm:$0xff]
        %v844 = vld [vmem:[%s241 + $0xf38] sm:$0xff]
        %v845 = vld [vmem:[%s241 + $0xf40] sm:$0xff]
        %v846 = vld [vmem:[%s241 + $0xf48] sm:$0xff]
        %v847 = vld [vmem:[%s241 + $0xf50] sm:$0xff]
        %v848 = vld [vmem:[%s241 + $0xf58] sm:$0xff]
        %v849 = vld [vmem:[%s241 + $0xf60] sm:$0xff]
        %v850 = vld [vmem:[%s241 + $0xf68] sm:$0xff]
        %v851 = vld [vmem:[%s241 + $0xf70] sm:$0xff]
        %v852 = vld [vmem:[%s241 + $0xf78] sm:$0xff]
        %v853 = vld [vmem:[%s241 + $0xf80] sm:$0xff]
        %v854 = vld [vmem:[%s241 + $0xf88] sm:$0xff]
        %v855 = vld [vmem:[%s241 + $0xf90] sm:$0xff]
        %v856 = vld [vmem:[%s241 + $0xf98] sm:$0xff]
        %v857 = vld [vmem:[%s241 + $0xfa0] sm:$0xff]
        %v858 = vld [vmem:[%s241 + $0xfa8] sm:$0xff]
        %v859 = vld [vmem:[%s241 + $0xfb0] sm:$0xff]
        %v860 = vld [vmem:[%s241 + $0xfb8] sm:$0xff]
        %v861 = vld [vmem:[%s241 + $0xfc0] sm:$0xff]
        %v862 = vld [vmem:[%s241 + $0xfc8] sm:$0xff]
        %v863 = vld [vmem:[%s241 + $0xfd0] sm:$0xff]
        %v864 = vld [vmem:[%s241 + $0xfd8] sm:$0xff]
        %v865 = vld [vmem:[%s241 + $0xfe0] sm:$0xff]
        %v866 = vld [vmem:[%s241 + $0xfe8] sm:$0xff]
        %v867 = vld [vmem:[%s241 + $0xff0] sm:$0xff]
        %v868 = vld [vmem:[%s241 + $0xff8] sm:$0xff]
        %v869 = vld [vmem:[%s241 + $0x1000] sm:$0xff]
        %v870 = vld [vmem:[%s241 + $0x1008] sm:$0xff]
        %v871 = vld [vmem:[%s241 + $0x1010] sm:$0xff]
        %v872 = vld [vmem:[%s241 + $0x1018] sm:$0xff]
        %v873 = vld [vmem:[%s241 + $0x1020] sm:$0xff]
        %v874 = vld [vmem:[%s241 + $0x1028] sm:$0xff]
        %v875 = vld [vmem:[%s241 + $0x1030] sm:$0xff]
        %v876 = vld [vmem:[%s241 + $0x1038] sm:$0xff]
        %v877 = vld [vmem:[%s241 + $0x1040] sm:$0xff]
        %v878 = vld [vmem:[%s241 + $0x1048] sm:$0xff]
        %v879 = vld [vmem:[%s241 + $0x1050] sm:$0xff]
        %v880 = vld [vmem:[%s241 + $0x1058] sm:$0xff]
        %v881 = vld [vmem:[%s241 + $0x1060] sm:$0xff]
        %v882 = vld [vmem:[%s241 + $0x1068] sm:$0xff]
        %v883 = vld [vmem:[%s241 + $0x1070] sm:$0xff]
        %v884 = vld [vmem:[%s241 + $0x1078] sm:$0xff]
        %v885 = vld [vmem:[%s241 + $0x1080] sm:$0xff]
        %v886 = vld [vmem:[%s241 + $0x1088] sm:$0xff]
        %v887 = vld [vmem:[%s241 + $0x1090] sm:$0xff]
        %v888 = vld [vmem:[%s241 + $0x1098] sm:$0xff]
        %v889 = vld [vmem:[%s241 + $0x10a0] sm:$0xff]
        %v890 = vld [vmem:[%s241 + $0x10a8] sm:$0xff]
        %v891 = vld [vmem:[%s241 + $0x10b0] sm:$0xff]
        %v892 = vld [vmem:[%s241 + $0x10b8] sm:$0xff]
        %v893 = vld [vmem:[%s241 + $0x10c0] sm:$0xff]
        %v894 = vld [vmem:[%s241 + $0x10c8] sm:$0xff]
        %v895 = vld [vmem:[%s241 + $0x10d0] sm:$0xff]
        %v896 = vld [vmem:[%s241 + $0x10d8] sm:$0xff]
        %v897 = vld [vmem:[%s241 + $0x10e0] sm:$0xff]
        %v898 = vld [vmem:[%s241 + $0x10e8] sm:$0xff]
        %v899 = vld [vmem:[%s241 + $0x10f0] sm:$0xff]
        %v900 = vld [vmem:[%s241 + $0x10f8] sm:$0xff]
        %v901 = vld [vmem:[%s241 + $0x1100] sm:$0xff]
        %v902 = vld [vmem:[%s241 + $0x1108] sm:$0xff]
        %v903 = vld [vmem:[%s241 + $0x1110] sm:$0xff]
        %v904 = vld [vmem:[%s241 + $0x1118] sm:$0xff]
        %v905 = vld [vmem:[%s241 + $0x1120] sm:$0xff]
        %v906 = vld [vmem:[%s241 + $0x1128] sm:$0xff]
        %v907 = vld [vmem:[%s241 + $0x1130] sm:$0xff]
        %v908 = vld [vmem:[%s241 + $0x1138] sm:$0xff]
        %v909 = vld [vmem:[%s241 + $0x1140] sm:$0xff]
        %v910 = vld [vmem:[%s241 + $0x1148] sm:$0xff]
        %v911 = vld [vmem:[%s241 + $0x1150] sm:$0xff]
        %v912 = vld [vmem:[%s241 + $0x1158] sm:$0xff]
        %v913 = vld [vmem:[%s241 + $0x1160] sm:$0xff]
        %v914 = vld [vmem:[%s241 + $0x1168] sm:$0xff]
        %v915 = vld [vmem:[%s241 + $0x1170] sm:$0xff]
        %v916 = vld [vmem:[%s241 + $0x1178] sm:$0xff]
        %v917 = vld [vmem:[%s241 + $0x1180] sm:$0xff]
        %v918 = vld [vmem:[%s241 + $0x1188] sm:$0xff]
        %v919 = vld [vmem:[%s241 + $0x1190] sm:$0xff]
        %v920 = vld [vmem:[%s241 + $0x1198] sm:$0xff]
        %v921 = vld [vmem:[%s241 + $0x11a0] sm:$0xff]
        %v922 = vld [vmem:[%s241 + $0x11a8] sm:$0xff]
        %v923 = vld [vmem:[%s241 + $0x11b0] sm:$0xff]
        %v924 = vld [vmem:[%s241 + $0x11b8] sm:$0xff]
        %v925 = vld [vmem:[%s241 + $0x11c0] sm:$0xff]
        %v926 = vld [vmem:[%s241 + $0x11c8] sm:$0xff]
        %v927 = vld [vmem:[%s241 + $0x11d0] sm:$0xff]
        %v928 = vld [vmem:[%s241 + $0x11d8] sm:$0xff]
        %v929 = vld [vmem:[%s241 + $0x11e0] sm:$0xff]
        %v930 = vld [vmem:[%s241 + $0x11e8] sm:$0xff]
        %v931 = vld [vmem:[%s241 + $0x11f0] sm:$0xff]
        %v932 = vld [vmem:[%s241 + $0x11f8] sm:$0xff]
        %v933 = vld [vmem:[%s241 + $0x1200] sm:$0xff]
        %v934 = vld [vmem:[%s241 + $0x1208] sm:$0xff]
        %v935 = vld [vmem:[%s241 + $0x1210] sm:$0xff]
        %v936 = vld [vmem:[%s241 + $0x1218] sm:$0xff]
        %v937 = vld [vmem:[%s241 + $0x1220] sm:$0xff]
        %v938 = vld [vmem:[%s241 + $0x1228] sm:$0xff]
        %v939 = vld [vmem:[%s241 + $0x1230] sm:$0xff]
        %v940 = vld [vmem:[%s241 + $0x1238] sm:$0xff]
        %v941 = vld [vmem:[%s241 + $0x1240] sm:$0xff]
        %v942 = vld [vmem:[%s241 + $0x1248] sm:$0xff]
        %v943 = vld [vmem:[%s241 + $0x1250] sm:$0xff]
        %v944 = vld [vmem:[%s241 + $0x1258] sm:$0xff]
        %v945 = vld [vmem:[%s241 + $0x1260] sm:$0xff]
        %v946 = vld [vmem:[%s241 + $0x1268] sm:$0xff]
        %v947 = vld [vmem:[%s241 + $0x1270] sm:$0xff]
        %v948 = vld [vmem:[%s241 + $0x1278] sm:$0xff]
        %v949 = vld [vmem:[%s241 + $0x1280] sm:$0xff]
        %v950 = vld [vmem:[%s241 + $0x1288] sm:$0xff]
        %v951 = vld [vmem:[%s241 + $0x1290] sm:$0xff]
        %v952 = vld [vmem:[%s241 + $0x1298] sm:$0xff]
        %v953 = vld [vmem:[%s241 + $0x12a0] sm:$0xff]
        %v954 = vld [vmem:[%s241 + $0x12a8] sm:$0xff]
        %v955 = vld [vmem:[%s241 + $0x12b0] sm:$0xff]
        %v956 = vld [vmem:[%s241 + $0x12b8] sm:$0xff]
        %v957 = vld [vmem:[%s241 + $0x12c0] sm:$0xff]
        %v958 = vld [vmem:[%s241 + $0x12c8] sm:$0xff]
        %v959 = vld [vmem:[%s241 + $0x12d0] sm:$0xff]
        %v960 = vld [vmem:[%s241 + $0x12d8] sm:$0xff]
        %v961 = vld [vmem:[%s241 + $0x12e0] sm:$0xff]
        %v962 = vld [vmem:[%s241 + $0x12e8] sm:$0xff]
        %v963 = vld [vmem:[%s241 + $0x12f0] sm:$0xff]
        %v964 = vld [vmem:[%s241 + $0x12f8] sm:$0xff]
        %v965 = vld [vmem:[%s241 + $0x1300] sm:$0xff]
        %v966 = vld [vmem:[%s241 + $0x1308] sm:$0xff]
        %v967 = vld [vmem:[%s241 + $0x1310] sm:$0xff]
        %v968 = vld [vmem:[%s241 + $0x1318] sm:$0xff]
        %v969 = vld [vmem:[%s241 + $0x1320] sm:$0xff]
        %v970 = vld [vmem:[%s241 + $0x1328] sm:$0xff]
        %v971 = vld [vmem:[%s241 + $0x1330] sm:$0xff]
        %v972 = vld [vmem:[%s241 + $0x1338] sm:$0xff]
        %v973 = vld [vmem:[%s241 + $0x1340] sm:$0xff]
        %v974 = vld [vmem:[%s241 + $0x1348] sm:$0xff]
        %v975 = vld [vmem:[%s241 + $0x1350] sm:$0xff]
        %v976 = vld [vmem:[%s241 + $0x1358] sm:$0xff]
        %v977 = vld [vmem:[%s241 + $0x1360] sm:$0xff]
        %v978 = vld [vmem:[%s241 + $0x1368] sm:$0xff]
        %v979 = vld [vmem:[%s241 + $0x1370] sm:$0xff]
        %v980 = vld [vmem:[%s241 + $0x1378] sm:$0xff]
        %v981 = vld [vmem:[%s241 + $0x1380] sm:$0xff]
        %v982 = vld [vmem:[%s241 + $0x1388] sm:$0xff]
        %v983 = vld [vmem:[%s241 + $0x1390] sm:$0xff]
        %v984 = vld [vmem:[%s241 + $0x1398] sm:$0xff]
        %v985 = vld [vmem:[%s241 + $0x13a0] sm:$0xff]
        %v986 = vld [vmem:[%s241 + $0x13a8] sm:$0xff]
        %v987 = vld [vmem:[%s241 + $0x13b0] sm:$0xff]
        %v988 = vld [vmem:[%s241 + $0x13b8] sm:$0xff]
        %v989 = vld [vmem:[%s241 + $0x13c0] sm:$0xff]
        %v990 = vld [vmem:[%s241 + $0x13c8] sm:$0xff]
        %v991 = vld [vmem:[%s241 + $0x13d0] sm:$0xff]
        %v992 = vld [vmem:[%s241 + $0x13d8] sm:$0xff]
        %v993 = vld [vmem:[%s241 + $0x13e0] sm:$0xff]
        %v994 = vld [vmem:[%s241 + $0x13e8] sm:$0xff]
        %v995 = vld [vmem:[%s241 + $0x13f0] sm:$0xff]
        %v996 = vld [vmem:[%s241 + $0x13f8] sm:$0xff]
        %v997 = vld [vmem:[%s241 + $0x1400] sm:$0xff]
        %v998 = vld [vmem:[%s241 + $0x1408] sm:$0xff]
        %v999 = vld [vmem:[%s241 + $0x1410] sm:$0xff]
        %v1000 = vld [vmem:[%s241 + $0x1418] sm:$0xff]
        %v1001 = vld [vmem:[%s241 + $0x1420] sm:$0xff]
        %v1002 = vld [vmem:[%s241 + $0x1428] sm:$0xff]
        %v1003 = vld [vmem:[%s241 + $0x1430] sm:$0xff]
        %v1004 = vld [vmem:[%s241 + $0x1438] sm:$0xff]
        %v1005 = vld [vmem:[%s241 + $0x1440] sm:$0xff]
        %v1006 = vld [vmem:[%s241 + $0x1448] sm:$0xff]
        %v1007 = vld [vmem:[%s241 + $0x1450] sm:$0xff]
        %v1008 = vld [vmem:[%s241 + $0x1458] sm:$0xff]
        %v1009 = vld [vmem:[%s241 + $0x1460] sm:$0xff]
        %v1010 = vld [vmem:[%s241 + $0x1468] sm:$0xff]
        %v1011 = vld [vmem:[%s241 + $0x1470] sm:$0xff]
        %v1012 = vld [vmem:[%s241 + $0x1478] sm:$0xff]
        %v1013 = vld [vmem:[%s241 + $0x1480] sm:$0xff]
        %v1014 = vld [vmem:[%s241 + $0x1488] sm:$0xff]
        %v1015 = vld [vmem:[%s241 + $0x1490] sm:$0xff]
        %v1016 = vld [vmem:[%s241 + $0x1498] sm:$0xff]
        %v1017 = vld [vmem:[%s241 + $0x14a0] sm:$0xff]
        %v1018 = vld [vmem:[%s241 + $0x14a8] sm:$0xff]
        %v1019 = vld [vmem:[%s241 + $0x14b0] sm:$0xff]
        %v1020 = vld [vmem:[%s241 + $0x14b8] sm:$0xff]
        %v1021 = vld [vmem:[%s241 + $0x14c0] sm:$0xff]
        %v1022 = vld [vmem:[%s241 + $0x14c8] sm:$0xff]
        %v1023 = vld [vmem:[%s241 + $0x14d0] sm:$0xff]
        %v1024 = vld [vmem:[%s241 + $0x14d8] sm:$0xff]
        %v1025 = vld [vmem:[%s241 + $0x14e0] sm:$0xff]
        %v1026 = vld [vmem:[%s241 + $0x14e8] sm:$0xff]
        %v1027 = vld [vmem:[%s241 + $0x14f0] sm:$0xff]
        %v1028 = vld [vmem:[%s241 + $0x14f8] sm:$0xff]
        %v1029 = vld [vmem:[%s241 + $0x1500] sm:$0xff]
        %v1030 = vld [vmem:[%s241 + $0x1508] sm:$0xff]
        %v1031 = vld [vmem:[%s241 + $0x1510] sm:$0xff]
        %v1032 = vld [vmem:[%s241 + $0x1518] sm:$0xff]
        %v1033 = vld [vmem:[%s241 + $0x1520] sm:$0xff]
        %v1034 = vld [vmem:[%s241 + $0x1528] sm:$0xff]
        %v1035 = vld [vmem:[%s241 + $0x1530] sm:$0xff]
        %v1036 = vld [vmem:[%s241 + $0x1538] sm:$0xff]
        %v1037 = vld [vmem:[%s241 + $0x1540] sm:$0xff]
        %v1038 = vld [vmem:[%s241 + $0x1548] sm:$0xff]
        %v1039 = vld [vmem:[%s241 + $0x1550] sm:$0xff]
        %v1040 = vld [vmem:[%s241 + $0x1558] sm:$0xff]
        %v1041 = vld [vmem:[%s241 + $0x1560] sm:$0xff]
        %v1042 = vld [vmem:[%s241 + $0x1568] sm:$0xff]
        %v1043 = vld [vmem:[%s241 + $0x1570] sm:$0xff]
        %v1044 = vld [vmem:[%s241 + $0x1578] sm:$0xff]
        %v1045 = vld [vmem:[%s241 + $0x1580] sm:$0xff]
        %v1046 = vld [vmem:[%s241 + $0x1588] sm:$0xff]
        %v1047 = vld [vmem:[%s241 + $0x1590] sm:$0xff]
        %v1048 = vld [vmem:[%s241 + $0x1598] sm:$0xff]
        %v1049 = vld [vmem:[%s241 + $0x15a0] sm:$0xff]
        %v1050 = vld [vmem:[%s241 + $0x15a8] sm:$0xff]
        %v1051 = vld [vmem:[%s241 + $0x15b0] sm:$0xff]
        %v1052 = vld [vmem:[%s241 + $0x15b8] sm:$0xff]
        %v1053 = vld [vmem:[%s241 + $0x15c0] sm:$0xff]
        %v1054 = vld [vmem:[%s241 + $0x15c8] sm:$0xff]
        %v1055 = vld [vmem:[%s241 + $0x15d0] sm:$0xff]
        %v1056 = vld [vmem:[%s241 + $0x15d8] sm:$0xff]
        %v1057 = vld [vmem:[%s241 + $0x15e0] sm:$0xff]
        %v1058 = vld [vmem:[%s241 + $0x15e8] sm:$0xff]
        %v1059 = vld [vmem:[%s241 + $0x15f0] sm:$0xff]
        %v1060 = vld [vmem:[%s241 + $0x15f8] sm:$0xff]
        %v1061 = vld [vmem:[%s241 + $0x1600] sm:$0xff]
        %v1062 = vld [vmem:[%s241 + $0x1608] sm:$0xff]
        %v1063 = vld [vmem:[%s241 + $0x1610] sm:$0xff]
        %v1064 = vld [vmem:[%s241 + $0x1618] sm:$0xff]
        %v1065 = vld [vmem:[%s241 + $0x1620] sm:$0xff]
        %v1066 = vld [vmem:[%s241 + $0x1628] sm:$0xff]
        %v1067 = vld [vmem:[%s241 + $0x1630] sm:$0xff]
        %v1068 = vld [vmem:[%s241 + $0x1638] sm:$0xff]
        %v1069 = vld [vmem:[%s241 + $0x1640] sm:$0xff]
        %v1070 = vld [vmem:[%s241 + $0x1648] sm:$0xff]
        %v1071 = vld [vmem:[%s241 + $0x1650] sm:$0xff]
        %v1072 = vld [vmem:[%s241 + $0x1658] sm:$0xff]
        %v1073 = vld [vmem:[%s241 + $0x1660] sm:$0xff]
        %v1074 = vld [vmem:[%s241 + $0x1668] sm:$0xff]
        %v1075 = vld [vmem:[%s241 + $0x1670] sm:$0xff]
        %v1076 = vld [vmem:[%s241 + $0x1678] sm:$0xff]
        %v1077 = vld [vmem:[%s241 + $0x1680] sm:$0xff]
        %v1078 = vld [vmem:[%s241 + $0x1688] sm:$0xff]
        %v1079 = vld [vmem:[%s241 + $0x1690] sm:$0xff]
        %v1080 = vld [vmem:[%s241 + $0x1698] sm:$0xff]
        %v1081 = vld [vmem:[%s241 + $0x16a0] sm:$0xff]
        %v1082 = vld [vmem:[%s241 + $0x16a8] sm:$0xff]
        %v1083 = vld [vmem:[%s241 + $0x16b0] sm:$0xff]
        %v1084 = vld [vmem:[%s241 + $0x16b8] sm:$0xff]
        %v1085 = vld [vmem:[%s241 + $0x16c0] sm:$0xff]
        %v1086 = vld [vmem:[%s241 + $0x16c8] sm:$0xff]
        %v1087 = vld [vmem:[%s241 + $0x16d0] sm:$0xff]
        %v1088 = vld [vmem:[%s241 + $0x16d8] sm:$0xff]
        %v1089 = vld [vmem:[%s241 + $0x16e0] sm:$0xff]
        %v1090 = vld [vmem:[%s241 + $0x16e8] sm:$0xff]
        %v1091 = vld [vmem:[%s241 + $0x16f0] sm:$0xff]
        %v1092 = vld [vmem:[%s241 + $0x16f8] sm:$0xff]
        %v1093 = vld [vmem:[%s241 + $0x1700] sm:$0xff]
        %v1094 = vld [vmem:[%s241 + $0x1708] sm:$0xff]
        %v1095 = vld [vmem:[%s241 + $0x1710] sm:$0xff]
        %v1096 = vld [vmem:[%s241 + $0x1718] sm:$0xff]
        %v1097 = vld [vmem:[%s241 + $0x1720] sm:$0xff]
        %v1098 = vld [vmem:[%s241 + $0x1728] sm:$0xff]
        %v1099 = vld [vmem:[%s241 + $0x1730] sm:$0xff]
        %v1100 = vld [vmem:[%s241 + $0x1738] sm:$0xff]
        %v1101 = vld [vmem:[%s241 + $0x1740] sm:$0xff]
        %v1102 = vld [vmem:[%s241 + $0x1748] sm:$0xff]
        %v1103 = vld [vmem:[%s241 + $0x1750] sm:$0xff]
        %v1104 = vld [vmem:[%s241 + $0x1758] sm:$0xff]
        %v1105 = vld [vmem:[%s241 + $0x1760] sm:$0xff]
        %v1106 = vld [vmem:[%s241 + $0x1768] sm:$0xff]
        %v1107 = vld [vmem:[%s241 + $0x1770] sm:$0xff]
        %v1108 = vld [vmem:[%s241 + $0x1778] sm:$0xff]
        %v1109 = vld [vmem:[%s241 + $0x1780] sm:$0xff]
        %v1110 = vld [vmem:[%s241 + $0x1788] sm:$0xff]
        %v1111 = vld [vmem:[%s241 + $0x1790] sm:$0xff]
        %v1112 = vld [vmem:[%s241 + $0x1798] sm:$0xff]
        %v1113 = vld [vmem:[%s241 + $0x17a0] sm:$0xff]
        %v1114 = vld [vmem:[%s241 + $0x17a8] sm:$0xff]
        %v1115 = vld [vmem:[%s241 + $0x17b0] sm:$0xff]
        %v1116 = vld [vmem:[%s241 + $0x17b8] sm:$0xff]
        %v1117 = vld [vmem:[%s241 + $0x17c0] sm:$0xff]
        %v1118 = vld [vmem:[%s241 + $0x17c8] sm:$0xff]
        %v1119 = vld [vmem:[%s241 + $0x17d0] sm:$0xff]
        %v1120 = vld [vmem:[%s241 + $0x17d8] sm:$0xff]
        %v1121 = vld [vmem:[%s241 + $0x17e0] sm:$0xff]
        %v1122 = vld [vmem:[%s241 + $0x17e8] sm:$0xff]
        %v1123 = vld [vmem:[%s241 + $0x17f0] sm:$0xff]
        %v1124 = vld [vmem:[%s241 + $0x17f8] sm:$0xff]
        %v1125 = vld [vmem:[%s250] sm:$0xf]
        %v1127 = vlaneseq
        %v1128 = vshrl.u32 %v1127, 7
        %v1129 = vsub.s32 0, %v1128
        %v1130 = vrot.slane %v1125, %v1129
        %v1131 = vlaneseq
        %v1132 = vshrl.u32 %v1131, 7
        %v1133 = vsub.s32 1, %v1132
        %v1134 = vrot.slane %v1125, %v1133
        %v1135 = vlaneseq
        %v1136 = vshrl.u32 %v1135, 7
        %v1137 = vsub.s32 2, %v1136
        %v1138 = vrot.slane %v1125, %v1137
        %v1139 = vlaneseq
        %v1140 = vshrl.u32 %v1139, 7
        %v1141 = vsub.s32 3, %v1140
        %v1142 = vrot.slane %v1125, %v1141
        %v1915 = vunpack.c.l.b16 %v357
        %v1916 = vunpack.c.h.b16 %v357
        %v1917 = vunpack.c.l.b16 %v358
        %v1918 = vunpack.c.h.b16 %v358
        %v1919 = vunpack.c.l.b16 %v359
        %v1920 = vunpack.c.h.b16 %v359
        %v1921 = vunpack.c.l.b16 %v360
        %v1922 = vunpack.c.h.b16 %v360
        %v1923 = vunpack.c.l.b16 %v361
        %v1924 = vunpack.c.h.b16 %v361
        %v1925 = vunpack.c.l.b16 %v362
        %v1926 = vunpack.c.h.b16 %v362
        %v1927 = vunpack.c.l.b16 %v363
        %v1928 = vunpack.c.h.b16 %v363
        %v1929 = vunpack.c.l.b16 %v364
        %v1930 = vunpack.c.h.b16 %v364
        %v1931 = vunpack.c.l.b16 %v365
        %v1932 = vunpack.c.h.b16 %v365
        %v1933 = vunpack.c.l.b16 %v366
        %v1934 = vunpack.c.h.b16 %v366
        %v1935 = vunpack.c.l.b16 %v367
        %v1936 = vunpack.c.h.b16 %v367
        %v1937 = vunpack.c.l.b16 %v368
        %v1938 = vunpack.c.h.b16 %v368
        %v1939 = vunpack.c.l.b16 %v369
        %v1940 = vunpack.c.h.b16 %v369
        %v1941 = vunpack.c.l.b16 %v370
        %v1942 = vunpack.c.h.b16 %v370
        %v1943 = vunpack.c.l.b16 %v371
        %v1944 = vunpack.c.h.b16 %v371
        %v1945 = vunpack.c.l.b16 %v372
        %v1946 = vunpack.c.h.b16 %v372
        %v1947 = vunpack.c.l.b16 %v373
        %v1948 = vunpack.c.h.b16 %v373
        %v1949 = vunpack.c.l.b16 %v374
        %v1950 = vunpack.c.h.b16 %v374
        %v1951 = vunpack.c.l.b16 %v375
        %v1952 = vunpack.c.h.b16 %v375
        %v1953 = vunpack.c.l.b16 %v376
        %v1954 = vunpack.c.h.b16 %v376
        %v1955 = vunpack.c.l.b16 %v377
        %v1956 = vunpack.c.h.b16 %v377
        %v1957 = vunpack.c.l.b16 %v378
        %v1958 = vunpack.c.h.b16 %v378
        %v1959 = vunpack.c.l.b16 %v379
        %v1960 = vunpack.c.h.b16 %v379
        %v1961 = vunpack.c.l.b16 %v380
        %v1962 = vunpack.c.h.b16 %v380
        %v1963 = vunpack.c.l.b16 %v381
        %v1964 = vunpack.c.h.b16 %v381
        %v1965 = vunpack.c.l.b16 %v382
        %v1966 = vunpack.c.h.b16 %v382
        %v1967 = vunpack.c.l.b16 %v383
        %v1968 = vunpack.c.h.b16 %v383
        %v1969 = vunpack.c.l.b16 %v384
        %v1970 = vunpack.c.h.b16 %v384
        %v1971 = vunpack.c.l.b16 %v385
        %v1972 = vunpack.c.h.b16 %v385
        %v1973 = vunpack.c.l.b16 %v386
        %v1974 = vunpack.c.h.b16 %v386
        %v1975 = vunpack.c.l.b16 %v387
        %v1976 = vunpack.c.h.b16 %v387
        %v1977 = vunpack.c.l.b16 %v388
        %v1978 = vunpack.c.h.b16 %v388
        %v1979 = vunpack.c.l.b16 %v389
        %v1980 = vunpack.c.h.b16 %v389
        %v1981 = vunpack.c.l.b16 %v390
        %v1982 = vunpack.c.h.b16 %v390
        %v1983 = vunpack.c.l.b16 %v391
        %v1984 = vunpack.c.h.b16 %v391
        %v1985 = vunpack.c.l.b16 %v392
        %v1986 = vunpack.c.h.b16 %v392
        %v1987 = vunpack.c.l.b16 %v393
        %v1988 = vunpack.c.h.b16 %v393
        %v1989 = vunpack.c.l.b16 %v394
        %v1990 = vunpack.c.h.b16 %v394
        %v1991 = vunpack.c.l.b16 %v395
        %v1992 = vunpack.c.h.b16 %v395
        %v1993 = vunpack.c.l.b16 %v396
        %v1994 = vunpack.c.h.b16 %v396
        %v1995 = vunpack.c.l.b16 %v397
        %v1996 = vunpack.c.h.b16 %v397
        %v1997 = vunpack.c.l.b16 %v398
        %v1998 = vunpack.c.h.b16 %v398
        %v1999 = vunpack.c.l.b16 %v399
        %v2000 = vunpack.c.h.b16 %v399
        %v2001 = vunpack.c.l.b16 %v400
        %v2002 = vunpack.c.h.b16 %v400
        %v2003 = vunpack.c.l.b16 %v401
        %v2004 = vunpack.c.h.b16 %v401
        %v2005 = vunpack.c.l.b16 %v402
        %v2006 = vunpack.c.h.b16 %v402
        %v2007 = vunpack.c.l.b16 %v403
        %v2008 = vunpack.c.h.b16 %v403
        %v2009 = vunpack.c.l.b16 %v404
        %v2010 = vunpack.c.h.b16 %v404
        %v2011 = vunpack.c.l.b16 %v405
        %v2012 = vunpack.c.h.b16 %v405
        %v2013 = vunpack.c.l.b16 %v406
        %v2014 = vunpack.c.h.b16 %v406
        %v2015 = vunpack.c.l.b16 %v407
        %v2016 = vunpack.c.h.b16 %v407
        %v2017 = vunpack.c.l.b16 %v408
        %v2018 = vunpack.c.h.b16 %v408
        %v2019 = vunpack.c.l.b16 %v409
        %v2020 = vunpack.c.h.b16 %v409
        %v2021 = vunpack.c.l.b16 %v410
        %v2022 = vunpack.c.h.b16 %v410
        %v2023 = vunpack.c.l.b16 %v411
        %v2024 = vunpack.c.h.b16 %v411
        %v2025 = vunpack.c.l.b16 %v412
        %v2026 = vunpack.c.h.b16 %v412
        %v2027 = vunpack.c.l.b16 %v413
        %v2028 = vunpack.c.h.b16 %v413
        %v2029 = vunpack.c.l.b16 %v414
        %v2030 = vunpack.c.h.b16 %v414
        %v2031 = vunpack.c.l.b16 %v415
        %v2032 = vunpack.c.h.b16 %v415
        %v2033 = vunpack.c.l.b16 %v416
        %v2034 = vunpack.c.h.b16 %v416
        %v2035 = vunpack.c.l.b16 %v417
        %v2036 = vunpack.c.h.b16 %v417
        %v2037 = vunpack.c.l.b16 %v418
        %v2038 = vunpack.c.h.b16 %v418
        %v2039 = vunpack.c.l.b16 %v419
        %v2040 = vunpack.c.h.b16 %v419
        %v2041 = vunpack.c.l.b16 %v420
        %v2042 = vunpack.c.h.b16 %v420
        %v2043 = vunpack.c.l.b16 %v421
        %v2044 = vunpack.c.h.b16 %v421
        %v2045 = vunpack.c.l.b16 %v422
        %v2046 = vunpack.c.h.b16 %v422
        %v2047 = vunpack.c.l.b16 %v423
        %v2048 = vunpack.c.h.b16 %v423
        %v2049 = vunpack.c.l.b16 %v424
        %v2050 = vunpack.c.h.b16 %v424
        %v2051 = vunpack.c.l.b16 %v425
        %v2052 = vunpack.c.h.b16 %v425
        %v2053 = vunpack.c.l.b16 %v426
        %v2054 = vunpack.c.h.b16 %v426
        %v2055 = vunpack.c.l.b16 %v427
        %v2056 = vunpack.c.h.b16 %v427
        %v2057 = vunpack.c.l.b16 %v428
        %v2058 = vunpack.c.h.b16 %v428
        %v2059 = vunpack.c.l.b16 %v429
        %v2060 = vunpack.c.h.b16 %v429
        %v2061 = vunpack.c.l.b16 %v430
        %v2062 = vunpack.c.h.b16 %v430
        %v2063 = vunpack.c.l.b16 %v431
        %v2064 = vunpack.c.h.b16 %v431
        %v2065 = vunpack.c.l.b16 %v432
        %v2066 = vunpack.c.h.b16 %v432
        %v2067 = vunpack.c.l.b16 %v433
        %v2068 = vunpack.c.h.b16 %v433
        %v2069 = vunpack.c.l.b16 %v434
        %v2070 = vunpack.c.h.b16 %v434
        %v2071 = vunpack.c.l.b16 %v435
        %v2072 = vunpack.c.h.b16 %v435
        %v2073 = vunpack.c.l.b16 %v436
        %v2074 = vunpack.c.h.b16 %v436
        %v2075 = vunpack.c.l.b16 %v437
        %v2076 = vunpack.c.h.b16 %v437
        %v2077 = vunpack.c.l.b16 %v438
        %v2078 = vunpack.c.h.b16 %v438
        %v2079 = vunpack.c.l.b16 %v439
        %v2080 = vunpack.c.h.b16 %v439
        %v2081 = vunpack.c.l.b16 %v440
        %v2082 = vunpack.c.h.b16 %v440
        %v2083 = vunpack.c.l.b16 %v441
        %v2084 = vunpack.c.h.b16 %v441
        %v2085 = vunpack.c.l.b16 %v442
        %v2086 = vunpack.c.h.b16 %v442
        %v2087 = vunpack.c.l.b16 %v443
        %v2088 = vunpack.c.h.b16 %v443
        %v2089 = vunpack.c.l.b16 %v444
        %v2090 = vunpack.c.h.b16 %v444
        %v2091 = vunpack.c.l.b16 %v445
        %v2092 = vunpack.c.h.b16 %v445
        %v2093 = vunpack.c.l.b16 %v446
        %v2094 = vunpack.c.h.b16 %v446
        %v2095 = vunpack.c.l.b16 %v447
        %v2096 = vunpack.c.h.b16 %v447
        %v2097 = vunpack.c.l.b16 %v448
        %v2098 = vunpack.c.h.b16 %v448
        %v2099 = vunpack.c.l.b16 %v449
        %v2100 = vunpack.c.h.b16 %v449
        %v2101 = vunpack.c.l.b16 %v450
        %v2102 = vunpack.c.h.b16 %v450
        %v2103 = vunpack.c.l.b16 %v451
        %v2104 = vunpack.c.h.b16 %v451
        %v2105 = vunpack.c.l.b16 %v452
        %v2106 = vunpack.c.h.b16 %v452
        %v2107 = vunpack.c.l.b16 %v453
        %v2108 = vunpack.c.h.b16 %v453
        %v2109 = vunpack.c.l.b16 %v454
        %v2110 = vunpack.c.h.b16 %v454
        %v2111 = vunpack.c.l.b16 %v455
        %v2112 = vunpack.c.h.b16 %v455
        %v2113 = vunpack.c.l.b16 %v456
        %v2114 = vunpack.c.h.b16 %v456
        %v2115 = vunpack.c.l.b16 %v457
        %v2116 = vunpack.c.h.b16 %v457
        %v2117 = vunpack.c.l.b16 %v458
        %v2118 = vunpack.c.h.b16 %v458
        %v2119 = vunpack.c.l.b16 %v459
        %v2120 = vunpack.c.h.b16 %v459
        %v2121 = vunpack.c.l.b16 %v460
        %v2122 = vunpack.c.h.b16 %v460
        %v2123 = vunpack.c.l.b16 %v461
        %v2124 = vunpack.c.h.b16 %v461
        %v2125 = vunpack.c.l.b16 %v462
        %v2126 = vunpack.c.h.b16 %v462
        %v2127 = vunpack.c.l.b16 %v463
        %v2128 = vunpack.c.h.b16 %v463
        %v2129 = vunpack.c.l.b16 %v464
        %v2130 = vunpack.c.h.b16 %v464
        %v2131 = vunpack.c.l.b16 %v465
        %v2132 = vunpack.c.h.b16 %v465
        %v2133 = vunpack.c.l.b16 %v466
        %v2134 = vunpack.c.h.b16 %v466
        %v2135 = vunpack.c.l.b16 %v467
        %v2136 = vunpack.c.h.b16 %v467
        %v2137 = vunpack.c.l.b16 %v468
        %v2138 = vunpack.c.h.b16 %v468
        %v2139 = vunpack.c.l.b16 %v469
        %v2140 = vunpack.c.h.b16 %v469
        %v2141 = vunpack.c.l.b16 %v470
        %v2142 = vunpack.c.h.b16 %v470
        %v2143 = vunpack.c.l.b16 %v471
        %v2144 = vunpack.c.h.b16 %v471
        %v2145 = vunpack.c.l.b16 %v472
        %v2146 = vunpack.c.h.b16 %v472
        %v2147 = vunpack.c.l.b16 %v473
        %v2148 = vunpack.c.h.b16 %v473
        %v2149 = vunpack.c.l.b16 %v474
        %v2150 = vunpack.c.h.b16 %v474
        %v2151 = vunpack.c.l.b16 %v475
        %v2152 = vunpack.c.h.b16 %v475
        %v2153 = vunpack.c.l.b16 %v476
        %v2154 = vunpack.c.h.b16 %v476
        %v2155 = vunpack.c.l.b16 %v477
        %v2156 = vunpack.c.h.b16 %v477
        %v2157 = vunpack.c.l.b16 %v478
        %v2158 = vunpack.c.h.b16 %v478
        %v2159 = vunpack.c.l.b16 %v479
        %v2160 = vunpack.c.h.b16 %v479
        %v2161 = vunpack.c.l.b16 %v480
        %v2162 = vunpack.c.h.b16 %v480
        %v2163 = vunpack.c.l.b16 %v481
        %v2164 = vunpack.c.h.b16 %v481
        %v2165 = vunpack.c.l.b16 %v482
        %v2166 = vunpack.c.h.b16 %v482
        %v2167 = vunpack.c.l.b16 %v483
        %v2168 = vunpack.c.h.b16 %v483
        %v2169 = vunpack.c.l.b16 %v484
        %v2170 = vunpack.c.h.b16 %v484
        %v2171 = vunpack.c.l.b16 %v485
        %v2172 = vunpack.c.h.b16 %v485
        %v2173 = vunpack.c.l.b16 %v486
        %v2174 = vunpack.c.h.b16 %v486
        %v2175 = vunpack.c.l.b16 %v487
        %v2176 = vunpack.c.h.b16 %v487
        %v2177 = vunpack.c.l.b16 %v488
        %v2178 = vunpack.c.h.b16 %v488
        %v2179 = vunpack.c.l.b16 %v489
        %v2180 = vunpack.c.h.b16 %v489
        %v2181 = vunpack.c.l.b16 %v490
        %v2182 = vunpack.c.h.b16 %v490
        %v2183 = vunpack.c.l.b16 %v491
        %v2184 = vunpack.c.h.b16 %v491
        %v2185 = vunpack.c.l.b16 %v492
        %v2186 = vunpack.c.h.b16 %v492
        %v2187 = vunpack.c.l.b16 %v493
        %v2188 = vunpack.c.h.b16 %v493
        %v2189 = vunpack.c.l.b16 %v494
        %v2190 = vunpack.c.h.b16 %v494
        %v2191 = vunpack.c.l.b16 %v495
        %v2192 = vunpack.c.h.b16 %v495
        %v2193 = vunpack.c.l.b16 %v496
        %v2194 = vunpack.c.h.b16 %v496
        %v2195 = vunpack.c.l.b16 %v497
        %v2196 = vunpack.c.h.b16 %v497
        %v2197 = vunpack.c.l.b16 %v498
        %v2198 = vunpack.c.h.b16 %v498
        %v2199 = vunpack.c.l.b16 %v499
        %v2200 = vunpack.c.h.b16 %v499
        %v2201 = vunpack.c.l.b16 %v500
        %v2202 = vunpack.c.h.b16 %v500
        %v2203 = vunpack.c.l.b16 %v501
        %v2204 = vunpack.c.h.b16 %v501
        %v2205 = vunpack.c.l.b16 %v502
        %v2206 = vunpack.c.h.b16 %v502
        %v2207 = vunpack.c.l.b16 %v503
        %v2208 = vunpack.c.h.b16 %v503
        %v2209 = vunpack.c.l.b16 %v504
        %v2210 = vunpack.c.h.b16 %v504
        %v2211 = vunpack.c.l.b16 %v505
        %v2212 = vunpack.c.h.b16 %v505
        %v2213 = vunpack.c.l.b16 %v506
        %v2214 = vunpack.c.h.b16 %v506
        %v2215 = vunpack.c.l.b16 %v507
        %v2216 = vunpack.c.h.b16 %v507
        %v2217 = vunpack.c.l.b16 %v508
        %v2218 = vunpack.c.h.b16 %v508
        %v2219 = vunpack.c.l.b16 %v509
        %v2220 = vunpack.c.h.b16 %v509
        %v2221 = vunpack.c.l.b16 %v510
        %v2222 = vunpack.c.h.b16 %v510
        %v2223 = vunpack.c.l.b16 %v511
        %v2224 = vunpack.c.h.b16 %v511
        %v2225 = vunpack.c.l.b16 %v512
        %v2226 = vunpack.c.h.b16 %v512
        %v2227 = vunpack.c.l.b16 %v513
        %v2228 = vunpack.c.h.b16 %v513
        %v2229 = vunpack.c.l.b16 %v514
        %v2230 = vunpack.c.h.b16 %v514
        %v2231 = vunpack.c.l.b16 %v515
        %v2232 = vunpack.c.h.b16 %v515
        %v2233 = vunpack.c.l.b16 %v516
        %v2234 = vunpack.c.h.b16 %v516
        %v2235 = vunpack.c.l.b16 %v517
        %v2236 = vunpack.c.h.b16 %v517
        %v2237 = vunpack.c.l.b16 %v518
        %v2238 = vunpack.c.h.b16 %v518
        %v2239 = vunpack.c.l.b16 %v519
        %v2240 = vunpack.c.h.b16 %v519
        %v2241 = vunpack.c.l.b16 %v520
        %v2242 = vunpack.c.h.b16 %v520
        %v2243 = vunpack.c.l.b16 %v521
        %v2244 = vunpack.c.h.b16 %v521
        %v2245 = vunpack.c.l.b16 %v522
        %v2246 = vunpack.c.h.b16 %v522
        %v2247 = vunpack.c.l.b16 %v523
        %v2248 = vunpack.c.h.b16 %v523
        %v2249 = vunpack.c.l.b16 %v524
        %v2250 = vunpack.c.h.b16 %v524
        %v2251 = vunpack.c.l.b16 %v525
        %v2252 = vunpack.c.h.b16 %v525
        %v2253 = vunpack.c.l.b16 %v526
        %v2254 = vunpack.c.h.b16 %v526
        %v2255 = vunpack.c.l.b16 %v527
        %v2256 = vunpack.c.h.b16 %v527
        %v2257 = vunpack.c.l.b16 %v528
        %v2258 = vunpack.c.h.b16 %v528
        %v2259 = vunpack.c.l.b16 %v529
        %v2260 = vunpack.c.h.b16 %v529
        %v2261 = vunpack.c.l.b16 %v530
        %v2262 = vunpack.c.h.b16 %v530
        %v2263 = vunpack.c.l.b16 %v531
        %v2264 = vunpack.c.h.b16 %v531
        %v2265 = vunpack.c.l.b16 %v532
        %v2266 = vunpack.c.h.b16 %v532
        %v2267 = vunpack.c.l.b16 %v533
        %v2268 = vunpack.c.h.b16 %v533
        %v2269 = vunpack.c.l.b16 %v534
        %v2270 = vunpack.c.h.b16 %v534
        %v2271 = vunpack.c.l.b16 %v535
        %v2272 = vunpack.c.h.b16 %v535
        %v2273 = vunpack.c.l.b16 %v536
        %v2274 = vunpack.c.h.b16 %v536
        %v2275 = vunpack.c.l.b16 %v537
        %v2276 = vunpack.c.h.b16 %v537
        %v2277 = vunpack.c.l.b16 %v538
        %v2278 = vunpack.c.h.b16 %v538
        %v2279 = vunpack.c.l.b16 %v539
        %v2280 = vunpack.c.h.b16 %v539
        %v2281 = vunpack.c.l.b16 %v540
        %v2282 = vunpack.c.h.b16 %v540
        %v2283 = vunpack.c.l.b16 %v541
        %v2284 = vunpack.c.h.b16 %v541
        %v2285 = vunpack.c.l.b16 %v542
        %v2286 = vunpack.c.h.b16 %v542
        %v2287 = vunpack.c.l.b16 %v543
        %v2288 = vunpack.c.h.b16 %v543
        %v2289 = vunpack.c.l.b16 %v544
        %v2290 = vunpack.c.h.b16 %v544
        %v2291 = vunpack.c.l.b16 %v545
        %v2292 = vunpack.c.h.b16 %v545
        %v2293 = vunpack.c.l.b16 %v546
        %v2294 = vunpack.c.h.b16 %v546
        %v2295 = vunpack.c.l.b16 %v547
        %v2296 = vunpack.c.h.b16 %v547
        %v2297 = vunpack.c.l.b16 %v548
        %v2298 = vunpack.c.h.b16 %v548
        %v2299 = vunpack.c.l.b16 %v549
        %v2300 = vunpack.c.h.b16 %v549
        %v2301 = vunpack.c.l.b16 %v550
        %v2302 = vunpack.c.h.b16 %v550
        %v2303 = vunpack.c.l.b16 %v551
        %v2304 = vunpack.c.h.b16 %v551
        %v2305 = vunpack.c.l.b16 %v552
        %v2306 = vunpack.c.h.b16 %v552
        %v2307 = vunpack.c.l.b16 %v553
        %v2308 = vunpack.c.h.b16 %v553
        %v2309 = vunpack.c.l.b16 %v554
        %v2310 = vunpack.c.h.b16 %v554
        %v2311 = vunpack.c.l.b16 %v555
        %v2312 = vunpack.c.h.b16 %v555
        %v2313 = vunpack.c.l.b16 %v556
        %v2314 = vunpack.c.h.b16 %v556
        %v2315 = vunpack.c.l.b16 %v557
        %v2316 = vunpack.c.h.b16 %v557
        %v2317 = vunpack.c.l.b16 %v558
        %v2318 = vunpack.c.h.b16 %v558
        %v2319 = vunpack.c.l.b16 %v559
        %v2320 = vunpack.c.h.b16 %v559
        %v2321 = vunpack.c.l.b16 %v560
        %v2322 = vunpack.c.h.b16 %v560
        %v2323 = vunpack.c.l.b16 %v561
        %v2324 = vunpack.c.h.b16 %v561
        %v2325 = vunpack.c.l.b16 %v562
        %v2326 = vunpack.c.h.b16 %v562
        %v2327 = vunpack.c.l.b16 %v563
        %v2328 = vunpack.c.h.b16 %v563
        %v2329 = vunpack.c.l.b16 %v564
        %v2330 = vunpack.c.h.b16 %v564
        %v2331 = vunpack.c.l.b16 %v565
        %v2332 = vunpack.c.h.b16 %v565
        %v2333 = vunpack.c.l.b16 %v566
        %v2334 = vunpack.c.h.b16 %v566
        %v2335 = vunpack.c.l.b16 %v567
        %v2336 = vunpack.c.h.b16 %v567
        %v2337 = vunpack.c.l.b16 %v568
        %v2338 = vunpack.c.h.b16 %v568
        %v2339 = vunpack.c.l.b16 %v569
        %v2340 = vunpack.c.h.b16 %v569
        %v2341 = vunpack.c.l.b16 %v570
        %v2342 = vunpack.c.h.b16 %v570
        %v2343 = vunpack.c.l.b16 %v571
        %v2344 = vunpack.c.h.b16 %v571
        %v2345 = vunpack.c.l.b16 %v572
        %v2346 = vunpack.c.h.b16 %v572
        %v2347 = vunpack.c.l.b16 %v573
        %v2348 = vunpack.c.h.b16 %v573
        %v2349 = vunpack.c.l.b16 %v574
        %v2350 = vunpack.c.h.b16 %v574
        %v2351 = vunpack.c.l.b16 %v575
        %v2352 = vunpack.c.h.b16 %v575
        %v2353 = vunpack.c.l.b16 %v576
        %v2354 = vunpack.c.h.b16 %v576
        %v2355 = vunpack.c.l.b16 %v577
        %v2356 = vunpack.c.h.b16 %v577
        %v2357 = vunpack.c.l.b16 %v578
        %v2358 = vunpack.c.h.b16 %v578
        %v2359 = vunpack.c.l.b16 %v579
        %v2360 = vunpack.c.h.b16 %v579
        %v2361 = vunpack.c.l.b16 %v580
        %v2362 = vunpack.c.h.b16 %v580
        %v2363 = vunpack.c.l.b16 %v581
        %v2364 = vunpack.c.h.b16 %v581
        %v2365 = vunpack.c.l.b16 %v582
        %v2366 = vunpack.c.h.b16 %v582
        %v2367 = vunpack.c.l.b16 %v583
        %v2368 = vunpack.c.h.b16 %v583
        %v2369 = vunpack.c.l.b16 %v584
        %v2370 = vunpack.c.h.b16 %v584
        %v2371 = vunpack.c.l.b16 %v585
        %v2372 = vunpack.c.h.b16 %v585
        %v2373 = vunpack.c.l.b16 %v586
        %v2374 = vunpack.c.h.b16 %v586
        %v2375 = vunpack.c.l.b16 %v587
        %v2376 = vunpack.c.h.b16 %v587
        %v2377 = vunpack.c.l.b16 %v588
        %v2378 = vunpack.c.h.b16 %v588
        %v2379 = vunpack.c.l.b16 %v589
        %v2380 = vunpack.c.h.b16 %v589
        %v2381 = vunpack.c.l.b16 %v590
        %v2382 = vunpack.c.h.b16 %v590
        %v2383 = vunpack.c.l.b16 %v591
        %v2384 = vunpack.c.h.b16 %v591
        %v2385 = vunpack.c.l.b16 %v592
        %v2386 = vunpack.c.h.b16 %v592
        %v2387 = vunpack.c.l.b16 %v593
        %v2388 = vunpack.c.h.b16 %v593
        %v2389 = vunpack.c.l.b16 %v594
        %v2390 = vunpack.c.h.b16 %v594
        %v2391 = vunpack.c.l.b16 %v595
        %v2392 = vunpack.c.h.b16 %v595
        %v2393 = vunpack.c.l.b16 %v596
        %v2394 = vunpack.c.h.b16 %v596
        %v2395 = vunpack.c.l.b16 %v597
        %v2396 = vunpack.c.h.b16 %v597
        %v2397 = vunpack.c.l.b16 %v598
        %v2398 = vunpack.c.h.b16 %v598
        %v2399 = vunpack.c.l.b16 %v599
        %v2400 = vunpack.c.h.b16 %v599
        %v2401 = vunpack.c.l.b16 %v600
        %v2402 = vunpack.c.h.b16 %v600
        %v2403 = vunpack.c.l.b16 %v601
        %v2404 = vunpack.c.h.b16 %v601
        %v2405 = vunpack.c.l.b16 %v602
        %v2406 = vunpack.c.h.b16 %v602
        %v2407 = vunpack.c.l.b16 %v603
        %v2408 = vunpack.c.h.b16 %v603
        %v2409 = vunpack.c.l.b16 %v604
        %v2410 = vunpack.c.h.b16 %v604
        %v2411 = vunpack.c.l.b16 %v605
        %v2412 = vunpack.c.h.b16 %v605
        %v2413 = vunpack.c.l.b16 %v606
        %v2414 = vunpack.c.h.b16 %v606
        %v2415 = vunpack.c.l.b16 %v607
        %v2416 = vunpack.c.h.b16 %v607
        %v2417 = vunpack.c.l.b16 %v608
        %v2418 = vunpack.c.h.b16 %v608
        %v2419 = vunpack.c.l.b16 %v609
        %v2420 = vunpack.c.h.b16 %v609
        %v2421 = vunpack.c.l.b16 %v610
        %v2422 = vunpack.c.h.b16 %v610
        %v2423 = vunpack.c.l.b16 %v611
        %v2424 = vunpack.c.h.b16 %v611
        %v2425 = vunpack.c.l.b16 %v612
        %v2426 = vunpack.c.h.b16 %v612
        %v2427 = vunpack.c.l.b16 %v613
        %v2428 = vunpack.c.h.b16 %v613
        %v2429 = vunpack.c.l.b16 %v614
        %v2430 = vunpack.c.h.b16 %v614
        %v2431 = vunpack.c.l.b16 %v615
        %v2432 = vunpack.c.h.b16 %v615
        %v2433 = vunpack.c.l.b16 %v616
        %v2434 = vunpack.c.h.b16 %v616
        %v2435 = vunpack.c.l.b16 %v617
        %v2436 = vunpack.c.h.b16 %v617
        %v2437 = vunpack.c.l.b16 %v618
        %v2438 = vunpack.c.h.b16 %v618
        %v2439 = vunpack.c.l.b16 %v619
        %v2440 = vunpack.c.h.b16 %v619
        %v2441 = vunpack.c.l.b16 %v620
        %v2442 = vunpack.c.h.b16 %v620
        %v2443 = vunpack.c.l.b16 %v621
        %v2444 = vunpack.c.h.b16 %v621
        %v2445 = vunpack.c.l.b16 %v622
        %v2446 = vunpack.c.h.b16 %v622
        %v2447 = vunpack.c.l.b16 %v623
        %v2448 = vunpack.c.h.b16 %v623
        %v2449 = vunpack.c.l.b16 %v624
        %v2450 = vunpack.c.h.b16 %v624
        %v2451 = vunpack.c.l.b16 %v625
        %v2452 = vunpack.c.h.b16 %v625
        %v2453 = vunpack.c.l.b16 %v626
        %v2454 = vunpack.c.h.b16 %v626
        %v2455 = vunpack.c.l.b16 %v627
        %v2456 = vunpack.c.h.b16 %v627
        %v2457 = vunpack.c.l.b16 %v628
        %v2458 = vunpack.c.h.b16 %v628
        %v2459 = vunpack.c.l.b16 %v629
        %v2460 = vunpack.c.h.b16 %v629
        %v2461 = vunpack.c.l.b16 %v630
        %v2462 = vunpack.c.h.b16 %v630
        %v2463 = vunpack.c.l.b16 %v631
        %v2464 = vunpack.c.h.b16 %v631
        %v2465 = vunpack.c.l.b16 %v632
        %v2466 = vunpack.c.h.b16 %v632
        %v2467 = vunpack.c.l.b16 %v633
        %v2468 = vunpack.c.h.b16 %v633
        %v2469 = vunpack.c.l.b16 %v634
        %v2470 = vunpack.c.h.b16 %v634
        %v2471 = vunpack.c.l.b16 %v635
        %v2472 = vunpack.c.h.b16 %v635
        %v2473 = vunpack.c.l.b16 %v636
        %v2474 = vunpack.c.h.b16 %v636
        %v2475 = vunpack.c.l.b16 %v637
        %v2476 = vunpack.c.h.b16 %v637
        %v2477 = vunpack.c.l.b16 %v638
        %v2478 = vunpack.c.h.b16 %v638
        %v2479 = vunpack.c.l.b16 %v639
        %v2480 = vunpack.c.h.b16 %v639
        %v2481 = vunpack.c.l.b16 %v640
        %v2482 = vunpack.c.h.b16 %v640
        %v2483 = vunpack.c.l.b16 %v641
        %v2484 = vunpack.c.h.b16 %v641
        %v2485 = vunpack.c.l.b16 %v642
        %v2486 = vunpack.c.h.b16 %v642
        %v2487 = vunpack.c.l.b16 %v643
        %v2488 = vunpack.c.h.b16 %v643
        %v2489 = vunpack.c.l.b16 %v644
        %v2490 = vunpack.c.h.b16 %v644
        %v2491 = vunpack.c.l.b16 %v645
        %v2492 = vunpack.c.h.b16 %v645
        %v2493 = vunpack.c.l.b16 %v646
        %v2494 = vunpack.c.h.b16 %v646
        %v2495 = vunpack.c.l.b16 %v647
        %v2496 = vunpack.c.h.b16 %v647
        %v2497 = vunpack.c.l.b16 %v648
        %v2498 = vunpack.c.h.b16 %v648
        %v2499 = vunpack.c.l.b16 %v649
        %v2500 = vunpack.c.h.b16 %v649
        %v2501 = vunpack.c.l.b16 %v650
        %v2502 = vunpack.c.h.b16 %v650
        %v2503 = vunpack.c.l.b16 %v651
        %v2504 = vunpack.c.h.b16 %v651
        %v2505 = vunpack.c.l.b16 %v652
        %v2506 = vunpack.c.h.b16 %v652
        %v2507 = vunpack.c.l.b16 %v653
        %v2508 = vunpack.c.h.b16 %v653
        %v2509 = vunpack.c.l.b16 %v654
        %v2510 = vunpack.c.h.b16 %v654
        %v2511 = vunpack.c.l.b16 %v655
        %v2512 = vunpack.c.h.b16 %v655
        %v2513 = vunpack.c.l.b16 %v656
        %v2514 = vunpack.c.h.b16 %v656
        %v2515 = vunpack.c.l.b16 %v657
        %v2516 = vunpack.c.h.b16 %v657
        %v2517 = vunpack.c.l.b16 %v658
        %v2518 = vunpack.c.h.b16 %v658
        %v2519 = vunpack.c.l.b16 %v659
        %v2520 = vunpack.c.h.b16 %v659
        %v2521 = vunpack.c.l.b16 %v660
        %v2522 = vunpack.c.h.b16 %v660
        %v2523 = vunpack.c.l.b16 %v661
        %v2524 = vunpack.c.h.b16 %v661
        %v2525 = vunpack.c.l.b16 %v662
        %v2526 = vunpack.c.h.b16 %v662
        %v2527 = vunpack.c.l.b16 %v663
        %v2528 = vunpack.c.h.b16 %v663
        %v2529 = vunpack.c.l.b16 %v664
        %v2530 = vunpack.c.h.b16 %v664
        %v2531 = vunpack.c.l.b16 %v665
        %v2532 = vunpack.c.h.b16 %v665
        %v2533 = vunpack.c.l.b16 %v666
        %v2534 = vunpack.c.h.b16 %v666
        %v2535 = vunpack.c.l.b16 %v667
        %v2536 = vunpack.c.h.b16 %v667
        %v2537 = vunpack.c.l.b16 %v668
        %v2538 = vunpack.c.h.b16 %v668
        %v2539 = vunpack.c.l.b16 %v669
        %v2540 = vunpack.c.h.b16 %v669
        %v2541 = vunpack.c.l.b16 %v670
        %v2542 = vunpack.c.h.b16 %v670
        %v2543 = vunpack.c.l.b16 %v671
        %v2544 = vunpack.c.h.b16 %v671
        %v2545 = vunpack.c.l.b16 %v672
        %v2546 = vunpack.c.h.b16 %v672
        %v2547 = vunpack.c.l.b16 %v673
        %v2548 = vunpack.c.h.b16 %v673
        %v2549 = vunpack.c.l.b16 %v674
        %v2550 = vunpack.c.h.b16 %v674
        %v2551 = vunpack.c.l.b16 %v675
        %v2552 = vunpack.c.h.b16 %v675
        %v2553 = vunpack.c.l.b16 %v676
        %v2554 = vunpack.c.h.b16 %v676
        %v2555 = vunpack.c.l.b16 %v677
        %v2556 = vunpack.c.h.b16 %v677
        %v2557 = vunpack.c.l.b16 %v678
        %v2558 = vunpack.c.h.b16 %v678
        %v2559 = vunpack.c.l.b16 %v679
        %v2560 = vunpack.c.h.b16 %v679
        %v2561 = vunpack.c.l.b16 %v680
        %v2562 = vunpack.c.h.b16 %v680
        %v2563 = vunpack.c.l.b16 %v681
        %v2564 = vunpack.c.h.b16 %v681
        %v2565 = vunpack.c.l.b16 %v682
        %v2566 = vunpack.c.h.b16 %v682
        %v2567 = vunpack.c.l.b16 %v683
        %v2568 = vunpack.c.h.b16 %v683
        %v2569 = vunpack.c.l.b16 %v684
        %v2570 = vunpack.c.h.b16 %v684
        %v2571 = vunpack.c.l.b16 %v685
        %v2572 = vunpack.c.h.b16 %v685
        %v2573 = vunpack.c.l.b16 %v686
        %v2574 = vunpack.c.h.b16 %v686
        %v2575 = vunpack.c.l.b16 %v687
        %v2576 = vunpack.c.h.b16 %v687
        %v2577 = vunpack.c.l.b16 %v688
        %v2578 = vunpack.c.h.b16 %v688
        %v2579 = vunpack.c.l.b16 %v689
        %v2580 = vunpack.c.h.b16 %v689
        %v2581 = vunpack.c.l.b16 %v690
        %v2582 = vunpack.c.h.b16 %v690
        %v2583 = vunpack.c.l.b16 %v691
        %v2584 = vunpack.c.h.b16 %v691
        %v2585 = vunpack.c.l.b16 %v692
        %v2586 = vunpack.c.h.b16 %v692
        %v2587 = vunpack.c.l.b16 %v693
        %v2588 = vunpack.c.h.b16 %v693
        %v2589 = vunpack.c.l.b16 %v694
        %v2590 = vunpack.c.h.b16 %v694
        %v2591 = vunpack.c.l.b16 %v695
        %v2592 = vunpack.c.h.b16 %v695
        %v2593 = vunpack.c.l.b16 %v696
        %v2594 = vunpack.c.h.b16 %v696
        %v2595 = vunpack.c.l.b16 %v697
        %v2596 = vunpack.c.h.b16 %v697
        %v2597 = vunpack.c.l.b16 %v698
        %v2598 = vunpack.c.h.b16 %v698
        %v2599 = vunpack.c.l.b16 %v699
        %v2600 = vunpack.c.h.b16 %v699
        %v2601 = vunpack.c.l.b16 %v700
        %v2602 = vunpack.c.h.b16 %v700
        %v2603 = vunpack.c.l.b16 %v701
        %v2604 = vunpack.c.h.b16 %v701
        %v2605 = vunpack.c.l.b16 %v702
        %v2606 = vunpack.c.h.b16 %v702
        %v2607 = vunpack.c.l.b16 %v703
        %v2608 = vunpack.c.h.b16 %v703
        %v2609 = vunpack.c.l.b16 %v704
        %v2610 = vunpack.c.h.b16 %v704
        %v2611 = vunpack.c.l.b16 %v705
        %v2612 = vunpack.c.h.b16 %v705
        %v2613 = vunpack.c.l.b16 %v706
        %v2614 = vunpack.c.h.b16 %v706
        %v2615 = vunpack.c.l.b16 %v707
        %v2616 = vunpack.c.h.b16 %v707
        %v2617 = vunpack.c.l.b16 %v708
        %v2618 = vunpack.c.h.b16 %v708
        %v2619 = vunpack.c.l.b16 %v709
        %v2620 = vunpack.c.h.b16 %v709
        %v2621 = vunpack.c.l.b16 %v710
        %v2622 = vunpack.c.h.b16 %v710
        %v2623 = vunpack.c.l.b16 %v711
        %v2624 = vunpack.c.h.b16 %v711
        %v2625 = vunpack.c.l.b16 %v712
        %v2626 = vunpack.c.h.b16 %v712
        %v2627 = vunpack.c.l.b16 %v713
        %v2628 = vunpack.c.h.b16 %v713
        %v2629 = vunpack.c.l.b16 %v714
        %v2630 = vunpack.c.h.b16 %v714
        %v2631 = vunpack.c.l.b16 %v715
        %v2632 = vunpack.c.h.b16 %v715
        %v2633 = vunpack.c.l.b16 %v716
        %v2634 = vunpack.c.h.b16 %v716
        %v2635 = vunpack.c.l.b16 %v717
        %v2636 = vunpack.c.h.b16 %v717
        %v2637 = vunpack.c.l.b16 %v718
        %v2638 = vunpack.c.h.b16 %v718
        %v2639 = vunpack.c.l.b16 %v719
        %v2640 = vunpack.c.h.b16 %v719
        %v2641 = vunpack.c.l.b16 %v720
        %v2642 = vunpack.c.h.b16 %v720
        %v2643 = vunpack.c.l.b16 %v721
        %v2644 = vunpack.c.h.b16 %v721
        %v2645 = vunpack.c.l.b16 %v722
        %v2646 = vunpack.c.h.b16 %v722
        %v2647 = vunpack.c.l.b16 %v723
        %v2648 = vunpack.c.h.b16 %v723
        %v2649 = vunpack.c.l.b16 %v724
        %v2650 = vunpack.c.h.b16 %v724
        %v2651 = vunpack.c.l.b16 %v725
        %v2652 = vunpack.c.h.b16 %v725
        %v2653 = vunpack.c.l.b16 %v726
        %v2654 = vunpack.c.h.b16 %v726
        %v2655 = vunpack.c.l.b16 %v727
        %v2656 = vunpack.c.h.b16 %v727
        %v2657 = vunpack.c.l.b16 %v728
        %v2658 = vunpack.c.h.b16 %v728
        %v2659 = vunpack.c.l.b16 %v729
        %v2660 = vunpack.c.h.b16 %v729
        %v2661 = vunpack.c.l.b16 %v730
        %v2662 = vunpack.c.h.b16 %v730
        %v2663 = vunpack.c.l.b16 %v731
        %v2664 = vunpack.c.h.b16 %v731
        %v2665 = vunpack.c.l.b16 %v732
        %v2666 = vunpack.c.h.b16 %v732
        %v2667 = vunpack.c.l.b16 %v733
        %v2668 = vunpack.c.h.b16 %v733
        %v2669 = vunpack.c.l.b16 %v734
        %v2670 = vunpack.c.h.b16 %v734
        %v2671 = vunpack.c.l.b16 %v735
        %v2672 = vunpack.c.h.b16 %v735
        %v2673 = vunpack.c.l.b16 %v736
        %v2674 = vunpack.c.h.b16 %v736
        %v2675 = vunpack.c.l.b16 %v737
        %v2676 = vunpack.c.h.b16 %v737
        %v2677 = vunpack.c.l.b16 %v738
        %v2678 = vunpack.c.h.b16 %v738
        %v2679 = vunpack.c.l.b16 %v739
        %v2680 = vunpack.c.h.b16 %v739
        %v2681 = vunpack.c.l.b16 %v740
        %v2682 = vunpack.c.h.b16 %v740
        %v2683 = vunpack.c.l.b16 %v741
        %v2684 = vunpack.c.h.b16 %v741
        %v2685 = vunpack.c.l.b16 %v742
        %v2686 = vunpack.c.h.b16 %v742
        %v2687 = vunpack.c.l.b16 %v743
        %v2688 = vunpack.c.h.b16 %v743
        %v2689 = vunpack.c.l.b16 %v744
        %v2690 = vunpack.c.h.b16 %v744
        %v2691 = vunpack.c.l.b16 %v745
        %v2692 = vunpack.c.h.b16 %v745
        %v2693 = vunpack.c.l.b16 %v746
        %v2694 = vunpack.c.h.b16 %v746
        %v2695 = vunpack.c.l.b16 %v747
        %v2696 = vunpack.c.h.b16 %v747
        %v2697 = vunpack.c.l.b16 %v748
        %v2698 = vunpack.c.h.b16 %v748
        %v2699 = vunpack.c.l.b16 %v749
        %v2700 = vunpack.c.h.b16 %v749
        %v2701 = vunpack.c.l.b16 %v750
        %v2702 = vunpack.c.h.b16 %v750
        %v2703 = vunpack.c.l.b16 %v751
        %v2704 = vunpack.c.h.b16 %v751
        %v2705 = vunpack.c.l.b16 %v752
        %v2706 = vunpack.c.h.b16 %v752
        %v2707 = vunpack.c.l.b16 %v753
        %v2708 = vunpack.c.h.b16 %v753
        %v2709 = vunpack.c.l.b16 %v754
        %v2710 = vunpack.c.h.b16 %v754
        %v2711 = vunpack.c.l.b16 %v755
        %v2712 = vunpack.c.h.b16 %v755
        %v2713 = vunpack.c.l.b16 %v756
        %v2714 = vunpack.c.h.b16 %v756
        %v2715 = vunpack.c.l.b16 %v757
        %v2716 = vunpack.c.h.b16 %v757
        %v2717 = vunpack.c.l.b16 %v758
        %v2718 = vunpack.c.h.b16 %v758
        %v2719 = vunpack.c.l.b16 %v759
        %v2720 = vunpack.c.h.b16 %v759
        %v2721 = vunpack.c.l.b16 %v760
        %v2722 = vunpack.c.h.b16 %v760
        %v2723 = vunpack.c.l.b16 %v761
        %v2724 = vunpack.c.h.b16 %v761
        %v2725 = vunpack.c.l.b16 %v762
        %v2726 = vunpack.c.h.b16 %v762
        %v2727 = vunpack.c.l.b16 %v763
        %v2728 = vunpack.c.h.b16 %v763
        %v2729 = vunpack.c.l.b16 %v764
        %v2730 = vunpack.c.h.b16 %v764
        %v2731 = vunpack.c.l.b16 %v765
        %v2732 = vunpack.c.h.b16 %v765
        %v2733 = vunpack.c.l.b16 %v766
        %v2734 = vunpack.c.h.b16 %v766
        %v2735 = vunpack.c.l.b16 %v767
        %v2736 = vunpack.c.h.b16 %v767
        %v2737 = vunpack.c.l.b16 %v768
        %v2738 = vunpack.c.h.b16 %v768
        %v2739 = vunpack.c.l.b16 %v769
        %v2740 = vunpack.c.h.b16 %v769
        %v2741 = vunpack.c.l.b16 %v770
        %v2742 = vunpack.c.h.b16 %v770
        %v2743 = vunpack.c.l.b16 %v771
        %v2744 = vunpack.c.h.b16 %v771
        %v2745 = vunpack.c.l.b16 %v772
        %v2746 = vunpack.c.h.b16 %v772
        %v2747 = vunpack.c.l.b16 %v773
        %v2748 = vunpack.c.h.b16 %v773
        %v2749 = vunpack.c.l.b16 %v774
        %v2750 = vunpack.c.h.b16 %v774
        %v2751 = vunpack.c.l.b16 %v775
        %v2752 = vunpack.c.h.b16 %v775
        %v2753 = vunpack.c.l.b16 %v776
        %v2754 = vunpack.c.h.b16 %v776
        %v2755 = vunpack.c.l.b16 %v777
        %v2756 = vunpack.c.h.b16 %v777
        %v2757 = vunpack.c.l.b16 %v778
        %v2758 = vunpack.c.h.b16 %v778
        %v2759 = vunpack.c.l.b16 %v779
        %v2760 = vunpack.c.h.b16 %v779
        %v2761 = vunpack.c.l.b16 %v780
        %v2762 = vunpack.c.h.b16 %v780
        %v2763 = vunpack.c.l.b16 %v781
        %v2764 = vunpack.c.h.b16 %v781
        %v2765 = vunpack.c.l.b16 %v782
        %v2766 = vunpack.c.h.b16 %v782
        %v2767 = vunpack.c.l.b16 %v783
        %v2768 = vunpack.c.h.b16 %v783
        %v2769 = vunpack.c.l.b16 %v784
        %v2770 = vunpack.c.h.b16 %v784
        %v2771 = vunpack.c.l.b16 %v785
        %v2772 = vunpack.c.h.b16 %v785
        %v2773 = vunpack.c.l.b16 %v786
        %v2774 = vunpack.c.h.b16 %v786
        %v2775 = vunpack.c.l.b16 %v787
        %v2776 = vunpack.c.h.b16 %v787
        %v2777 = vunpack.c.l.b16 %v788
        %v2778 = vunpack.c.h.b16 %v788
        %v2779 = vunpack.c.l.b16 %v789
        %v2780 = vunpack.c.h.b16 %v789
        %v2781 = vunpack.c.l.b16 %v790
        %v2782 = vunpack.c.h.b16 %v790
        %v2783 = vunpack.c.l.b16 %v791
        %v2784 = vunpack.c.h.b16 %v791
        %v2785 = vunpack.c.l.b16 %v792
        %v2786 = vunpack.c.h.b16 %v792
        %v2787 = vunpack.c.l.b16 %v793
        %v2788 = vunpack.c.h.b16 %v793
        %v2789 = vunpack.c.l.b16 %v794
        %v2790 = vunpack.c.h.b16 %v794
        %v2791 = vunpack.c.l.b16 %v795
        %v2792 = vunpack.c.h.b16 %v795
        %v2793 = vunpack.c.l.b16 %v796
        %v2794 = vunpack.c.h.b16 %v796
        %v2795 = vunpack.c.l.b16 %v797
        %v2796 = vunpack.c.h.b16 %v797
        %v2797 = vunpack.c.l.b16 %v798
        %v2798 = vunpack.c.h.b16 %v798
        %v2799 = vunpack.c.l.b16 %v799
        %v2800 = vunpack.c.h.b16 %v799
        %v2801 = vunpack.c.l.b16 %v800
        %v2802 = vunpack.c.h.b16 %v800
        %v2803 = vunpack.c.l.b16 %v801
        %v2804 = vunpack.c.h.b16 %v801
        %v2805 = vunpack.c.l.b16 %v802
        %v2806 = vunpack.c.h.b16 %v802
        %v2807 = vunpack.c.l.b16 %v803
        %v2808 = vunpack.c.h.b16 %v803
        %v2809 = vunpack.c.l.b16 %v804
        %v2810 = vunpack.c.h.b16 %v804
        %v2811 = vunpack.c.l.b16 %v805
        %v2812 = vunpack.c.h.b16 %v805
        %v2813 = vunpack.c.l.b16 %v806
        %v2814 = vunpack.c.h.b16 %v806
        %v2815 = vunpack.c.l.b16 %v807
        %v2816 = vunpack.c.h.b16 %v807
        %v2817 = vunpack.c.l.b16 %v808
        %v2818 = vunpack.c.h.b16 %v808
        %v2819 = vunpack.c.l.b16 %v809
        %v2820 = vunpack.c.h.b16 %v809
        %v2821 = vunpack.c.l.b16 %v810
        %v2822 = vunpack.c.h.b16 %v810
        %v2823 = vunpack.c.l.b16 %v811
        %v2824 = vunpack.c.h.b16 %v811
        %v2825 = vunpack.c.l.b16 %v812
        %v2826 = vunpack.c.h.b16 %v812
        %v2827 = vunpack.c.l.b16 %v813
        %v2828 = vunpack.c.h.b16 %v813
        %v2829 = vunpack.c.l.b16 %v814
        %v2830 = vunpack.c.h.b16 %v814
        %v2831 = vunpack.c.l.b16 %v815
        %v2832 = vunpack.c.h.b16 %v815
        %v2833 = vunpack.c.l.b16 %v816
        %v2834 = vunpack.c.h.b16 %v816
        %v2835 = vunpack.c.l.b16 %v817
        %v2836 = vunpack.c.h.b16 %v817
        %v2837 = vunpack.c.l.b16 %v818
        %v2838 = vunpack.c.h.b16 %v818
        %v2839 = vunpack.c.l.b16 %v819
        %v2840 = vunpack.c.h.b16 %v819
        %v2841 = vunpack.c.l.b16 %v820
        %v2842 = vunpack.c.h.b16 %v820
        %v2843 = vunpack.c.l.b16 %v821
        %v2844 = vunpack.c.h.b16 %v821
        %v2845 = vunpack.c.l.b16 %v822
        %v2846 = vunpack.c.h.b16 %v822
        %v2847 = vunpack.c.l.b16 %v823
        %v2848 = vunpack.c.h.b16 %v823
        %v2849 = vunpack.c.l.b16 %v824
        %v2850 = vunpack.c.h.b16 %v824
        %v2851 = vunpack.c.l.b16 %v825
        %v2852 = vunpack.c.h.b16 %v825
        %v2853 = vunpack.c.l.b16 %v826
        %v2854 = vunpack.c.h.b16 %v826
        %v2855 = vunpack.c.l.b16 %v827
        %v2856 = vunpack.c.h.b16 %v827
        %v2857 = vunpack.c.l.b16 %v828
        %v2858 = vunpack.c.h.b16 %v828
        %v2859 = vunpack.c.l.b16 %v829
        %v2860 = vunpack.c.h.b16 %v829
        %v2861 = vunpack.c.l.b16 %v830
        %v2862 = vunpack.c.h.b16 %v830
        %v2863 = vunpack.c.l.b16 %v831
        %v2864 = vunpack.c.h.b16 %v831
        %v2865 = vunpack.c.l.b16 %v832
        %v2866 = vunpack.c.h.b16 %v832
        %v2867 = vunpack.c.l.b16 %v833
        %v2868 = vunpack.c.h.b16 %v833
        %v2869 = vunpack.c.l.b16 %v834
        %v2870 = vunpack.c.h.b16 %v834
        %v2871 = vunpack.c.l.b16 %v835
        %v2872 = vunpack.c.h.b16 %v835
        %v2873 = vunpack.c.l.b16 %v836
        %v2874 = vunpack.c.h.b16 %v836
        %v2875 = vunpack.c.l.b16 %v837
        %v2876 = vunpack.c.h.b16 %v837
        %v2877 = vunpack.c.l.b16 %v838
        %v2878 = vunpack.c.h.b16 %v838
        %v2879 = vunpack.c.l.b16 %v839
        %v2880 = vunpack.c.h.b16 %v839
        %v2881 = vunpack.c.l.b16 %v840
        %v2882 = vunpack.c.h.b16 %v840
        %v2883 = vunpack.c.l.b16 %v841
        %v2884 = vunpack.c.h.b16 %v841
        %v2885 = vunpack.c.l.b16 %v842
        %v2886 = vunpack.c.h.b16 %v842
        %v2887 = vunpack.c.l.b16 %v843
        %v2888 = vunpack.c.h.b16 %v843
        %v2889 = vunpack.c.l.b16 %v844
        %v2890 = vunpack.c.h.b16 %v844
        %v2891 = vunpack.c.l.b16 %v845
        %v2892 = vunpack.c.h.b16 %v845
        %v2893 = vunpack.c.l.b16 %v846
        %v2894 = vunpack.c.h.b16 %v846
        %v2895 = vunpack.c.l.b16 %v847
        %v2896 = vunpack.c.h.b16 %v847
        %v2897 = vunpack.c.l.b16 %v848
        %v2898 = vunpack.c.h.b16 %v848
        %v2899 = vunpack.c.l.b16 %v849
        %v2900 = vunpack.c.h.b16 %v849
        %v2901 = vunpack.c.l.b16 %v850
        %v2902 = vunpack.c.h.b16 %v850
        %v2903 = vunpack.c.l.b16 %v851
        %v2904 = vunpack.c.h.b16 %v851
        %v2905 = vunpack.c.l.b16 %v852
        %v2906 = vunpack.c.h.b16 %v852
        %v2907 = vunpack.c.l.b16 %v853
        %v2908 = vunpack.c.h.b16 %v853
        %v2909 = vunpack.c.l.b16 %v854
        %v2910 = vunpack.c.h.b16 %v854
        %v2911 = vunpack.c.l.b16 %v855
        %v2912 = vunpack.c.h.b16 %v855
        %v2913 = vunpack.c.l.b16 %v856
        %v2914 = vunpack.c.h.b16 %v856
        %v2915 = vunpack.c.l.b16 %v857
        %v2916 = vunpack.c.h.b16 %v857
        %v2917 = vunpack.c.l.b16 %v858
        %v2918 = vunpack.c.h.b16 %v858
        %v2919 = vunpack.c.l.b16 %v859
        %v2920 = vunpack.c.h.b16 %v859
        %v2921 = vunpack.c.l.b16 %v860
        %v2922 = vunpack.c.h.b16 %v860
        %v2923 = vunpack.c.l.b16 %v861
        %v2924 = vunpack.c.h.b16 %v861
        %v2925 = vunpack.c.l.b16 %v862
        %v2926 = vunpack.c.h.b16 %v862
        %v2927 = vunpack.c.l.b16 %v863
        %v2928 = vunpack.c.h.b16 %v863
        %v2929 = vunpack.c.l.b16 %v864
        %v2930 = vunpack.c.h.b16 %v864
        %v2931 = vunpack.c.l.b16 %v865
        %v2932 = vunpack.c.h.b16 %v865
        %v2933 = vunpack.c.l.b16 %v866
        %v2934 = vunpack.c.h.b16 %v866
        %v2935 = vunpack.c.l.b16 %v867
        %v2936 = vunpack.c.h.b16 %v867
        %v2937 = vunpack.c.l.b16 %v868
        %v2938 = vunpack.c.h.b16 %v868
        %v2939 = vunpack.c.l.b16 %v869
        %v2940 = vunpack.c.h.b16 %v869
        %v2941 = vunpack.c.l.b16 %v870
        %v2942 = vunpack.c.h.b16 %v870
        %v2943 = vunpack.c.l.b16 %v871
        %v2944 = vunpack.c.h.b16 %v871
        %v2945 = vunpack.c.l.b16 %v872
        %v2946 = vunpack.c.h.b16 %v872
        %v2947 = vunpack.c.l.b16 %v873
        %v2948 = vunpack.c.h.b16 %v873
        %v2949 = vunpack.c.l.b16 %v874
        %v2950 = vunpack.c.h.b16 %v874
        %v2951 = vunpack.c.l.b16 %v875
        %v2952 = vunpack.c.h.b16 %v875
        %v2953 = vunpack.c.l.b16 %v876
        %v2954 = vunpack.c.h.b16 %v876
        %v2955 = vunpack.c.l.b16 %v877
        %v2956 = vunpack.c.h.b16 %v877
        %v2957 = vunpack.c.l.b16 %v878
        %v2958 = vunpack.c.h.b16 %v878
        %v2959 = vunpack.c.l.b16 %v879
        %v2960 = vunpack.c.h.b16 %v879
        %v2961 = vunpack.c.l.b16 %v880
        %v2962 = vunpack.c.h.b16 %v880
        %v2963 = vunpack.c.l.b16 %v881
        %v2964 = vunpack.c.h.b16 %v881
        %v2965 = vunpack.c.l.b16 %v882
        %v2966 = vunpack.c.h.b16 %v882
        %v2967 = vunpack.c.l.b16 %v883
        %v2968 = vunpack.c.h.b16 %v883
        %v2969 = vunpack.c.l.b16 %v884
        %v2970 = vunpack.c.h.b16 %v884
        %v2971 = vunpack.c.l.b16 %v885
        %v2972 = vunpack.c.h.b16 %v885
        %v2973 = vunpack.c.l.b16 %v886
        %v2974 = vunpack.c.h.b16 %v886
        %v2975 = vunpack.c.l.b16 %v887
        %v2976 = vunpack.c.h.b16 %v887
        %v2977 = vunpack.c.l.b16 %v888
        %v2978 = vunpack.c.h.b16 %v888
        %v2979 = vunpack.c.l.b16 %v889
        %v2980 = vunpack.c.h.b16 %v889
        %v2981 = vunpack.c.l.b16 %v890
        %v2982 = vunpack.c.h.b16 %v890
        %v2983 = vunpack.c.l.b16 %v891
        %v2984 = vunpack.c.h.b16 %v891
        %v2985 = vunpack.c.l.b16 %v892
        %v2986 = vunpack.c.h.b16 %v892
        %v2987 = vunpack.c.l.b16 %v893
        %v2988 = vunpack.c.h.b16 %v893
        %v2989 = vunpack.c.l.b16 %v894
        %v2990 = vunpack.c.h.b16 %v894
        %v2991 = vunpack.c.l.b16 %v895
        %v2992 = vunpack.c.h.b16 %v895
        %v2993 = vunpack.c.l.b16 %v896
        %v2994 = vunpack.c.h.b16 %v896
        %v2995 = vunpack.c.l.b16 %v897
        %v2996 = vunpack.c.h.b16 %v897
        %v2997 = vunpack.c.l.b16 %v898
        %v2998 = vunpack.c.h.b16 %v898
        %v2999 = vunpack.c.l.b16 %v899
        %v3000 = vunpack.c.h.b16 %v899
        %v3001 = vunpack.c.l.b16 %v900
        %v3002 = vunpack.c.h.b16 %v900
        %v3003 = vunpack.c.l.b16 %v901
        %v3004 = vunpack.c.h.b16 %v901
        %v3005 = vunpack.c.l.b16 %v902
        %v3006 = vunpack.c.h.b16 %v902
        %v3007 = vunpack.c.l.b16 %v903
        %v3008 = vunpack.c.h.b16 %v903
        %v3009 = vunpack.c.l.b16 %v904
        %v3010 = vunpack.c.h.b16 %v904
        %v3011 = vunpack.c.l.b16 %v905
        %v3012 = vunpack.c.h.b16 %v905
        %v3013 = vunpack.c.l.b16 %v906
        %v3014 = vunpack.c.h.b16 %v906
        %v3015 = vunpack.c.l.b16 %v907
        %v3016 = vunpack.c.h.b16 %v907
        %v3017 = vunpack.c.l.b16 %v908
        %v3018 = vunpack.c.h.b16 %v908
        %v3019 = vunpack.c.l.b16 %v909
        %v3020 = vunpack.c.h.b16 %v909
        %v3021 = vunpack.c.l.b16 %v910
        %v3022 = vunpack.c.h.b16 %v910
        %v3023 = vunpack.c.l.b16 %v911
        %v3024 = vunpack.c.h.b16 %v911
        %v3025 = vunpack.c.l.b16 %v912
        %v3026 = vunpack.c.h.b16 %v912
        %v3027 = vunpack.c.l.b16 %v913
        %v3028 = vunpack.c.h.b16 %v913
        %v3029 = vunpack.c.l.b16 %v914
        %v3030 = vunpack.c.h.b16 %v914
        %v3031 = vunpack.c.l.b16 %v915
        %v3032 = vunpack.c.h.b16 %v915
        %v3033 = vunpack.c.l.b16 %v916
        %v3034 = vunpack.c.h.b16 %v916
        %v3035 = vunpack.c.l.b16 %v917
        %v3036 = vunpack.c.h.b16 %v917
        %v3037 = vunpack.c.l.b16 %v918
        %v3038 = vunpack.c.h.b16 %v918
        %v3039 = vunpack.c.l.b16 %v919
        %v3040 = vunpack.c.h.b16 %v919
        %v3041 = vunpack.c.l.b16 %v920
        %v3042 = vunpack.c.h.b16 %v920
        %v3043 = vunpack.c.l.b16 %v921
        %v3044 = vunpack.c.h.b16 %v921
        %v3045 = vunpack.c.l.b16 %v922
        %v3046 = vunpack.c.h.b16 %v922
        %v3047 = vunpack.c.l.b16 %v923
        %v3048 = vunpack.c.h.b16 %v923
        %v3049 = vunpack.c.l.b16 %v924
        %v3050 = vunpack.c.h.b16 %v924
        %v3051 = vunpack.c.l.b16 %v925
        %v3052 = vunpack.c.h.b16 %v925
        %v3053 = vunpack.c.l.b16 %v926
        %v3054 = vunpack.c.h.b16 %v926
        %v3055 = vunpack.c.l.b16 %v927
        %v3056 = vunpack.c.h.b16 %v927
        %v3057 = vunpack.c.l.b16 %v928
        %v3058 = vunpack.c.h.b16 %v928
        %v3059 = vunpack.c.l.b16 %v929
        %v3060 = vunpack.c.h.b16 %v929
        %v3061 = vunpack.c.l.b16 %v930
        %v3062 = vunpack.c.h.b16 %v930
        %v3063 = vunpack.c.l.b16 %v931
        %v3064 = vunpack.c.h.b16 %v931
        %v3065 = vunpack.c.l.b16 %v932
        %v3066 = vunpack.c.h.b16 %v932
        %v3067 = vunpack.c.l.b16 %v933
        %v3068 = vunpack.c.h.b16 %v933
        %v3069 = vunpack.c.l.b16 %v934
        %v3070 = vunpack.c.h.b16 %v934
        %v3071 = vunpack.c.l.b16 %v935
        %v3072 = vunpack.c.h.b16 %v935
        %v3073 = vunpack.c.l.b16 %v936
        %v3074 = vunpack.c.h.b16 %v936
        %v3075 = vunpack.c.l.b16 %v937
        %v3076 = vunpack.c.h.b16 %v937
        %v3077 = vunpack.c.l.b16 %v938
        %v3078 = vunpack.c.h.b16 %v938
        %v3079 = vunpack.c.l.b16 %v939
        %v3080 = vunpack.c.h.b16 %v939
        %v3081 = vunpack.c.l.b16 %v940
        %v3082 = vunpack.c.h.b16 %v940
        %v3083 = vunpack.c.l.b16 %v941
        %v3084 = vunpack.c.h.b16 %v941
        %v3085 = vunpack.c.l.b16 %v942
        %v3086 = vunpack.c.h.b16 %v942
        %v3087 = vunpack.c.l.b16 %v943
        %v3088 = vunpack.c.h.b16 %v943
        %v3089 = vunpack.c.l.b16 %v944
        %v3090 = vunpack.c.h.b16 %v944
        %v3091 = vunpack.c.l.b16 %v945
        %v3092 = vunpack.c.h.b16 %v945
        %v3093 = vunpack.c.l.b16 %v946
        %v3094 = vunpack.c.h.b16 %v946
        %v3095 = vunpack.c.l.b16 %v947
        %v3096 = vunpack.c.h.b16 %v947
        %v3097 = vunpack.c.l.b16 %v948
        %v3098 = vunpack.c.h.b16 %v948
        %v3099 = vunpack.c.l.b16 %v949
        %v3100 = vunpack.c.h.b16 %v949
        %v3101 = vunpack.c.l.b16 %v950
        %v3102 = vunpack.c.h.b16 %v950
        %v3103 = vunpack.c.l.b16 %v951
        %v3104 = vunpack.c.h.b16 %v951
        %v3105 = vunpack.c.l.b16 %v952
        %v3106 = vunpack.c.h.b16 %v952
        %v3107 = vunpack.c.l.b16 %v953
        %v3108 = vunpack.c.h.b16 %v953
        %v3109 = vunpack.c.l.b16 %v954
        %v3110 = vunpack.c.h.b16 %v954
        %v3111 = vunpack.c.l.b16 %v955
        %v3112 = vunpack.c.h.b16 %v955
        %v3113 = vunpack.c.l.b16 %v956
        %v3114 = vunpack.c.h.b16 %v956
        %v3115 = vunpack.c.l.b16 %v957
        %v3116 = vunpack.c.h.b16 %v957
        %v3117 = vunpack.c.l.b16 %v958
        %v3118 = vunpack.c.h.b16 %v958
        %v3119 = vunpack.c.l.b16 %v959
        %v3120 = vunpack.c.h.b16 %v959
        %v3121 = vunpack.c.l.b16 %v960
        %v3122 = vunpack.c.h.b16 %v960
        %v3123 = vunpack.c.l.b16 %v961
        %v3124 = vunpack.c.h.b16 %v961
        %v3125 = vunpack.c.l.b16 %v962
        %v3126 = vunpack.c.h.b16 %v962
        %v3127 = vunpack.c.l.b16 %v963
        %v3128 = vunpack.c.h.b16 %v963
        %v3129 = vunpack.c.l.b16 %v964
        %v3130 = vunpack.c.h.b16 %v964
        %v3131 = vunpack.c.l.b16 %v965
        %v3132 = vunpack.c.h.b16 %v965
        %v3133 = vunpack.c.l.b16 %v966
        %v3134 = vunpack.c.h.b16 %v966
        %v3135 = vunpack.c.l.b16 %v967
        %v3136 = vunpack.c.h.b16 %v967
        %v3137 = vunpack.c.l.b16 %v968
        %v3138 = vunpack.c.h.b16 %v968
        %v3139 = vunpack.c.l.b16 %v969
        %v3140 = vunpack.c.h.b16 %v969
        %v3141 = vunpack.c.l.b16 %v970
        %v3142 = vunpack.c.h.b16 %v970
        %v3143 = vunpack.c.l.b16 %v971
        %v3144 = vunpack.c.h.b16 %v971
        %v3145 = vunpack.c.l.b16 %v972
        %v3146 = vunpack.c.h.b16 %v972
        %v3147 = vunpack.c.l.b16 %v973
        %v3148 = vunpack.c.h.b16 %v973
        %v3149 = vunpack.c.l.b16 %v974
        %v3150 = vunpack.c.h.b16 %v974
        %v3151 = vunpack.c.l.b16 %v975
        %v3152 = vunpack.c.h.b16 %v975
        %v3153 = vunpack.c.l.b16 %v976
        %v3154 = vunpack.c.h.b16 %v976
        %v3155 = vunpack.c.l.b16 %v977
        %v3156 = vunpack.c.h.b16 %v977
        %v3157 = vunpack.c.l.b16 %v978
        %v3158 = vunpack.c.h.b16 %v978
        %v3159 = vunpack.c.l.b16 %v979
        %v3160 = vunpack.c.h.b16 %v979
        %v3161 = vunpack.c.l.b16 %v980
        %v3162 = vunpack.c.h.b16 %v980
        %v3163 = vunpack.c.l.b16 %v981
        %v3164 = vunpack.c.h.b16 %v981
        %v3165 = vunpack.c.l.b16 %v982
        %v3166 = vunpack.c.h.b16 %v982
        %v3167 = vunpack.c.l.b16 %v983
        %v3168 = vunpack.c.h.b16 %v983
        %v3169 = vunpack.c.l.b16 %v984
        %v3170 = vunpack.c.h.b16 %v984
        %v3171 = vunpack.c.l.b16 %v985
        %v3172 = vunpack.c.h.b16 %v985
        %v3173 = vunpack.c.l.b16 %v986
        %v3174 = vunpack.c.h.b16 %v986
        %v3175 = vunpack.c.l.b16 %v987
        %v3176 = vunpack.c.h.b16 %v987
        %v3177 = vunpack.c.l.b16 %v988
        %v3178 = vunpack.c.h.b16 %v988
        %v3179 = vunpack.c.l.b16 %v989
        %v3180 = vunpack.c.h.b16 %v989
        %v3181 = vunpack.c.l.b16 %v990
        %v3182 = vunpack.c.h.b16 %v990
        %v3183 = vunpack.c.l.b16 %v991
        %v3184 = vunpack.c.h.b16 %v991
        %v3185 = vunpack.c.l.b16 %v992
        %v3186 = vunpack.c.h.b16 %v992
        %v3187 = vunpack.c.l.b16 %v993
        %v3188 = vunpack.c.h.b16 %v993
        %v3189 = vunpack.c.l.b16 %v994
        %v3190 = vunpack.c.h.b16 %v994
        %v3191 = vunpack.c.l.b16 %v995
        %v3192 = vunpack.c.h.b16 %v995
        %v3193 = vunpack.c.l.b16 %v996
        %v3194 = vunpack.c.h.b16 %v996
        %v3195 = vunpack.c.l.b16 %v997
        %v3196 = vunpack.c.h.b16 %v997
        %v3197 = vunpack.c.l.b16 %v998
        %v3198 = vunpack.c.h.b16 %v998
        %v3199 = vunpack.c.l.b16 %v999
        %v3200 = vunpack.c.h.b16 %v999
        %v3201 = vunpack.c.l.b16 %v1000
        %v3202 = vunpack.c.h.b16 %v1000
        %v3203 = vunpack.c.l.b16 %v1001
        %v3204 = vunpack.c.h.b16 %v1001
        %v3205 = vunpack.c.l.b16 %v1002
        %v3206 = vunpack.c.h.b16 %v1002
        %v3207 = vunpack.c.l.b16 %v1003
        %v3208 = vunpack.c.h.b16 %v1003
        %v3209 = vunpack.c.l.b16 %v1004
        %v3210 = vunpack.c.h.b16 %v1004
        %v3211 = vunpack.c.l.b16 %v1005
        %v3212 = vunpack.c.h.b16 %v1005
        %v3213 = vunpack.c.l.b16 %v1006
        %v3214 = vunpack.c.h.b16 %v1006
        %v3215 = vunpack.c.l.b16 %v1007
        %v3216 = vunpack.c.h.b16 %v1007
        %v3217 = vunpack.c.l.b16 %v1008
        %v3218 = vunpack.c.h.b16 %v1008
        %v3219 = vunpack.c.l.b16 %v1009
        %v3220 = vunpack.c.h.b16 %v1009
        %v3221 = vunpack.c.l.b16 %v1010
        %v3222 = vunpack.c.h.b16 %v1010
        %v3223 = vunpack.c.l.b16 %v1011
        %v3224 = vunpack.c.h.b16 %v1011
        %v3225 = vunpack.c.l.b16 %v1012
        %v3226 = vunpack.c.h.b16 %v1012
        %v3227 = vunpack.c.l.b16 %v1013
        %v3228 = vunpack.c.h.b16 %v1013
        %v3229 = vunpack.c.l.b16 %v1014
        %v3230 = vunpack.c.h.b16 %v1014
        %v3231 = vunpack.c.l.b16 %v1015
        %v3232 = vunpack.c.h.b16 %v1015
        %v3233 = vunpack.c.l.b16 %v1016
        %v3234 = vunpack.c.h.b16 %v1016
        %v3235 = vunpack.c.l.b16 %v1017
        %v3236 = vunpack.c.h.b16 %v1017
        %v3237 = vunpack.c.l.b16 %v1018
        %v3238 = vunpack.c.h.b16 %v1018
        %v3239 = vunpack.c.l.b16 %v1019
        %v3240 = vunpack.c.h.b16 %v1019
        %v3241 = vunpack.c.l.b16 %v1020
        %v3242 = vunpack.c.h.b16 %v1020
        %v3243 = vunpack.c.l.b16 %v1021
        %v3244 = vunpack.c.h.b16 %v1021
        %v3245 = vunpack.c.l.b16 %v1022
        %v3246 = vunpack.c.h.b16 %v1022
        %v3247 = vunpack.c.l.b16 %v1023
        %v3248 = vunpack.c.h.b16 %v1023
        %v3249 = vunpack.c.l.b16 %v1024
        %v3250 = vunpack.c.h.b16 %v1024
        %v3251 = vunpack.c.l.b16 %v1025
        %v3252 = vunpack.c.h.b16 %v1025
        %v3253 = vunpack.c.l.b16 %v1026
        %v3254 = vunpack.c.h.b16 %v1026
        %v3255 = vunpack.c.l.b16 %v1027
        %v3256 = vunpack.c.h.b16 %v1027
        %v3257 = vunpack.c.l.b16 %v1028
        %v3258 = vunpack.c.h.b16 %v1028
        %v3259 = vunpack.c.l.b16 %v1029
        %v3260 = vunpack.c.h.b16 %v1029
        %v3261 = vunpack.c.l.b16 %v1030
        %v3262 = vunpack.c.h.b16 %v1030
        %v3263 = vunpack.c.l.b16 %v1031
        %v3264 = vunpack.c.h.b16 %v1031
        %v3265 = vunpack.c.l.b16 %v1032
        %v3266 = vunpack.c.h.b16 %v1032
        %v3267 = vunpack.c.l.b16 %v1033
        %v3268 = vunpack.c.h.b16 %v1033
        %v3269 = vunpack.c.l.b16 %v1034
        %v3270 = vunpack.c.h.b16 %v1034
        %v3271 = vunpack.c.l.b16 %v1035
        %v3272 = vunpack.c.h.b16 %v1035
        %v3273 = vunpack.c.l.b16 %v1036
        %v3274 = vunpack.c.h.b16 %v1036
        %v3275 = vunpack.c.l.b16 %v1037
        %v3276 = vunpack.c.h.b16 %v1037
        %v3277 = vunpack.c.l.b16 %v1038
        %v3278 = vunpack.c.h.b16 %v1038
        %v3279 = vunpack.c.l.b16 %v1039
        %v3280 = vunpack.c.h.b16 %v1039
        %v3281 = vunpack.c.l.b16 %v1040
        %v3282 = vunpack.c.h.b16 %v1040
        %v3283 = vunpack.c.l.b16 %v1041
        %v3284 = vunpack.c.h.b16 %v1041
        %v3285 = vunpack.c.l.b16 %v1042
        %v3286 = vunpack.c.h.b16 %v1042
        %v3287 = vunpack.c.l.b16 %v1043
        %v3288 = vunpack.c.h.b16 %v1043
        %v3289 = vunpack.c.l.b16 %v1044
        %v3290 = vunpack.c.h.b16 %v1044
        %v3291 = vunpack.c.l.b16 %v1045
        %v3292 = vunpack.c.h.b16 %v1045
        %v3293 = vunpack.c.l.b16 %v1046
        %v3294 = vunpack.c.h.b16 %v1046
        %v3295 = vunpack.c.l.b16 %v1047
        %v3296 = vunpack.c.h.b16 %v1047
        %v3297 = vunpack.c.l.b16 %v1048
        %v3298 = vunpack.c.h.b16 %v1048
        %v3299 = vunpack.c.l.b16 %v1049
        %v3300 = vunpack.c.h.b16 %v1049
        %v3301 = vunpack.c.l.b16 %v1050
        %v3302 = vunpack.c.h.b16 %v1050
        %v3303 = vunpack.c.l.b16 %v1051
        %v3304 = vunpack.c.h.b16 %v1051
        %v3305 = vunpack.c.l.b16 %v1052
        %v3306 = vunpack.c.h.b16 %v1052
        %v3307 = vunpack.c.l.b16 %v1053
        %v3308 = vunpack.c.h.b16 %v1053
        %v3309 = vunpack.c.l.b16 %v1054
        %v3310 = vunpack.c.h.b16 %v1054
        %v3311 = vunpack.c.l.b16 %v1055
        %v3312 = vunpack.c.h.b16 %v1055
        %v3313 = vunpack.c.l.b16 %v1056
        %v3314 = vunpack.c.h.b16 %v1056
        %v3315 = vunpack.c.l.b16 %v1057
        %v3316 = vunpack.c.h.b16 %v1057
        %v3317 = vunpack.c.l.b16 %v1058
        %v3318 = vunpack.c.h.b16 %v1058
        %v3319 = vunpack.c.l.b16 %v1059
        %v3320 = vunpack.c.h.b16 %v1059
        %v3321 = vunpack.c.l.b16 %v1060
        %v3322 = vunpack.c.h.b16 %v1060
        %v3323 = vunpack.c.l.b16 %v1061
        %v3324 = vunpack.c.h.b16 %v1061
        %v3325 = vunpack.c.l.b16 %v1062
        %v3326 = vunpack.c.h.b16 %v1062
        %v3327 = vunpack.c.l.b16 %v1063
        %v3328 = vunpack.c.h.b16 %v1063
        %v3329 = vunpack.c.l.b16 %v1064
        %v3330 = vunpack.c.h.b16 %v1064
        %v3331 = vunpack.c.l.b16 %v1065
        %v3332 = vunpack.c.h.b16 %v1065
        %v3333 = vunpack.c.l.b16 %v1066
        %v3334 = vunpack.c.h.b16 %v1066
        %v3335 = vunpack.c.l.b16 %v1067
        %v3336 = vunpack.c.h.b16 %v1067
        %v3337 = vunpack.c.l.b16 %v1068
        %v3338 = vunpack.c.h.b16 %v1068
        %v3339 = vunpack.c.l.b16 %v1069
        %v3340 = vunpack.c.h.b16 %v1069
        %v3341 = vunpack.c.l.b16 %v1070
        %v3342 = vunpack.c.h.b16 %v1070
        %v3343 = vunpack.c.l.b16 %v1071
        %v3344 = vunpack.c.h.b16 %v1071
        %v3345 = vunpack.c.l.b16 %v1072
        %v3346 = vunpack.c.h.b16 %v1072
        %v3347 = vunpack.c.l.b16 %v1073
        %v3348 = vunpack.c.h.b16 %v1073
        %v3349 = vunpack.c.l.b16 %v1074
        %v3350 = vunpack.c.h.b16 %v1074
        %v3351 = vunpack.c.l.b16 %v1075
        %v3352 = vunpack.c.h.b16 %v1075
        %v3353 = vunpack.c.l.b16 %v1076
        %v3354 = vunpack.c.h.b16 %v1076
        %v3355 = vunpack.c.l.b16 %v1077
        %v3356 = vunpack.c.h.b16 %v1077
        %v3357 = vunpack.c.l.b16 %v1078
        %v3358 = vunpack.c.h.b16 %v1078
        %v3359 = vunpack.c.l.b16 %v1079
        %v3360 = vunpack.c.h.b16 %v1079
        %v3361 = vunpack.c.l.b16 %v1080
        %v3362 = vunpack.c.h.b16 %v1080
        %v3363 = vunpack.c.l.b16 %v1081
        %v3364 = vunpack.c.h.b16 %v1081
        %v3365 = vunpack.c.l.b16 %v1082
        %v3366 = vunpack.c.h.b16 %v1082
        %v3367 = vunpack.c.l.b16 %v1083
        %v3368 = vunpack.c.h.b16 %v1083
        %v3369 = vunpack.c.l.b16 %v1084
        %v3370 = vunpack.c.h.b16 %v1084
        %v3371 = vunpack.c.l.b16 %v1085
        %v3372 = vunpack.c.h.b16 %v1085
        %v3373 = vunpack.c.l.b16 %v1086
        %v3374 = vunpack.c.h.b16 %v1086
        %v3375 = vunpack.c.l.b16 %v1087
        %v3376 = vunpack.c.h.b16 %v1087
        %v3377 = vunpack.c.l.b16 %v1088
        %v3378 = vunpack.c.h.b16 %v1088
        %v3379 = vunpack.c.l.b16 %v1089
        %v3380 = vunpack.c.h.b16 %v1089
        %v3381 = vunpack.c.l.b16 %v1090
        %v3382 = vunpack.c.h.b16 %v1090
        %v3383 = vunpack.c.l.b16 %v1091
        %v3384 = vunpack.c.h.b16 %v1091
        %v3385 = vunpack.c.l.b16 %v1092
        %v3386 = vunpack.c.h.b16 %v1092
        %v3387 = vunpack.c.l.b16 %v1093
        %v3388 = vunpack.c.h.b16 %v1093
        %v3389 = vunpack.c.l.b16 %v1094
        %v3390 = vunpack.c.h.b16 %v1094
        %v3391 = vunpack.c.l.b16 %v1095
        %v3392 = vunpack.c.h.b16 %v1095
        %v3393 = vunpack.c.l.b16 %v1096
        %v3394 = vunpack.c.h.b16 %v1096
        %v3395 = vunpack.c.l.b16 %v1097
        %v3396 = vunpack.c.h.b16 %v1097
        %v3397 = vunpack.c.l.b16 %v1098
        %v3398 = vunpack.c.h.b16 %v1098
        %v3399 = vunpack.c.l.b16 %v1099
        %v3400 = vunpack.c.h.b16 %v1099
        %v3401 = vunpack.c.l.b16 %v1100
        %v3402 = vunpack.c.h.b16 %v1100
        %v3403 = vunpack.c.l.b16 %v1101
        %v3404 = vunpack.c.h.b16 %v1101
        %v3405 = vunpack.c.l.b16 %v1102
        %v3406 = vunpack.c.h.b16 %v1102
        %v3407 = vunpack.c.l.b16 %v1103
        %v3408 = vunpack.c.h.b16 %v1103
        %v3409 = vunpack.c.l.b16 %v1104
        %v3410 = vunpack.c.h.b16 %v1104
        %v3411 = vunpack.c.l.b16 %v1105
        %v3412 = vunpack.c.h.b16 %v1105
        %v3413 = vunpack.c.l.b16 %v1106
        %v3414 = vunpack.c.h.b16 %v1106
        %v3415 = vunpack.c.l.b16 %v1107
        %v3416 = vunpack.c.h.b16 %v1107
        %v3417 = vunpack.c.l.b16 %v1108
        %v3418 = vunpack.c.h.b16 %v1108
        %v3419 = vunpack.c.l.b16 %v1109
        %v3420 = vunpack.c.h.b16 %v1109
        %v3421 = vunpack.c.l.b16 %v1110
        %v3422 = vunpack.c.h.b16 %v1110
        %v3423 = vunpack.c.l.b16 %v1111
        %v3424 = vunpack.c.h.b16 %v1111
        %v3425 = vunpack.c.l.b16 %v1112
        %v3426 = vunpack.c.h.b16 %v1112
        %v3427 = vunpack.c.l.b16 %v1113
        %v3428 = vunpack.c.h.b16 %v1113
        %v3429 = vunpack.c.l.b16 %v1114
        %v3430 = vunpack.c.h.b16 %v1114
        %v3431 = vunpack.c.l.b16 %v1115
        %v3432 = vunpack.c.h.b16 %v1115
        %v3433 = vunpack.c.l.b16 %v1116
        %v3434 = vunpack.c.h.b16 %v1116
        %v3435 = vunpack.c.l.b16 %v1117
        %v3436 = vunpack.c.h.b16 %v1117
        %v3437 = vunpack.c.l.b16 %v1118
        %v3438 = vunpack.c.h.b16 %v1118
        %v3439 = vunpack.c.l.b16 %v1119
        %v3440 = vunpack.c.h.b16 %v1119
        %v3441 = vunpack.c.l.b16 %v1120
        %v3442 = vunpack.c.h.b16 %v1120
        %v3443 = vunpack.c.l.b16 %v1121
        %v3444 = vunpack.c.h.b16 %v1121
        %v3445 = vunpack.c.l.b16 %v1122
        %v3446 = vunpack.c.h.b16 %v1122
        %v3447 = vunpack.c.l.b16 %v1123
        %v3448 = vunpack.c.h.b16 %v1123
        %v3449 = vunpack.c.l.b16 %v1124
        %v3450 = vunpack.c.h.b16 %v1124
        %v3451 = vpack.c.b16 %v1919, %v1915
        %v3452 = vpack.c.b16 %v1920, %v1916
        %v3453 = vpack.c.b16 %v1921, %v1917
        %v3454 = vpack.c.b16 %v1922, %v1918
        %v3455 = vpack.c.b16 %v1927, %v1923
        %v3456 = vpack.c.b16 %v1928, %v1924
        %v3457 = vpack.c.b16 %v1929, %v1925
        %v3458 = vpack.c.b16 %v1930, %v1926
        %v3459 = vpack.c.b16 %v1935, %v1931
        %v3460 = vpack.c.b16 %v1936, %v1932
        %v3461 = vpack.c.b16 %v1937, %v1933
        %v3462 = vpack.c.b16 %v1938, %v1934
        %v3463 = vpack.c.b16 %v1943, %v1939
        %v3464 = vpack.c.b16 %v1944, %v1940
        %v3465 = vpack.c.b16 %v1945, %v1941
        %v3466 = vpack.c.b16 %v1946, %v1942
        %v3467 = vpack.c.b16 %v1951, %v1947
        %v3468 = vpack.c.b16 %v1952, %v1948
        %v3469 = vpack.c.b16 %v1953, %v1949
        %v3470 = vpack.c.b16 %v1954, %v1950
        %v3471 = vpack.c.b16 %v1959, %v1955
        %v3472 = vpack.c.b16 %v1960, %v1956
        %v3473 = vpack.c.b16 %v1961, %v1957
        %v3474 = vpack.c.b16 %v1962, %v1958
        %v3475 = vpack.c.b16 %v1967, %v1963
        %v3476 = vpack.c.b16 %v1968, %v1964
        %v3477 = vpack.c.b16 %v1969, %v1965
        %v3478 = vpack.c.b16 %v1970, %v1966
        %v3479 = vpack.c.b16 %v1975, %v1971
        %v3480 = vpack.c.b16 %v1976, %v1972
        %v3481 = vpack.c.b16 %v1977, %v1973
        %v3482 = vpack.c.b16 %v1978, %v1974
        %v3483 = vpack.c.b16 %v1983, %v1979
        %v3484 = vpack.c.b16 %v1984, %v1980
        %v3485 = vpack.c.b16 %v1985, %v1981
        %v3486 = vpack.c.b16 %v1986, %v1982
        %v3487 = vpack.c.b16 %v1991, %v1987
        %v3488 = vpack.c.b16 %v1992, %v1988
        %v3489 = vpack.c.b16 %v1993, %v1989
        %v3490 = vpack.c.b16 %v1994, %v1990
        %v3491 = vpack.c.b16 %v1999, %v1995
        %v3492 = vpack.c.b16 %v2000, %v1996
        %v3493 = vpack.c.b16 %v2001, %v1997
        %v3494 = vpack.c.b16 %v2002, %v1998
        %v3495 = vpack.c.b16 %v2007, %v2003
        %v3496 = vpack.c.b16 %v2008, %v2004
        %v3497 = vpack.c.b16 %v2009, %v2005
        %v3498 = vpack.c.b16 %v2010, %v2006
        %v3499 = vpack.c.b16 %v2015, %v2011
        %v3500 = vpack.c.b16 %v2016, %v2012
        %v3501 = vpack.c.b16 %v2017, %v2013
        %v3502 = vpack.c.b16 %v2018, %v2014
        %v3503 = vpack.c.b16 %v2023, %v2019
        %v3504 = vpack.c.b16 %v2024, %v2020
        %v3505 = vpack.c.b16 %v2025, %v2021
        %v3506 = vpack.c.b16 %v2026, %v2022
        %v3507 = vpack.c.b16 %v2031, %v2027
        %v3508 = vpack.c.b16 %v2032, %v2028
        %v3509 = vpack.c.b16 %v2033, %v2029
        %v3510 = vpack.c.b16 %v2034, %v2030
        %v3511 = vpack.c.b16 %v2039, %v2035
        %v3512 = vpack.c.b16 %v2040, %v2036
        %v3513 = vpack.c.b16 %v2041, %v2037
        %v3514 = vpack.c.b16 %v2042, %v2038
        %v3515 = vpack.c.b16 %v2047, %v2043
        %v3516 = vpack.c.b16 %v2048, %v2044
        %v3517 = vpack.c.b16 %v2049, %v2045
        %v3518 = vpack.c.b16 %v2050, %v2046
        %v3519 = vpack.c.b16 %v2055, %v2051
        %v3520 = vpack.c.b16 %v2056, %v2052
        %v3521 = vpack.c.b16 %v2057, %v2053
        %v3522 = vpack.c.b16 %v2058, %v2054
        %v3523 = vpack.c.b16 %v2063, %v2059
        %v3524 = vpack.c.b16 %v2064, %v2060
        %v3525 = vpack.c.b16 %v2065, %v2061
        %v3526 = vpack.c.b16 %v2066, %v2062
        %v3527 = vpack.c.b16 %v2071, %v2067
        %v3528 = vpack.c.b16 %v2072, %v2068
        %v3529 = vpack.c.b16 %v2073, %v2069
        %v3530 = vpack.c.b16 %v2074, %v2070
        %v3531 = vpack.c.b16 %v2079, %v2075
        %v3532 = vpack.c.b16 %v2080, %v2076
        %v3533 = vpack.c.b16 %v2081, %v2077
        %v3534 = vpack.c.b16 %v2082, %v2078
        %v3535 = vpack.c.b16 %v2087, %v2083
        %v3536 = vpack.c.b16 %v2088, %v2084
        %v3537 = vpack.c.b16 %v2089, %v2085
        %v3538 = vpack.c.b16 %v2090, %v2086
        %v3539 = vpack.c.b16 %v2095, %v2091
        %v3540 = vpack.c.b16 %v2096, %v2092
        %v3541 = vpack.c.b16 %v2097, %v2093
        %v3542 = vpack.c.b16 %v2098, %v2094
        %v3543 = vpack.c.b16 %v2103, %v2099
        %v3544 = vpack.c.b16 %v2104, %v2100
        %v3545 = vpack.c.b16 %v2105, %v2101
        %v3546 = vpack.c.b16 %v2106, %v2102
        %v3547 = vpack.c.b16 %v2111, %v2107
        %v3548 = vpack.c.b16 %v2112, %v2108
        %v3549 = vpack.c.b16 %v2113, %v2109
        %v3550 = vpack.c.b16 %v2114, %v2110
        %v3551 = vpack.c.b16 %v2119, %v2115
        %v3552 = vpack.c.b16 %v2120, %v2116
        %v3553 = vpack.c.b16 %v2121, %v2117
        %v3554 = vpack.c.b16 %v2122, %v2118
        %v3555 = vpack.c.b16 %v2127, %v2123
        %v3556 = vpack.c.b16 %v2128, %v2124
        %v3557 = vpack.c.b16 %v2129, %v2125
        %v3558 = vpack.c.b16 %v2130, %v2126
        %v3559 = vpack.c.b16 %v2135, %v2131
        %v3560 = vpack.c.b16 %v2136, %v2132
        %v3561 = vpack.c.b16 %v2137, %v2133
        %v3562 = vpack.c.b16 %v2138, %v2134
        %v3563 = vpack.c.b16 %v2143, %v2139
        %v3564 = vpack.c.b16 %v2144, %v2140
        %v3565 = vpack.c.b16 %v2145, %v2141
        %v3566 = vpack.c.b16 %v2146, %v2142
        %v3567 = vpack.c.b16 %v2151, %v2147
        %v3568 = vpack.c.b16 %v2152, %v2148
        %v3569 = vpack.c.b16 %v2153, %v2149
        %v3570 = vpack.c.b16 %v2154, %v2150
        %v3571 = vpack.c.b16 %v2159, %v2155
        %v3572 = vpack.c.b16 %v2160, %v2156
        %v3573 = vpack.c.b16 %v2161, %v2157
        %v3574 = vpack.c.b16 %v2162, %v2158
        %v3575 = vpack.c.b16 %v2167, %v2163
        %v3576 = vpack.c.b16 %v2168, %v2164
        %v3577 = vpack.c.b16 %v2169, %v2165
        %v3578 = vpack.c.b16 %v2170, %v2166
        %v3579 = vpack.c.b16 %v2175, %v2171
        %v3580 = vpack.c.b16 %v2176, %v2172
        %v3581 = vpack.c.b16 %v2177, %v2173
        %v3582 = vpack.c.b16 %v2178, %v2174
        %v3583 = vpack.c.b16 %v2183, %v2179
        %v3584 = vpack.c.b16 %v2184, %v2180
        %v3585 = vpack.c.b16 %v2185, %v2181
        %v3586 = vpack.c.b16 %v2186, %v2182
        %v3587 = vpack.c.b16 %v2191, %v2187
        %v3588 = vpack.c.b16 %v2192, %v2188
        %v3589 = vpack.c.b16 %v2193, %v2189
        %v3590 = vpack.c.b16 %v2194, %v2190
        %v3591 = vpack.c.b16 %v2199, %v2195
        %v3592 = vpack.c.b16 %v2200, %v2196
        %v3593 = vpack.c.b16 %v2201, %v2197
        %v3594 = vpack.c.b16 %v2202, %v2198
        %v3595 = vpack.c.b16 %v2207, %v2203
        %v3596 = vpack.c.b16 %v2208, %v2204
        %v3597 = vpack.c.b16 %v2209, %v2205
        %v3598 = vpack.c.b16 %v2210, %v2206
        %v3599 = vpack.c.b16 %v2215, %v2211
        %v3600 = vpack.c.b16 %v2216, %v2212
        %v3601 = vpack.c.b16 %v2217, %v2213
        %v3602 = vpack.c.b16 %v2218, %v2214
        %v3603 = vpack.c.b16 %v2223, %v2219
        %v3604 = vpack.c.b16 %v2224, %v2220
        %v3605 = vpack.c.b16 %v2225, %v2221
        %v3606 = vpack.c.b16 %v2226, %v2222
        %v3607 = vpack.c.b16 %v2231, %v2227
        %v3608 = vpack.c.b16 %v2232, %v2228
        %v3609 = vpack.c.b16 %v2233, %v2229
        %v3610 = vpack.c.b16 %v2234, %v2230
        %v3611 = vpack.c.b16 %v2239, %v2235
        %v3612 = vpack.c.b16 %v2240, %v2236
        %v3613 = vpack.c.b16 %v2241, %v2237
        %v3614 = vpack.c.b16 %v2242, %v2238
        %v3615 = vpack.c.b16 %v2247, %v2243
        %v3616 = vpack.c.b16 %v2248, %v2244
        %v3617 = vpack.c.b16 %v2249, %v2245
        %v3618 = vpack.c.b16 %v2250, %v2246
        %v3619 = vpack.c.b16 %v2255, %v2251
        %v3620 = vpack.c.b16 %v2256, %v2252
        %v3621 = vpack.c.b16 %v2257, %v2253
        %v3622 = vpack.c.b16 %v2258, %v2254
        %v3623 = vpack.c.b16 %v2263, %v2259
        %v3624 = vpack.c.b16 %v2264, %v2260
        %v3625 = vpack.c.b16 %v2265, %v2261
        %v3626 = vpack.c.b16 %v2266, %v2262
        %v3627 = vpack.c.b16 %v2271, %v2267
        %v3628 = vpack.c.b16 %v2272, %v2268
        %v3629 = vpack.c.b16 %v2273, %v2269
        %v3630 = vpack.c.b16 %v2274, %v2270
        %v3631 = vpack.c.b16 %v2279, %v2275
        %v3632 = vpack.c.b16 %v2280, %v2276
        %v3633 = vpack.c.b16 %v2281, %v2277
        %v3634 = vpack.c.b16 %v2282, %v2278
        %v3635 = vpack.c.b16 %v2287, %v2283
        %v3636 = vpack.c.b16 %v2288, %v2284
        %v3637 = vpack.c.b16 %v2289, %v2285
        %v3638 = vpack.c.b16 %v2290, %v2286
        %v3639 = vpack.c.b16 %v2295, %v2291
        %v3640 = vpack.c.b16 %v2296, %v2292
        %v3641 = vpack.c.b16 %v2297, %v2293
        %v3642 = vpack.c.b16 %v2298, %v2294
        %v3643 = vpack.c.b16 %v2303, %v2299
        %v3644 = vpack.c.b16 %v2304, %v2300
        %v3645 = vpack.c.b16 %v2305, %v2301
        %v3646 = vpack.c.b16 %v2306, %v2302
        %v3647 = vpack.c.b16 %v2311, %v2307
        %v3648 = vpack.c.b16 %v2312, %v2308
        %v3649 = vpack.c.b16 %v2313, %v2309
        %v3650 = vpack.c.b16 %v2314, %v2310
        %v3651 = vpack.c.b16 %v2319, %v2315
        %v3652 = vpack.c.b16 %v2320, %v2316
        %v3653 = vpack.c.b16 %v2321, %v2317
        %v3654 = vpack.c.b16 %v2322, %v2318
        %v3655 = vpack.c.b16 %v2327, %v2323
        %v3656 = vpack.c.b16 %v2328, %v2324
        %v3657 = vpack.c.b16 %v2329, %v2325
        %v3658 = vpack.c.b16 %v2330, %v2326
        %v3659 = vpack.c.b16 %v2335, %v2331
        %v3660 = vpack.c.b16 %v2336, %v2332
        %v3661 = vpack.c.b16 %v2337, %v2333
        %v3662 = vpack.c.b16 %v2338, %v2334
        %v3663 = vpack.c.b16 %v2343, %v2339
        %v3664 = vpack.c.b16 %v2344, %v2340
        %v3665 = vpack.c.b16 %v2345, %v2341
        %v3666 = vpack.c.b16 %v2346, %v2342
        %v3667 = vpack.c.b16 %v2351, %v2347
        %v3668 = vpack.c.b16 %v2352, %v2348
        %v3669 = vpack.c.b16 %v2353, %v2349
        %v3670 = vpack.c.b16 %v2354, %v2350
        %v3671 = vpack.c.b16 %v2359, %v2355
        %v3672 = vpack.c.b16 %v2360, %v2356
        %v3673 = vpack.c.b16 %v2361, %v2357
        %v3674 = vpack.c.b16 %v2362, %v2358
        %v3675 = vpack.c.b16 %v2367, %v2363
        %v3676 = vpack.c.b16 %v2368, %v2364
        %v3677 = vpack.c.b16 %v2369, %v2365
        %v3678 = vpack.c.b16 %v2370, %v2366
        %v3679 = vpack.c.b16 %v2375, %v2371
        %v3680 = vpack.c.b16 %v2376, %v2372
        %v3681 = vpack.c.b16 %v2377, %v2373
        %v3682 = vpack.c.b16 %v2378, %v2374
        %v3683 = vpack.c.b16 %v2383, %v2379
        %v3684 = vpack.c.b16 %v2384, %v2380
        %v3685 = vpack.c.b16 %v2385, %v2381
        %v3686 = vpack.c.b16 %v2386, %v2382
        %v3687 = vpack.c.b16 %v2391, %v2387
        %v3688 = vpack.c.b16 %v2392, %v2388
        %v3689 = vpack.c.b16 %v2393, %v2389
        %v3690 = vpack.c.b16 %v2394, %v2390
        %v3691 = vpack.c.b16 %v2399, %v2395
        %v3692 = vpack.c.b16 %v2400, %v2396
        %v3693 = vpack.c.b16 %v2401, %v2397
        %v3694 = vpack.c.b16 %v2402, %v2398
        %v3695 = vpack.c.b16 %v2407, %v2403
        %v3696 = vpack.c.b16 %v2408, %v2404
        %v3697 = vpack.c.b16 %v2409, %v2405
        %v3698 = vpack.c.b16 %v2410, %v2406
        %v3699 = vpack.c.b16 %v2415, %v2411
        %v3700 = vpack.c.b16 %v2416, %v2412
        %v3701 = vpack.c.b16 %v2417, %v2413
        %v3702 = vpack.c.b16 %v2418, %v2414
        %v3703 = vpack.c.b16 %v2423, %v2419
        %v3704 = vpack.c.b16 %v2424, %v2420
        %v3705 = vpack.c.b16 %v2425, %v2421
        %v3706 = vpack.c.b16 %v2426, %v2422
        %v3707 = vpack.c.b16 %v2431, %v2427
        %v3708 = vpack.c.b16 %v2432, %v2428
        %v3709 = vpack.c.b16 %v2433, %v2429
        %v3710 = vpack.c.b16 %v2434, %v2430
        %v3711 = vpack.c.b16 %v2439, %v2435
        %v3712 = vpack.c.b16 %v2440, %v2436
        %v3713 = vpack.c.b16 %v2441, %v2437
        %v3714 = vpack.c.b16 %v2442, %v2438
        %v3715 = vpack.c.b16 %v2447, %v2443
        %v3716 = vpack.c.b16 %v2448, %v2444
        %v3717 = vpack.c.b16 %v2449, %v2445
        %v3718 = vpack.c.b16 %v2450, %v2446
        %v3719 = vpack.c.b16 %v2455, %v2451
        %v3720 = vpack.c.b16 %v2456, %v2452
        %v3721 = vpack.c.b16 %v2457, %v2453
        %v3722 = vpack.c.b16 %v2458, %v2454
        %v3723 = vpack.c.b16 %v2463, %v2459
        %v3724 = vpack.c.b16 %v2464, %v2460
        %v3725 = vpack.c.b16 %v2465, %v2461
        %v3726 = vpack.c.b16 %v2466, %v2462
        %v3727 = vpack.c.b16 %v2471, %v2467
        %v3728 = vpack.c.b16 %v2472, %v2468
        %v3729 = vpack.c.b16 %v2473, %v2469
        %v3730 = vpack.c.b16 %v2474, %v2470
        %v3731 = vpack.c.b16 %v2479, %v2475
        %v3732 = vpack.c.b16 %v2480, %v2476
        %v3733 = vpack.c.b16 %v2481, %v2477
        %v3734 = vpack.c.b16 %v2482, %v2478
        %v3735 = vpack.c.b16 %v2487, %v2483
        %v3736 = vpack.c.b16 %v2488, %v2484
        %v3737 = vpack.c.b16 %v2489, %v2485
        %v3738 = vpack.c.b16 %v2490, %v2486
        %v3739 = vpack.c.b16 %v2495, %v2491
        %v3740 = vpack.c.b16 %v2496, %v2492
        %v3741 = vpack.c.b16 %v2497, %v2493
        %v3742 = vpack.c.b16 %v2498, %v2494
        %v3743 = vpack.c.b16 %v2503, %v2499
        %v3744 = vpack.c.b16 %v2504, %v2500
        %v3745 = vpack.c.b16 %v2505, %v2501
        %v3746 = vpack.c.b16 %v2506, %v2502
        %v3747 = vpack.c.b16 %v2511, %v2507
        %v3748 = vpack.c.b16 %v2512, %v2508
        %v3749 = vpack.c.b16 %v2513, %v2509
        %v3750 = vpack.c.b16 %v2514, %v2510
        %v3751 = vpack.c.b16 %v2519, %v2515
        %v3752 = vpack.c.b16 %v2520, %v2516
        %v3753 = vpack.c.b16 %v2521, %v2517
        %v3754 = vpack.c.b16 %v2522, %v2518
        %v3755 = vpack.c.b16 %v2527, %v2523
        %v3756 = vpack.c.b16 %v2528, %v2524
        %v3757 = vpack.c.b16 %v2529, %v2525
        %v3758 = vpack.c.b16 %v2530, %v2526
        %v3759 = vpack.c.b16 %v2535, %v2531
        %v3760 = vpack.c.b16 %v2536, %v2532
        %v3761 = vpack.c.b16 %v2537, %v2533
        %v3762 = vpack.c.b16 %v2538, %v2534
        %v3763 = vpack.c.b16 %v2543, %v2539
        %v3764 = vpack.c.b16 %v2544, %v2540
        %v3765 = vpack.c.b16 %v2545, %v2541
        %v3766 = vpack.c.b16 %v2546, %v2542
        %v3767 = vpack.c.b16 %v2551, %v2547
        %v3768 = vpack.c.b16 %v2552, %v2548
        %v3769 = vpack.c.b16 %v2553, %v2549
        %v3770 = vpack.c.b16 %v2554, %v2550
        %v3771 = vpack.c.b16 %v2559, %v2555
        %v3772 = vpack.c.b16 %v2560, %v2556
        %v3773 = vpack.c.b16 %v2561, %v2557
        %v3774 = vpack.c.b16 %v2562, %v2558
        %v3775 = vpack.c.b16 %v2567, %v2563
        %v3776 = vpack.c.b16 %v2568, %v2564
        %v3777 = vpack.c.b16 %v2569, %v2565
        %v3778 = vpack.c.b16 %v2570, %v2566
        %v3779 = vpack.c.b16 %v2575, %v2571
        %v3780 = vpack.c.b16 %v2576, %v2572
        %v3781 = vpack.c.b16 %v2577, %v2573
        %v3782 = vpack.c.b16 %v2578, %v2574
        %v3783 = vpack.c.b16 %v2583, %v2579
        %v3784 = vpack.c.b16 %v2584, %v2580
        %v3785 = vpack.c.b16 %v2585, %v2581
        %v3786 = vpack.c.b16 %v2586, %v2582
        %v3787 = vpack.c.b16 %v2591, %v2587
        %v3788 = vpack.c.b16 %v2592, %v2588
        %v3789 = vpack.c.b16 %v2593, %v2589
        %v3790 = vpack.c.b16 %v2594, %v2590
        %v3791 = vpack.c.b16 %v2599, %v2595
        %v3792 = vpack.c.b16 %v2600, %v2596
        %v3793 = vpack.c.b16 %v2601, %v2597
        %v3794 = vpack.c.b16 %v2602, %v2598
        %v3795 = vpack.c.b16 %v2607, %v2603
        %v3796 = vpack.c.b16 %v2608, %v2604
        %v3797 = vpack.c.b16 %v2609, %v2605
        %v3798 = vpack.c.b16 %v2610, %v2606
        %v3799 = vpack.c.b16 %v2615, %v2611
        %v3800 = vpack.c.b16 %v2616, %v2612
        %v3801 = vpack.c.b16 %v2617, %v2613
        %v3802 = vpack.c.b16 %v2618, %v2614
        %v3803 = vpack.c.b16 %v2623, %v2619
        %v3804 = vpack.c.b16 %v2624, %v2620
        %v3805 = vpack.c.b16 %v2625, %v2621
        %v3806 = vpack.c.b16 %v2626, %v2622
        %v3807 = vpack.c.b16 %v2631, %v2627
        %v3808 = vpack.c.b16 %v2632, %v2628
        %v3809 = vpack.c.b16 %v2633, %v2629
        %v3810 = vpack.c.b16 %v2634, %v2630
        %v3811 = vpack.c.b16 %v2639, %v2635
        %v3812 = vpack.c.b16 %v2640, %v2636
        %v3813 = vpack.c.b16 %v2641, %v2637
        %v3814 = vpack.c.b16 %v2642, %v2638
        %v3815 = vpack.c.b16 %v2647, %v2643
        %v3816 = vpack.c.b16 %v2648, %v2644
        %v3817 = vpack.c.b16 %v2649, %v2645
        %v3818 = vpack.c.b16 %v2650, %v2646
        %v3819 = vpack.c.b16 %v2655, %v2651
        %v3820 = vpack.c.b16 %v2656, %v2652
        %v3821 = vpack.c.b16 %v2657, %v2653
        %v3822 = vpack.c.b16 %v2658, %v2654
        %v3823 = vpack.c.b16 %v2663, %v2659
        %v3824 = vpack.c.b16 %v2664, %v2660
        %v3825 = vpack.c.b16 %v2665, %v2661
        %v3826 = vpack.c.b16 %v2666, %v2662
        %v3827 = vpack.c.b16 %v2671, %v2667
        %v3828 = vpack.c.b16 %v2672, %v2668
        %v3829 = vpack.c.b16 %v2673, %v2669
        %v3830 = vpack.c.b16 %v2674, %v2670
        %v3831 = vpack.c.b16 %v2679, %v2675
        %v3832 = vpack.c.b16 %v2680, %v2676
        %v3833 = vpack.c.b16 %v2681, %v2677
        %v3834 = vpack.c.b16 %v2682, %v2678
        %v3835 = vpack.c.b16 %v2687, %v2683
        %v3836 = vpack.c.b16 %v2688, %v2684
        %v3837 = vpack.c.b16 %v2689, %v2685
        %v3838 = vpack.c.b16 %v2690, %v2686
        %v3839 = vpack.c.b16 %v2695, %v2691
        %v3840 = vpack.c.b16 %v2696, %v2692
        %v3841 = vpack.c.b16 %v2697, %v2693
        %v3842 = vpack.c.b16 %v2698, %v2694
        %v3843 = vpack.c.b16 %v2703, %v2699
        %v3844 = vpack.c.b16 %v2704, %v2700
        %v3845 = vpack.c.b16 %v2705, %v2701
        %v3846 = vpack.c.b16 %v2706, %v2702
        %v3847 = vpack.c.b16 %v2711, %v2707
        %v3848 = vpack.c.b16 %v2712, %v2708
        %v3849 = vpack.c.b16 %v2713, %v2709
        %v3850 = vpack.c.b16 %v2714, %v2710
        %v3851 = vpack.c.b16 %v2719, %v2715
        %v3852 = vpack.c.b16 %v2720, %v2716
        %v3853 = vpack.c.b16 %v2721, %v2717
        %v3854 = vpack.c.b16 %v2722, %v2718
        %v3855 = vpack.c.b16 %v2727, %v2723
        %v3856 = vpack.c.b16 %v2728, %v2724
        %v3857 = vpack.c.b16 %v2729, %v2725
        %v3858 = vpack.c.b16 %v2730, %v2726
        %v3859 = vpack.c.b16 %v2735, %v2731
        %v3860 = vpack.c.b16 %v2736, %v2732
        %v3861 = vpack.c.b16 %v2737, %v2733
        %v3862 = vpack.c.b16 %v2738, %v2734
        %v3863 = vpack.c.b16 %v2743, %v2739
        %v3864 = vpack.c.b16 %v2744, %v2740
        %v3865 = vpack.c.b16 %v2745, %v2741
        %v3866 = vpack.c.b16 %v2746, %v2742
        %v3867 = vpack.c.b16 %v2751, %v2747
        %v3868 = vpack.c.b16 %v2752, %v2748
        %v3869 = vpack.c.b16 %v2753, %v2749
        %v3870 = vpack.c.b16 %v2754, %v2750
        %v3871 = vpack.c.b16 %v2759, %v2755
        %v3872 = vpack.c.b16 %v2760, %v2756
        %v3873 = vpack.c.b16 %v2761, %v2757
        %v3874 = vpack.c.b16 %v2762, %v2758
        %v3875 = vpack.c.b16 %v2767, %v2763
        %v3876 = vpack.c.b16 %v2768, %v2764
        %v3877 = vpack.c.b16 %v2769, %v2765
        %v3878 = vpack.c.b16 %v2770, %v2766
        %v3879 = vpack.c.b16 %v2775, %v2771
        %v3880 = vpack.c.b16 %v2776, %v2772
        %v3881 = vpack.c.b16 %v2777, %v2773
        %v3882 = vpack.c.b16 %v2778, %v2774
        %v3883 = vpack.c.b16 %v2783, %v2779
        %v3884 = vpack.c.b16 %v2784, %v2780
        %v3885 = vpack.c.b16 %v2785, %v2781
        %v3886 = vpack.c.b16 %v2786, %v2782
        %v3887 = vpack.c.b16 %v2791, %v2787
        %v3888 = vpack.c.b16 %v2792, %v2788
        %v3889 = vpack.c.b16 %v2793, %v2789
        %v3890 = vpack.c.b16 %v2794, %v2790
        %v3891 = vpack.c.b16 %v2799, %v2795
        %v3892 = vpack.c.b16 %v2800, %v2796
        %v3893 = vpack.c.b16 %v2801, %v2797
        %v3894 = vpack.c.b16 %v2802, %v2798
        %v3895 = vpack.c.b16 %v2807, %v2803
        %v3896 = vpack.c.b16 %v2808, %v2804
        %v3897 = vpack.c.b16 %v2809, %v2805
        %v3898 = vpack.c.b16 %v2810, %v2806
        %v3899 = vpack.c.b16 %v2815, %v2811
        %v3900 = vpack.c.b16 %v2816, %v2812
        %v3901 = vpack.c.b16 %v2817, %v2813
        %v3902 = vpack.c.b16 %v2818, %v2814
        %v3903 = vpack.c.b16 %v2823, %v2819
        %v3904 = vpack.c.b16 %v2824, %v2820
        %v3905 = vpack.c.b16 %v2825, %v2821
        %v3906 = vpack.c.b16 %v2826, %v2822
        %v3907 = vpack.c.b16 %v2831, %v2827
        %v3908 = vpack.c.b16 %v2832, %v2828
        %v3909 = vpack.c.b16 %v2833, %v2829
        %v3910 = vpack.c.b16 %v2834, %v2830
        %v3911 = vpack.c.b16 %v2839, %v2835
        %v3912 = vpack.c.b16 %v2840, %v2836
        %v3913 = vpack.c.b16 %v2841, %v2837
        %v3914 = vpack.c.b16 %v2842, %v2838
        %v3915 = vpack.c.b16 %v2847, %v2843
        %v3916 = vpack.c.b16 %v2848, %v2844
        %v3917 = vpack.c.b16 %v2849, %v2845
        %v3918 = vpack.c.b16 %v2850, %v2846
        %v3919 = vpack.c.b16 %v2855, %v2851
        %v3920 = vpack.c.b16 %v2856, %v2852
        %v3921 = vpack.c.b16 %v2857, %v2853
        %v3922 = vpack.c.b16 %v2858, %v2854
        %v3923 = vpack.c.b16 %v2863, %v2859
        %v3924 = vpack.c.b16 %v2864, %v2860
        %v3925 = vpack.c.b16 %v2865, %v2861
        %v3926 = vpack.c.b16 %v2866, %v2862
        %v3927 = vpack.c.b16 %v2871, %v2867
        %v3928 = vpack.c.b16 %v2872, %v2868
        %v3929 = vpack.c.b16 %v2873, %v2869
        %v3930 = vpack.c.b16 %v2874, %v2870
        %v3931 = vpack.c.b16 %v2879, %v2875
        %v3932 = vpack.c.b16 %v2880, %v2876
        %v3933 = vpack.c.b16 %v2881, %v2877
        %v3934 = vpack.c.b16 %v2882, %v2878
        %v3935 = vpack.c.b16 %v2887, %v2883
        %v3936 = vpack.c.b16 %v2888, %v2884
        %v3937 = vpack.c.b16 %v2889, %v2885
        %v3938 = vpack.c.b16 %v2890, %v2886
        %v3939 = vpack.c.b16 %v2895, %v2891
        %v3940 = vpack.c.b16 %v2896, %v2892
        %v3941 = vpack.c.b16 %v2897, %v2893
        %v3942 = vpack.c.b16 %v2898, %v2894
        %v3943 = vpack.c.b16 %v2903, %v2899
        %v3944 = vpack.c.b16 %v2904, %v2900
        %v3945 = vpack.c.b16 %v2905, %v2901
        %v3946 = vpack.c.b16 %v2906, %v2902
        %v3947 = vpack.c.b16 %v2911, %v2907
        %v3948 = vpack.c.b16 %v2912, %v2908
        %v3949 = vpack.c.b16 %v2913, %v2909
        %v3950 = vpack.c.b16 %v2914, %v2910
        %v3951 = vpack.c.b16 %v2919, %v2915
        %v3952 = vpack.c.b16 %v2920, %v2916
        %v3953 = vpack.c.b16 %v2921, %v2917
        %v3954 = vpack.c.b16 %v2922, %v2918
        %v3955 = vpack.c.b16 %v2927, %v2923
        %v3956 = vpack.c.b16 %v2928, %v2924
        %v3957 = vpack.c.b16 %v2929, %v2925
        %v3958 = vpack.c.b16 %v2930, %v2926
        %v3959 = vpack.c.b16 %v2935, %v2931
        %v3960 = vpack.c.b16 %v2936, %v2932
        %v3961 = vpack.c.b16 %v2937, %v2933
        %v3962 = vpack.c.b16 %v2938, %v2934
        %v3963 = vpack.c.b16 %v2943, %v2939
        %v3964 = vpack.c.b16 %v2944, %v2940
        %v3965 = vpack.c.b16 %v2945, %v2941
        %v3966 = vpack.c.b16 %v2946, %v2942
        %v3967 = vpack.c.b16 %v2951, %v2947
        %v3968 = vpack.c.b16 %v2952, %v2948
        %v3969 = vpack.c.b16 %v2953, %v2949
        %v3970 = vpack.c.b16 %v2954, %v2950
        %v3971 = vpack.c.b16 %v2959, %v2955
        %v3972 = vpack.c.b16 %v2960, %v2956
        %v3973 = vpack.c.b16 %v2961, %v2957
        %v3974 = vpack.c.b16 %v2962, %v2958
        %v3975 = vpack.c.b16 %v2967, %v2963
        %v3976 = vpack.c.b16 %v2968, %v2964
        %v3977 = vpack.c.b16 %v2969, %v2965
        %v3978 = vpack.c.b16 %v2970, %v2966
        %v3979 = vpack.c.b16 %v2975, %v2971
        %v3980 = vpack.c.b16 %v2976, %v2972
        %v3981 = vpack.c.b16 %v2977, %v2973
        %v3982 = vpack.c.b16 %v2978, %v2974
        %v3983 = vpack.c.b16 %v2983, %v2979
        %v3984 = vpack.c.b16 %v2984, %v2980
        %v3985 = vpack.c.b16 %v2985, %v2981
        %v3986 = vpack.c.b16 %v2986, %v2982
        %v3987 = vpack.c.b16 %v2991, %v2987
        %v3988 = vpack.c.b16 %v2992, %v2988
        %v3989 = vpack.c.b16 %v2993, %v2989
        %v3990 = vpack.c.b16 %v2994, %v2990
        %v3991 = vpack.c.b16 %v2999, %v2995
        %v3992 = vpack.c.b16 %v3000, %v2996
        %v3993 = vpack.c.b16 %v3001, %v2997
        %v3994 = vpack.c.b16 %v3002, %v2998
        %v3995 = vpack.c.b16 %v3007, %v3003
        %v3996 = vpack.c.b16 %v3008, %v3004
        %v3997 = vpack.c.b16 %v3009, %v3005
        %v3998 = vpack.c.b16 %v3010, %v3006
        %v3999 = vpack.c.b16 %v3015, %v3011
        %v4000 = vpack.c.b16 %v3016, %v3012
        %v4001 = vpack.c.b16 %v3017, %v3013
        %v4002 = vpack.c.b16 %v3018, %v3014
        %v4003 = vpack.c.b16 %v3023, %v3019
        %v4004 = vpack.c.b16 %v3024, %v3020
        %v4005 = vpack.c.b16 %v3025, %v3021
        %v4006 = vpack.c.b16 %v3026, %v3022
        %v4007 = vpack.c.b16 %v3031, %v3027
        %v4008 = vpack.c.b16 %v3032, %v3028
        %v4009 = vpack.c.b16 %v3033, %v3029
        %v4010 = vpack.c.b16 %v3034, %v3030
        %v4011 = vpack.c.b16 %v3039, %v3035
        %v4012 = vpack.c.b16 %v3040, %v3036
        %v4013 = vpack.c.b16 %v3041, %v3037
        %v4014 = vpack.c.b16 %v3042, %v3038
        %v4015 = vpack.c.b16 %v3047, %v3043
        %v4016 = vpack.c.b16 %v3048, %v3044
        %v4017 = vpack.c.b16 %v3049, %v3045
        %v4018 = vpack.c.b16 %v3050, %v3046
        %v4019 = vpack.c.b16 %v3055, %v3051
        %v4020 = vpack.c.b16 %v3056, %v3052
        %v4021 = vpack.c.b16 %v3057, %v3053
        %v4022 = vpack.c.b16 %v3058, %v3054
        %v4023 = vpack.c.b16 %v3063, %v3059
        %v4024 = vpack.c.b16 %v3064, %v3060
        %v4025 = vpack.c.b16 %v3065, %v3061
        %v4026 = vpack.c.b16 %v3066, %v3062
        %v4027 = vpack.c.b16 %v3071, %v3067
        %v4028 = vpack.c.b16 %v3072, %v3068
        %v4029 = vpack.c.b16 %v3073, %v3069
        %v4030 = vpack.c.b16 %v3074, %v3070
        %v4031 = vpack.c.b16 %v3079, %v3075
        %v4032 = vpack.c.b16 %v3080, %v3076
        %v4033 = vpack.c.b16 %v3081, %v3077
        %v4034 = vpack.c.b16 %v3082, %v3078
        %v4035 = vpack.c.b16 %v3087, %v3083
        %v4036 = vpack.c.b16 %v3088, %v3084
        %v4037 = vpack.c.b16 %v3089, %v3085
        %v4038 = vpack.c.b16 %v3090, %v3086
        %v4039 = vpack.c.b16 %v3095, %v3091
        %v4040 = vpack.c.b16 %v3096, %v3092
        %v4041 = vpack.c.b16 %v3097, %v3093
        %v4042 = vpack.c.b16 %v3098, %v3094
        %v4043 = vpack.c.b16 %v3103, %v3099
        %v4044 = vpack.c.b16 %v3104, %v3100
        %v4045 = vpack.c.b16 %v3105, %v3101
        %v4046 = vpack.c.b16 %v3106, %v3102
        %v4047 = vpack.c.b16 %v3111, %v3107
        %v4048 = vpack.c.b16 %v3112, %v3108
        %v4049 = vpack.c.b16 %v3113, %v3109
        %v4050 = vpack.c.b16 %v3114, %v3110
        %v4051 = vpack.c.b16 %v3119, %v3115
        %v4052 = vpack.c.b16 %v3120, %v3116
        %v4053 = vpack.c.b16 %v3121, %v3117
        %v4054 = vpack.c.b16 %v3122, %v3118
        %v4055 = vpack.c.b16 %v3127, %v3123
        %v4056 = vpack.c.b16 %v3128, %v3124
        %v4057 = vpack.c.b16 %v3129, %v3125
        %v4058 = vpack.c.b16 %v3130, %v3126
        %v4059 = vpack.c.b16 %v3135, %v3131
        %v4060 = vpack.c.b16 %v3136, %v3132
        %v4061 = vpack.c.b16 %v3137, %v3133
        %v4062 = vpack.c.b16 %v3138, %v3134
        %v4063 = vpack.c.b16 %v3143, %v3139
        %v4064 = vpack.c.b16 %v3144, %v3140
        %v4065 = vpack.c.b16 %v3145, %v3141
        %v4066 = vpack.c.b16 %v3146, %v3142
        %v4067 = vpack.c.b16 %v3151, %v3147
        %v4068 = vpack.c.b16 %v3152, %v3148
        %v4069 = vpack.c.b16 %v3153, %v3149
        %v4070 = vpack.c.b16 %v3154, %v3150
        %v4071 = vpack.c.b16 %v3159, %v3155
        %v4072 = vpack.c.b16 %v3160, %v3156
        %v4073 = vpack.c.b16 %v3161, %v3157
        %v4074 = vpack.c.b16 %v3162, %v3158
        %v4075 = vpack.c.b16 %v3167, %v3163
        %v4076 = vpack.c.b16 %v3168, %v3164
        %v4077 = vpack.c.b16 %v3169, %v3165
        %v4078 = vpack.c.b16 %v3170, %v3166
        %v4079 = vpack.c.b16 %v3175, %v3171
        %v4080 = vpack.c.b16 %v3176, %v3172
        %v4081 = vpack.c.b16 %v3177, %v3173
        %v4082 = vpack.c.b16 %v3178, %v3174
        %v4083 = vpack.c.b16 %v3183, %v3179
        %v4084 = vpack.c.b16 %v3184, %v3180
        %v4085 = vpack.c.b16 %v3185, %v3181
        %v4086 = vpack.c.b16 %v3186, %v3182
        %v4087 = vpack.c.b16 %v3191, %v3187
        %v4088 = vpack.c.b16 %v3192, %v3188
        %v4089 = vpack.c.b16 %v3193, %v3189
        %v4090 = vpack.c.b16 %v3194, %v3190
        %v4091 = vpack.c.b16 %v3199, %v3195
        %v4092 = vpack.c.b16 %v3200, %v3196
        %v4093 = vpack.c.b16 %v3201, %v3197
        %v4094 = vpack.c.b16 %v3202, %v3198
        %v4095 = vpack.c.b16 %v3207, %v3203
        %v4096 = vpack.c.b16 %v3208, %v3204
        %v4097 = vpack.c.b16 %v3209, %v3205
        %v4098 = vpack.c.b16 %v3210, %v3206
        %v4099 = vpack.c.b16 %v3215, %v3211
        %v4100 = vpack.c.b16 %v3216, %v3212
        %v4101 = vpack.c.b16 %v3217, %v3213
        %v4102 = vpack.c.b16 %v3218, %v3214
        %v4103 = vpack.c.b16 %v3223, %v3219
        %v4104 = vpack.c.b16 %v3224, %v3220
        %v4105 = vpack.c.b16 %v3225, %v3221
        %v4106 = vpack.c.b16 %v3226, %v3222
        %v4107 = vpack.c.b16 %v3231, %v3227
        %v4108 = vpack.c.b16 %v3232, %v3228
        %v4109 = vpack.c.b16 %v3233, %v3229
        %v4110 = vpack.c.b16 %v3234, %v3230
        %v4111 = vpack.c.b16 %v3239, %v3235
        %v4112 = vpack.c.b16 %v3240, %v3236
        %v4113 = vpack.c.b16 %v3241, %v3237
        %v4114 = vpack.c.b16 %v3242, %v3238
        %v4115 = vpack.c.b16 %v3247, %v3243
        %v4116 = vpack.c.b16 %v3248, %v3244
        %v4117 = vpack.c.b16 %v3249, %v3245
        %v4118 = vpack.c.b16 %v3250, %v3246
        %v4119 = vpack.c.b16 %v3255, %v3251
        %v4120 = vpack.c.b16 %v3256, %v3252
        %v4121 = vpack.c.b16 %v3257, %v3253
        %v4122 = vpack.c.b16 %v3258, %v3254
        %v4123 = vpack.c.b16 %v3263, %v3259
        %v4124 = vpack.c.b16 %v3264, %v3260
        %v4125 = vpack.c.b16 %v3265, %v3261
        %v4126 = vpack.c.b16 %v3266, %v3262
        %v4127 = vpack.c.b16 %v3271, %v3267
        %v4128 = vpack.c.b16 %v3272, %v3268
        %v4129 = vpack.c.b16 %v3273, %v3269
        %v4130 = vpack.c.b16 %v3274, %v3270
        %v4131 = vpack.c.b16 %v3279, %v3275
        %v4132 = vpack.c.b16 %v3280, %v3276
        %v4133 = vpack.c.b16 %v3281, %v3277
        %v4134 = vpack.c.b16 %v3282, %v3278
        %v4135 = vpack.c.b16 %v3287, %v3283
        %v4136 = vpack.c.b16 %v3288, %v3284
        %v4137 = vpack.c.b16 %v3289, %v3285
        %v4138 = vpack.c.b16 %v3290, %v3286
        %v4139 = vpack.c.b16 %v3295, %v3291
        %v4140 = vpack.c.b16 %v3296, %v3292
        %v4141 = vpack.c.b16 %v3297, %v3293
        %v4142 = vpack.c.b16 %v3298, %v3294
        %v4143 = vpack.c.b16 %v3303, %v3299
        %v4144 = vpack.c.b16 %v3304, %v3300
        %v4145 = vpack.c.b16 %v3305, %v3301
        %v4146 = vpack.c.b16 %v3306, %v3302
        %v4147 = vpack.c.b16 %v3311, %v3307
        %v4148 = vpack.c.b16 %v3312, %v3308
        %v4149 = vpack.c.b16 %v3313, %v3309
        %v4150 = vpack.c.b16 %v3314, %v3310
        %v4151 = vpack.c.b16 %v3319, %v3315
        %v4152 = vpack.c.b16 %v3320, %v3316
        %v4153 = vpack.c.b16 %v3321, %v3317
        %v4154 = vpack.c.b16 %v3322, %v3318
        %v4155 = vpack.c.b16 %v3327, %v3323
        %v4156 = vpack.c.b16 %v3328, %v3324
        %v4157 = vpack.c.b16 %v3329, %v3325
        %v4158 = vpack.c.b16 %v3330, %v3326
        %v4159 = vpack.c.b16 %v3335, %v3331
        %v4160 = vpack.c.b16 %v3336, %v3332
        %v4161 = vpack.c.b16 %v3337, %v3333
        %v4162 = vpack.c.b16 %v3338, %v3334
        %v4163 = vpack.c.b16 %v3343, %v3339
        %v4164 = vpack.c.b16 %v3344, %v3340
        %v4165 = vpack.c.b16 %v3345, %v3341
        %v4166 = vpack.c.b16 %v3346, %v3342
        %v4167 = vpack.c.b16 %v3351, %v3347
        %v4168 = vpack.c.b16 %v3352, %v3348
        %v4169 = vpack.c.b16 %v3353, %v3349
        %v4170 = vpack.c.b16 %v3354, %v3350
        %v4171 = vpack.c.b16 %v3359, %v3355
        %v4172 = vpack.c.b16 %v3360, %v3356
        %v4173 = vpack.c.b16 %v3361, %v3357
        %v4174 = vpack.c.b16 %v3362, %v3358
        %v4175 = vpack.c.b16 %v3367, %v3363
        %v4176 = vpack.c.b16 %v3368, %v3364
        %v4177 = vpack.c.b16 %v3369, %v3365
        %v4178 = vpack.c.b16 %v3370, %v3366
        %v4179 = vpack.c.b16 %v3375, %v3371
        %v4180 = vpack.c.b16 %v3376, %v3372
        %v4181 = vpack.c.b16 %v3377, %v3373
        %v4182 = vpack.c.b16 %v3378, %v3374
        %v4183 = vpack.c.b16 %v3383, %v3379
        %v4184 = vpack.c.b16 %v3384, %v3380
        %v4185 = vpack.c.b16 %v3385, %v3381
        %v4186 = vpack.c.b16 %v3386, %v3382
        %v4187 = vpack.c.b16 %v3391, %v3387
        %v4188 = vpack.c.b16 %v3392, %v3388
        %v4189 = vpack.c.b16 %v3393, %v3389
        %v4190 = vpack.c.b16 %v3394, %v3390
        %v4191 = vpack.c.b16 %v3399, %v3395
        %v4192 = vpack.c.b16 %v3400, %v3396
        %v4193 = vpack.c.b16 %v3401, %v3397
        %v4194 = vpack.c.b16 %v3402, %v3398
        %v4195 = vpack.c.b16 %v3407, %v3403
        %v4196 = vpack.c.b16 %v3408, %v3404
        %v4197 = vpack.c.b16 %v3409, %v3405
        %v4198 = vpack.c.b16 %v3410, %v3406
        %v4199 = vpack.c.b16 %v3415, %v3411
        %v4200 = vpack.c.b16 %v3416, %v3412
        %v4201 = vpack.c.b16 %v3417, %v3413
        %v4202 = vpack.c.b16 %v3418, %v3414
        %v4203 = vpack.c.b16 %v3423, %v3419
        %v4204 = vpack.c.b16 %v3424, %v3420
        %v4205 = vpack.c.b16 %v3425, %v3421
        %v4206 = vpack.c.b16 %v3426, %v3422
        %v4207 = vpack.c.b16 %v3431, %v3427
        %v4208 = vpack.c.b16 %v3432, %v3428
        %v4209 = vpack.c.b16 %v3433, %v3429
        %v4210 = vpack.c.b16 %v3434, %v3430
        %v4211 = vpack.c.b16 %v3439, %v3435
        %v4212 = vpack.c.b16 %v3440, %v3436
        %v4213 = vpack.c.b16 %v3441, %v3437
        %v4214 = vpack.c.b16 %v3442, %v3438
        %v4215 = vpack.c.b16 %v3447, %v3443
        %v4216 = vpack.c.b16 %v3448, %v3444
        %v4217 = vpack.c.b16 %v3449, %v3445
        %v4218 = vpack.c.b16 %v3450, %v3446
        %4987 = vmatprep.subr.bf16.mxu0 %v3452
        %4988 = vmatpush1.bf16.msra.mxu0 %v3451
        %4989 = vmatprep.subr.bf16.mxu0 %v3456
        %4990 = vmatpush1.bf16.msra.mxu0 %v3455
        %4991 = vmatprep.subr.bf16.mxu0 %v3460
        %4992 = vmatpush1.bf16.msra.mxu0 %v3459
        %4993 = vmatprep.subr.bf16.mxu0 %v3464
        %4994 = vmatpush1.bf16.msra.mxu0 %v3463
        %4995 = vmatprep.subr.bf16.mxu0 %v3468
        %4996 = vmatpush1.bf16.msra.mxu0 %v3467
        %4997 = vmatprep.subr.bf16.mxu0 %v3472
        %4998 = vmatpush1.bf16.msra.mxu0 %v3471
        %4999 = vmatprep.subr.bf16.mxu0 %v3476
        %5000 = vmatpush1.bf16.msra.mxu0 %v3475
        %5001 = vmatprep.subr.bf16.mxu0 %v3480
        %5002 = vmatpush1.bf16.msra.mxu0 %v3479
        %5003 = vmatprep.subr.bf16.mxu0 %v3484
        %5004 = vmatpush1.bf16.msra.mxu0 %v3483
        %5005 = vmatprep.subr.bf16.mxu0 %v3488
        %5006 = vmatpush1.bf16.msra.mxu0 %v3487
        %5007 = vmatprep.subr.bf16.mxu0 %v3492
        %5008 = vmatpush1.bf16.msra.mxu0 %v3491
        %5009 = vmatprep.subr.bf16.mxu0 %v3496
        %5010 = vmatpush1.bf16.msra.mxu0 %v3495
        %5011 = vmatprep.subr.bf16.mxu0 %v3500
        %5012 = vmatpush1.bf16.msra.mxu0 %v3499
        %5013 = vmatprep.subr.bf16.mxu0 %v3504
        %5014 = vmatpush1.bf16.msra.mxu0 %v3503
        %5015 = vmatprep.subr.bf16.mxu0 %v3508
        %5016 = vmatpush1.bf16.msra.mxu0 %v3507
        %5017 = vmatprep.subr.bf16.mxu0 %v3512
        %5018 = vmatpush1.bf16.msra.mxu0 %v3511
        %5019 = vmatprep.mubr.bf16.mxu0 %v334
        %5020 = vmatmul.mubr.bf16.gmra.mrb[0].mxu0 %v333
        %v5021 = vpop.f32.mrb[0].mxu0
        %v5022 = vadd.f32 %v1130, %v5021
        %v5023 = vpop.f32.mrb[0].mxu0
        %v5024 = vadd.f32 %v1134, %v5023
        %v5025 = vpop.f32.mrb[0].mxu0
        %v5026 = vadd.f32 %v1130, %v5025
        %v5027 = vpop.f32.mrb[0].mxu0
        %v5028 = vadd.f32 %v1134, %v5027
        %5029 = vdwg.mxu0
        %5030 = vmatprep.subr.bf16.mxu0 %v3516
        %5031 = vmatpush1.bf16.msra.mxu0 %v3515
        %5032 = vmatprep.subr.bf16.mxu0 %v3520
        %5033 = vmatpush1.bf16.msra.mxu0 %v3519
        %5034 = vmatprep.subr.bf16.mxu0 %v3524
        %5035 = vmatpush1.bf16.msra.mxu0 %v3523
        %5036 = vmatprep.subr.bf16.mxu0 %v3528
        %5037 = vmatpush1.bf16.msra.mxu0 %v3527
        %5038 = vmatprep.subr.bf16.mxu0 %v3532
        %5039 = vmatpush1.bf16.msra.mxu0 %v3531
        %5040 = vmatprep.subr.bf16.mxu0 %v3536
        %5041 = vmatpush1.bf16.msra.mxu0 %v3535
        %5042 = vmatprep.subr.bf16.mxu0 %v3540
        %5043 = vmatpush1.bf16.msra.mxu0 %v3539
        %5044 = vmatprep.subr.bf16.mxu0 %v3544
        %5045 = vmatpush1.bf16.msra.mxu0 %v3543
        %5046 = vmatprep.subr.bf16.mxu0 %v3548
        %5047 = vmatpush1.bf16.msra.mxu0 %v3547
        %5048 = vmatprep.subr.bf16.mxu0 %v3552
        %5049 = vmatpush1.bf16.msra.mxu0 %v3551
        %5050 = vmatprep.subr.bf16.mxu0 %v3556
        %5051 = vmatpush1.bf16.msra.mxu0 %v3555
        %5052 = vmatprep.subr.bf16.mxu0 %v3560
        %5053 = vmatpush1.bf16.msra.mxu0 %v3559
        %5054 = vmatprep.subr.bf16.mxu0 %v3564
        %5055 = vmatpush1.bf16.msra.mxu0 %v3563
        %5056 = vmatprep.subr.bf16.mxu0 %v3568
        %5057 = vmatpush1.bf16.msra.mxu0 %v3567
        %5058 = vmatprep.subr.bf16.mxu0 %v3572
        %5059 = vmatpush1.bf16.msra.mxu0 %v3571
        %5060 = vmatprep.subr.bf16.mxu0 %v3576
        %5061 = vmatpush1.bf16.msra.mxu0 %v3575
        %5062 = vmatprep.mubr.bf16.mxu0 %v336
        %5063 = vmatmul.mubr.bf16.gmra.mrb[0].mxu0 %v335
        %v5064 = vpop.f32.mrb[0].mxu0
        %v5065 = vadd.f32 %v5022, %v5064
        %v5066 = vpop.f32.mrb[0].mxu0
        %v5067 = vadd.f32 %v5024, %v5066
        %v5068 = vpop.f32.mrb[0].mxu0
        %v5069 = vadd.f32 %v5026, %v5068
        %v5070 = vpop.f32.mrb[0].mxu0
        %v5071 = vadd.f32 %v5028, %v5070
        %5072 = vdwg.mxu0
        %5073 = vmatprep.subr.bf16.mxu0 %v3580
        %5074 = vmatpush1.bf16.msra.mxu0 %v3579
        %5075 = vmatprep.subr.bf16.mxu0 %v3584
        %5076 = vmatpush1.bf16.msra.mxu0 %v3583
        %5077 = vmatprep.subr.bf16.mxu0 %v3588
        %5078 = vmatpush1.bf16.msra.mxu0 %v3587
        %5079 = vmatprep.subr.bf16.mxu0 %v3592
        %5080 = vmatpush1.bf16.msra.mxu0 %v3591
        %5081 = vmatprep.subr.bf16.mxu0 %v3596
        %5082 = vmatpush1.bf16.msra.mxu0 %v3595
        %5083 = vmatprep.subr.bf16.mxu0 %v3600
        %5084 = vmatpush1.bf16.msra.mxu0 %v3599
        %5085 = vmatprep.subr.bf16.mxu0 %v3604
        %5086 = vmatpush1.bf16.msra.mxu0 %v3603
        %5087 = vmatprep.subr.bf16.mxu0 %v3608
        %5088 = vmatpush1.bf16.msra.mxu0 %v3607
        %5089 = vmatprep.subr.bf16.mxu0 %v3612
        %5090 = vmatpush1.bf16.msra.mxu0 %v3611
        %5091 = vmatprep.subr.bf16.mxu0 %v3616
        %5092 = vmatpush1.bf16.msra.mxu0 %v3615
        %5093 = vmatprep.subr.bf16.mxu0 %v3620
        %5094 = vmatpush1.bf16.msra.mxu0 %v3619
        %5095 = vmatprep.subr.bf16.mxu0 %v3624
        %5096 = vmatpush1.bf16.msra.mxu0 %v3623
        %5097 = vmatprep.subr.bf16.mxu0 %v3628
        %5098 = vmatpush1.bf16.msra.mxu0 %v3627
        %5099 = vmatprep.subr.bf16.mxu0 %v3632
        %5100 = vmatpush1.bf16.msra.mxu0 %v3631
        %5101 = vmatprep.subr.bf16.mxu0 %v3636
        %5102 = vmatpush1.bf16.msra.mxu0 %v3635
        %5103 = vmatprep.subr.bf16.mxu0 %v3640
        %5104 = vmatpush1.bf16.msra.mxu0 %v3639
        %5105 = vmatprep.mubr.bf16.mxu0 %v338
        %5106 = vmatmul.mubr.bf16.gmra.mrb[0].mxu0 %v337
        %v5107 = vpop.f32.mrb[0].mxu0
        %v5108 = vadd.f32 %v5065, %v5107
        %v5109 = vpop.f32.mrb[0].mxu0
        %v5110 = vadd.f32 %v5067, %v5109
        %v5111 = vpop.f32.mrb[0].mxu0
        %v5112 = vadd.f32 %v5069, %v5111
        %v5113 = vpop.f32.mrb[0].mxu0
        %v5114 = vadd.f32 %v5071, %v5113
        %5115 = vdwg.mxu0
        %5116 = vmatprep.subr.bf16.mxu0 %v3644
        %5117 = vmatpush1.bf16.msra.mxu0 %v3643
        %5118 = vmatprep.subr.bf16.mxu0 %v3648
        %5119 = vmatpush1.bf16.msra.mxu0 %v3647
        %5120 = vmatprep.subr.bf16.mxu0 %v3652
        %5121 = vmatpush1.bf16.msra.mxu0 %v3651
        %5122 = vmatprep.subr.bf16.mxu0 %v3656
        %5123 = vmatpush1.bf16.msra.mxu0 %v3655
        %5124 = vmatprep.subr.bf16.mxu0 %v3660
        %5125 = vmatpush1.bf16.msra.mxu0 %v3659
        %5126 = vmatprep.subr.bf16.mxu0 %v3664
        %5127 = vmatpush1.bf16.msra.mxu0 %v3663
        %5128 = vmatprep.subr.bf16.mxu0 %v3668
        %5129 = vmatpush1.bf16.msra.mxu0 %v3667
        %5130 = vmatprep.subr.bf16.mxu0 %v3672
        %5131 = vmatpush1.bf16.msra.mxu0 %v3671
        %5132 = vmatprep.subr.bf16.mxu0 %v3676
        %5133 = vmatpush1.bf16.msra.mxu0 %v3675
        %5134 = vmatprep.subr.bf16.mxu0 %v3680
        %5135 = vmatpush1.bf16.msra.mxu0 %v3679
        %5136 = vmatprep.subr.bf16.mxu0 %v3684
        %5137 = vmatpush1.bf16.msra.mxu0 %v3683
        %5138 = vmatprep.subr.bf16.mxu0 %v3688
        %5139 = vmatpush1.bf16.msra.mxu0 %v3687
        %5140 = vmatprep.subr.bf16.mxu0 %v3692
        %5141 = vmatpush1.bf16.msra.mxu0 %v3691
        %5142 = vmatprep.subr.bf16.mxu0 %v3696
        %5143 = vmatpush1.bf16.msra.mxu0 %v3695
        %5144 = vmatprep.subr.bf16.mxu0 %v3700
        %5145 = vmatpush1.bf16.msra.mxu0 %v3699
        %5146 = vmatprep.subr.bf16.mxu0 %v3704
        %5147 = vmatpush1.bf16.msra.mxu0 %v3703
        %5148 = vmatprep.mubr.bf16.mxu0 %v340
        %5149 = vmatmul.mubr.bf16.gmra.mrb[0].mxu0 %v339
        %v5150 = vpop.f32.mrb[0].mxu0
        %v5151 = vadd.f32 %v5108, %v5150
        %v5152 = vpop.f32.mrb[0].mxu0
        %v5153 = vadd.f32 %v5110, %v5152
        %v5154 = vpop.f32.mrb[0].mxu0
        %v5155 = vadd.f32 %v5112, %v5154
        %v5156 = vpop.f32.mrb[0].mxu0
        %v5157 = vadd.f32 %v5114, %v5156
        %5158 = vdwg.mxu0
        %5159 = vmatprep.subr.bf16.mxu0 %v3708
        %5160 = vmatpush1.bf16.msra.mxu0 %v3707
        %5161 = vmatprep.subr.bf16.mxu0 %v3712
        %5162 = vmatpush1.bf16.msra.mxu0 %v3711
        %5163 = vmatprep.subr.bf16.mxu0 %v3716
        %5164 = vmatpush1.bf16.msra.mxu0 %v3715
        %5165 = vmatprep.subr.bf16.mxu0 %v3720
        %5166 = vmatpush1.bf16.msra.mxu0 %v3719
        %5167 = vmatprep.subr.bf16.mxu0 %v3724
        %5168 = vmatpush1.bf16.msra.mxu0 %v3723
        %5169 = vmatprep.subr.bf16.mxu0 %v3728
        %5170 = vmatpush1.bf16.msra.mxu0 %v3727
        %5171 = vmatprep.subr.bf16.mxu0 %v3732
        %5172 = vmatpush1.bf16.msra.mxu0 %v3731
        %5173 = vmatprep.subr.bf16.mxu0 %v3736
        %5174 = vmatpush1.bf16.msra.mxu0 %v3735
        %5175 = vmatprep.subr.bf16.mxu0 %v3740
        %5176 = vmatpush1.bf16.msra.mxu0 %v3739
        %5177 = vmatprep.subr.bf16.mxu0 %v3744
        %5178 = vmatpush1.bf16.msra.mxu0 %v3743
        %5179 = vmatprep.subr.bf16.mxu0 %v3748
        %5180 = vmatpush1.bf16.msra.mxu0 %v3747
        %5181 = vmatprep.subr.bf16.mxu0 %v3752
        %5182 = vmatpush1.bf16.msra.mxu0 %v3751
        %5183 = vmatprep.subr.bf16.mxu0 %v3756
        %5184 = vmatpush1.bf16.msra.mxu0 %v3755
        %5185 = vmatprep.subr.bf16.mxu0 %v3760
        %5186 = vmatpush1.bf16.msra.mxu0 %v3759
        %5187 = vmatprep.subr.bf16.mxu0 %v3764
        %5188 = vmatpush1.bf16.msra.mxu0 %v3763
        %5189 = vmatprep.subr.bf16.mxu0 %v3768
        %5190 = vmatpush1.bf16.msra.mxu0 %v3767
        %5191 = vmatprep.mubr.bf16.mxu0 %v342
        %5192 = vmatmul.mubr.bf16.gmra.mrb[0].mxu0 %v341
        %v5193 = vpop.f32.mrb[0].mxu0
        %v5194 = vadd.f32 %v5151, %v5193
        %v5195 = vpop.f32.mrb[0].mxu0
        %v5196 = vadd.f32 %v5153, %v5195
        %v5197 = vpop.f32.mrb[0].mxu0
        %v5198 = vadd.f32 %v5155, %v5197
        %v5199 = vpop.f32.mrb[0].mxu0
        %v5200 = vadd.f32 %v5157, %v5199
        %5201 = vdwg.mxu0
        %5202 = vmatprep.subr.bf16.mxu0 %v3772
        %5203 = vmatpush1.bf16.msra.mxu0 %v3771
        %5204 = vmatprep.subr.bf16.mxu0 %v3776
        %5205 = vmatpush1.bf16.msra.mxu0 %v3775
        %5206 = vmatprep.subr.bf16.mxu0 %v3780
        %5207 = vmatpush1.bf16.msra.mxu0 %v3779
        %5208 = vmatprep.subr.bf16.mxu0 %v3784
        %5209 = vmatpush1.bf16.msra.mxu0 %v3783
        %5210 = vmatprep.subr.bf16.mxu0 %v3788
        %5211 = vmatpush1.bf16.msra.mxu0 %v3787
        %5212 = vmatprep.subr.bf16.mxu0 %v3792
        %5213 = vmatpush1.bf16.msra.mxu0 %v3791
        %5214 = vmatprep.subr.bf16.mxu0 %v3796
        %5215 = vmatpush1.bf16.msra.mxu0 %v3795
        %5216 = vmatprep.subr.bf16.mxu0 %v3800
        %5217 = vmatpush1.bf16.msra.mxu0 %v3799
        %5218 = vmatprep.subr.bf16.mxu0 %v3804
        %5219 = vmatpush1.bf16.msra.mxu0 %v3803
        %5220 = vmatprep.subr.bf16.mxu0 %v3808
        %5221 = vmatpush1.bf16.msra.mxu0 %v3807
        %5222 = vmatprep.subr.bf16.mxu0 %v3812
        %5223 = vmatpush1.bf16.msra.mxu0 %v3811
        %5224 = vmatprep.subr.bf16.mxu0 %v3816
        %5225 = vmatpush1.bf16.msra.mxu0 %v3815
        %5226 = vmatprep.subr.bf16.mxu0 %v3820
        %5227 = vmatpush1.bf16.msra.mxu0 %v3819
        %5228 = vmatprep.subr.bf16.mxu0 %v3824
        %5229 = vmatpush1.bf16.msra.mxu0 %v3823
        %5230 = vmatprep.subr.bf16.mxu0 %v3828
        %5231 = vmatpush1.bf16.msra.mxu0 %v3827
        %5232 = vmatprep.subr.bf16.mxu0 %v3832
        %5233 = vmatpush1.bf16.msra.mxu0 %v3831
        %5234 = vmatprep.mubr.bf16.mxu0 %v344
        %5235 = vmatmul.mubr.bf16.gmra.mrb[0].mxu0 %v343
        %v5236 = vpop.f32.mrb[0].mxu0
        %v5237 = vadd.f32 %v5194, %v5236
        %v5238 = vpop.f32.mrb[0].mxu0
        %v5239 = vadd.f32 %v5196, %v5238
        %v5240 = vpop.f32.mrb[0].mxu0
        %v5241 = vadd.f32 %v5198, %v5240
        %v5242 = vpop.f32.mrb[0].mxu0
        %v5243 = vadd.f32 %v5200, %v5242
        %5244 = vdwg.mxu0
        %5245 = vmatprep.subr.bf16.mxu0 %v3836
        %5246 = vmatpush1.bf16.msra.mxu0 %v3835
        %5247 = vmatprep.subr.bf16.mxu0 %v3840
        %5248 = vmatpush1.bf16.msra.mxu0 %v3839
        %5249 = vmatprep.subr.bf16.mxu0 %v3844
        %5250 = vmatpush1.bf16.msra.mxu0 %v3843
        %5251 = vmatprep.subr.bf16.mxu0 %v3848
        %5252 = vmatpush1.bf16.msra.mxu0 %v3847
        %5253 = vmatprep.subr.bf16.mxu0 %v3852
        %5254 = vmatpush1.bf16.msra.mxu0 %v3851
        %5255 = vmatprep.subr.bf16.mxu0 %v3856
        %5256 = vmatpush1.bf16.msra.mxu0 %v3855
        %5257 = vmatprep.subr.bf16.mxu0 %v3860
        %5258 = vmatpush1.bf16.msra.mxu0 %v3859
        %5259 = vmatprep.subr.bf16.mxu0 %v3864
        %5260 = vmatpush1.bf16.msra.mxu0 %v3863
        %5261 = vmatprep.subr.bf16.mxu0 %v3868
        %5262 = vmatpush1.bf16.msra.mxu0 %v3867
        %5263 = vmatprep.subr.bf16.mxu0 %v3872
        %5264 = vmatpush1.bf16.msra.mxu0 %v3871
        %5265 = vmatprep.subr.bf16.mxu0 %v3876
        %5266 = vmatpush1.bf16.msra.mxu0 %v3875
        %5267 = vmatprep.subr.bf16.mxu0 %v3880
        %5268 = vmatpush1.bf16.msra.mxu0 %v3879
        %5269 = vmatprep.subr.bf16.mxu0 %v3884
        %5270 = vmatpush1.bf16.msra.mxu0 %v3883
        %5271 = vmatprep.subr.bf16.mxu0 %v3888
        %5272 = vmatpush1.bf16.msra.mxu0 %v3887
        %5273 = vmatprep.subr.bf16.mxu0 %v3892
        %5274 = vmatpush1.bf16.msra.mxu0 %v3891
        %5275 = vmatprep.subr.bf16.mxu0 %v3896
        %5276 = vmatpush1.bf16.msra.mxu0 %v3895
        %5277 = vmatprep.mubr.bf16.mxu0 %v346
        %5278 = vmatmul.mubr.bf16.gmra.mrb[0].mxu0 %v345
        %v5279 = vpop.f32.mrb[0].mxu0
        %v5280 = vadd.f32 %v5237, %v5279
        %v5281 = vpop.f32.mrb[0].mxu0
        %v5282 = vadd.f32 %v5239, %v5281
        %v5283 = vpop.f32.mrb[0].mxu0
        %v5284 = vadd.f32 %v5241, %v5283
        %v5285 = vpop.f32.mrb[0].mxu0
        %v5286 = vadd.f32 %v5243, %v5285
        %5287 = vdwg.mxu0
        %5288 = vmatprep.subr.bf16.mxu0 %v3900
        %5289 = vmatpush1.bf16.msra.mxu0 %v3899
        %5290 = vmatprep.subr.bf16.mxu0 %v3904
        %5291 = vmatpush1.bf16.msra.mxu0 %v3903
        %5292 = vmatprep.subr.bf16.mxu0 %v3908
        %5293 = vmatpush1.bf16.msra.mxu0 %v3907
        %5294 = vmatprep.subr.bf16.mxu0 %v3912
        %5295 = vmatpush1.bf16.msra.mxu0 %v3911
        %5296 = vmatprep.subr.bf16.mxu0 %v3916
        %5297 = vmatpush1.bf16.msra.mxu0 %v3915
        %5298 = vmatprep.subr.bf16.mxu0 %v3920
        %5299 = vmatpush1.bf16.msra.mxu0 %v3919
        %5300 = vmatprep.subr.bf16.mxu0 %v3924
        %5301 = vmatpush1.bf16.msra.mxu0 %v3923
        %5302 = vmatprep.subr.bf16.mxu0 %v3928
        %5303 = vmatpush1.bf16.msra.mxu0 %v3927
        %5304 = vmatprep.subr.bf16.mxu0 %v3932
        %5305 = vmatpush1.bf16.msra.mxu0 %v3931
        %5306 = vmatprep.subr.bf16.mxu0 %v3936
        %5307 = vmatpush1.bf16.msra.mxu0 %v3935
        %5308 = vmatprep.subr.bf16.mxu0 %v3940
        %5309 = vmatpush1.bf16.msra.mxu0 %v3939
        %5310 = vmatprep.subr.bf16.mxu0 %v3944
        %5311 = vmatpush1.bf16.msra.mxu0 %v3943
        %5312 = vmatprep.subr.bf16.mxu0 %v3948
        %5313 = vmatpush1.bf16.msra.mxu0 %v3947
        %5314 = vmatprep.subr.bf16.mxu0 %v3952
        %5315 = vmatpush1.bf16.msra.mxu0 %v3951
        %5316 = vmatprep.subr.bf16.mxu0 %v3956
        %5317 = vmatpush1.bf16.msra.mxu0 %v3955
        %5318 = vmatprep.subr.bf16.mxu0 %v3960
        %5319 = vmatpush1.bf16.msra.mxu0 %v3959
        %5320 = vmatprep.mubr.bf16.mxu0 %v348
        %5321 = vmatmul.mubr.bf16.gmra.mrb[0].mxu0 %v347
        %v5322 = vpop.f32.mrb[0].mxu0
        %v5323 = vadd.f32 %v5280, %v5322
        %v5324 = vpop.f32.mrb[0].mxu0
        %v5325 = vadd.f32 %v5282, %v5324
        %v5326 = vpop.f32.mrb[0].mxu0
        %v5327 = vadd.f32 %v5284, %v5326
        %v5328 = vpop.f32.mrb[0].mxu0
        %v5329 = vadd.f32 %v5286, %v5328
        %5330 = vdwg.mxu0
        %5331 = vmatprep.subr.bf16.mxu0 %v3964
        %5332 = vmatpush1.bf16.msra.mxu0 %v3963
        %5333 = vmatprep.subr.bf16.mxu0 %v3968
        %5334 = vmatpush1.bf16.msra.mxu0 %v3967
        %5335 = vmatprep.subr.bf16.mxu0 %v3972
        %5336 = vmatpush1.bf16.msra.mxu0 %v3971
        %5337 = vmatprep.subr.bf16.mxu0 %v3976
        %5338 = vmatpush1.bf16.msra.mxu0 %v3975
        %5339 = vmatprep.subr.bf16.mxu0 %v3980
        %5340 = vmatpush1.bf16.msra.mxu0 %v3979
        %5341 = vmatprep.subr.bf16.mxu0 %v3984
        %5342 = vmatpush1.bf16.msra.mxu0 %v3983
        %5343 = vmatprep.subr.bf16.mxu0 %v3988
        %5344 = vmatpush1.bf16.msra.mxu0 %v3987
        %5345 = vmatprep.subr.bf16.mxu0 %v3992
        %5346 = vmatpush1.bf16.msra.mxu0 %v3991
        %5347 = vmatprep.subr.bf16.mxu0 %v3996
        %5348 = vmatpush1.bf16.msra.mxu0 %v3995
        %5349 = vmatprep.subr.bf16.mxu0 %v4000
        %5350 = vmatpush1.bf16.msra.mxu0 %v3999
        %5351 = vmatprep.subr.bf16.mxu0 %v4004
        %5352 = vmatpush1.bf16.msra.mxu0 %v4003
        %5353 = vmatprep.subr.bf16.mxu0 %v4008
        %5354 = vmatpush1.bf16.msra.mxu0 %v4007
        %5355 = vmatprep.subr.bf16.mxu0 %v4012
        %5356 = vmatpush1.bf16.msra.mxu0 %v4011
        %5357 = vmatprep.subr.bf16.mxu0 %v4016
        %5358 = vmatpush1.bf16.msra.mxu0 %v4015
        %5359 = vmatprep.subr.bf16.mxu0 %v4020
        %5360 = vmatpush1.bf16.msra.mxu0 %v4019
        %5361 = vmatprep.subr.bf16.mxu0 %v4024
        %5362 = vmatpush1.bf16.msra.mxu0 %v4023
        %5363 = vmatprep.mubr.bf16.mxu0 %v350
        %5364 = vmatmul.mubr.bf16.gmra.mrb[0].mxu0 %v349
        %v5365 = vpop.f32.mrb[0].mxu0
        %v5366 = vadd.f32 %v5323, %v5365
        %v5367 = vpop.f32.mrb[0].mxu0
        %v5368 = vadd.f32 %v5325, %v5367
        %v5369 = vpop.f32.mrb[0].mxu0
        %v5370 = vadd.f32 %v5327, %v5369
        %v5371 = vpop.f32.mrb[0].mxu0
        %v5372 = vadd.f32 %v5329, %v5371
        %5373 = vdwg.mxu0
        %5374 = vmatprep.subr.bf16.mxu0 %v4028
        %5375 = vmatpush1.bf16.msra.mxu0 %v4027
        %5376 = vmatprep.subr.bf16.mxu0 %v4032
        %5377 = vmatpush1.bf16.msra.mxu0 %v4031
        %5378 = vmatprep.subr.bf16.mxu0 %v4036
        %5379 = vmatpush1.bf16.msra.mxu0 %v4035
        %5380 = vmatprep.subr.bf16.mxu0 %v4040
        %5381 = vmatpush1.bf16.msra.mxu0 %v4039
        %5382 = vmatprep.subr.bf16.mxu0 %v4044
        %5383 = vmatpush1.bf16.msra.mxu0 %v4043
        %5384 = vmatprep.subr.bf16.mxu0 %v4048
        %5385 = vmatpush1.bf16.msra.mxu0 %v4047
        %5386 = vmatprep.subr.bf16.mxu0 %v4052
        %5387 = vmatpush1.bf16.msra.mxu0 %v4051
        %5388 = vmatprep.subr.bf16.mxu0 %v4056
        %5389 = vmatpush1.bf16.msra.mxu0 %v4055
        %5390 = vmatprep.subr.bf16.mxu0 %v4060
        %5391 = vmatpush1.bf16.msra.mxu0 %v4059
        %5392 = vmatprep.subr.bf16.mxu0 %v4064
        %5393 = vmatpush1.bf16.msra.mxu0 %v4063
        %5394 = vmatprep.subr.bf16.mxu0 %v4068
        %5395 = vmatpush1.bf16.msra.mxu0 %v4067
        %5396 = vmatprep.subr.bf16.mxu0 %v4072
        %5397 = vmatpush1.bf16.msra.mxu0 %v4071
        %5398 = vmatprep.subr.bf16.mxu0 %v4076
        %5399 = vmatpush1.bf16.msra.mxu0 %v4075
        %5400 = vmatprep.subr.bf16.mxu0 %v4080
        %5401 = vmatpush1.bf16.msra.mxu0 %v4079
        %5402 = vmatprep.subr.bf16.mxu0 %v4084
        %5403 = vmatpush1.bf16.msra.mxu0 %v4083
        %5404 = vmatprep.subr.bf16.mxu0 %v4088
        %5405 = vmatpush1.bf16.msra.mxu0 %v4087
        %5406 = vmatprep.mubr.bf16.mxu0 %v352
        %5407 = vmatmul.mubr.bf16.gmra.mrb[0].mxu0 %v351
        %v5408 = vpop.f32.mrb[0].mxu0
        %v5409 = vadd.f32 %v5366, %v5408
        %v5410 = vpop.f32.mrb[0].mxu0
        %v5411 = vadd.f32 %v5368, %v5410
        %v5412 = vpop.f32.mrb[0].mxu0
        %v5413 = vadd.f32 %v5370, %v5412
        %v5414 = vpop.f32.mrb[0].mxu0
        %v5415 = vadd.f32 %v5372, %v5414
        %5416 = vdwg.mxu0
        %5417 = vmatprep.subr.bf16.mxu0 %v4092
        %5418 = vmatpush1.bf16.msra.mxu0 %v4091
        %5419 = vmatprep.subr.bf16.mxu0 %v4096
        %5420 = vmatpush1.bf16.msra.mxu0 %v4095
        %5421 = vmatprep.subr.bf16.mxu0 %v4100
        %5422 = vmatpush1.bf16.msra.mxu0 %v4099
        %5423 = vmatprep.subr.bf16.mxu0 %v4104
        %5424 = vmatpush1.bf16.msra.mxu0 %v4103
        %5425 = vmatprep.subr.bf16.mxu0 %v4108
        %5426 = vmatpush1.bf16.msra.mxu0 %v4107
        %5427 = vmatprep.subr.bf16.mxu0 %v4112
        %5428 = vmatpush1.bf16.msra.mxu0 %v4111
        %5429 = vmatprep.subr.bf16.mxu0 %v4116
        %5430 = vmatpush1.bf16.msra.mxu0 %v4115
        %5431 = vmatprep.subr.bf16.mxu0 %v4120
        %5432 = vmatpush1.bf16.msra.mxu0 %v4119
        %5433 = vmatprep.subr.bf16.mxu0 %v4124
        %5434 = vmatpush1.bf16.msra.mxu0 %v4123
        %5435 = vmatprep.subr.bf16.mxu0 %v4128
        %5436 = vmatpush1.bf16.msra.mxu0 %v4127
        %5437 = vmatprep.subr.bf16.mxu0 %v4132
        %5438 = vmatpush1.bf16.msra.mxu0 %v4131
        %5439 = vmatprep.subr.bf16.mxu0 %v4136
        %5440 = vmatpush1.bf16.msra.mxu0 %v4135
        %5441 = vmatprep.subr.bf16.mxu0 %v4140
        %5442 = vmatpush1.bf16.msra.mxu0 %v4139
        %5443 = vmatprep.subr.bf16.mxu0 %v4144
        %5444 = vmatpush1.bf16.msra.mxu0 %v4143
        %5445 = vmatprep.subr.bf16.mxu0 %v4148
        %5446 = vmatpush1.bf16.msra.mxu0 %v4147
        %5447 = vmatprep.subr.bf16.mxu0 %v4152
        %5448 = vmatpush1.bf16.msra.mxu0 %v4151
        %5449 = vmatprep.mubr.bf16.mxu0 %v354
        %5450 = vmatmul.mubr.bf16.gmra.mrb[0].mxu0 %v353
        %v5451 = vpop.f32.mrb[0].mxu0
        %v5452 = vadd.f32 %v5409, %v5451
        %v5453 = vpop.f32.mrb[0].mxu0
        %v5454 = vadd.f32 %v5411, %v5453
        %v5455 = vpop.f32.mrb[0].mxu0
        %v5456 = vadd.f32 %v5413, %v5455
        %v5457 = vpop.f32.mrb[0].mxu0
        %v5458 = vadd.f32 %v5415, %v5457
        %5459 = vdwg.mxu0
        %5460 = vmatprep.subr.bf16.mxu0 %v4156
        %5461 = vmatpush1.bf16.msra.mxu0 %v4155
        %5462 = vmatprep.subr.bf16.mxu0 %v4160
        %5463 = vmatpush1.bf16.msra.mxu0 %v4159
        %5464 = vmatprep.subr.bf16.mxu0 %v4164
        %5465 = vmatpush1.bf16.msra.mxu0 %v4163
        %5466 = vmatprep.subr.bf16.mxu0 %v4168
        %5467 = vmatpush1.bf16.msra.mxu0 %v4167
        %5468 = vmatprep.subr.bf16.mxu0 %v4172
        %5469 = vmatpush1.bf16.msra.mxu0 %v4171
        %5470 = vmatprep.subr.bf16.mxu0 %v4176
        %5471 = vmatpush1.bf16.msra.mxu0 %v4175
        %5472 = vmatprep.subr.bf16.mxu0 %v4180
        %5473 = vmatpush1.bf16.msra.mxu0 %v4179
        %5474 = vmatprep.subr.bf16.mxu0 %v4184
        %5475 = vmatpush1.bf16.msra.mxu0 %v4183
        %5476 = vmatprep.subr.bf16.mxu0 %v4188
        %5477 = vmatpush1.bf16.msra.mxu0 %v4187
        %5478 = vmatprep.subr.bf16.mxu0 %v4192
        %5479 = vmatpush1.bf16.msra.mxu0 %v4191
        %5480 = vmatprep.subr.bf16.mxu0 %v4196
        %5481 = vmatpush1.bf16.msra.mxu0 %v4195
        %5482 = vmatprep.subr.bf16.mxu0 %v4200
        %5483 = vmatpush1.bf16.msra.mxu0 %v4199
        %5484 = vmatprep.subr.bf16.mxu0 %v4204
        %5485 = vmatpush1.bf16.msra.mxu0 %v4203
        %5486 = vmatprep.subr.bf16.mxu0 %v4208
        %5487 = vmatpush1.bf16.msra.mxu0 %v4207
        %5488 = vmatprep.subr.bf16.mxu0 %v4212
        %5489 = vmatpush1.bf16.msra.mxu0 %v4211
        %5490 = vmatprep.subr.bf16.mxu0 %v4216
        %5491 = vmatpush1.bf16.msra.mxu0 %v4215
        %5492 = vmatprep.mubr.bf16.mxu0 %v356
        %5493 = vmatmul.mubr.bf16.gmra.mrb[0].mxu0 %v355
        %v5494 = vpop.f32.mrb[0].mxu0
        %v5495 = vadd.f32 %v5452, %v5494
        %v5496 = vpop.f32.mrb[0].mxu0
        %v5497 = vadd.f32 %v5454, %v5496
        %v5498 = vpop.f32.mrb[0].mxu0
        %v5499 = vadd.f32 %v5456, %v5498
        %v5500 = vpop.f32.mrb[0].mxu0
        %v5501 = vadd.f32 %v5458, %v5500
        %5502 = vdwg.mxu0
        %5503 = vmatprep.subr.bf16.mxu0 %v3454
        %5504 = vmatpush1.bf16.msra.mxu0 %v3453
        %5505 = vmatprep.subr.bf16.mxu0 %v3458
        %5506 = vmatpush1.bf16.msra.mxu0 %v3457
        %5507 = vmatprep.subr.bf16.mxu0 %v3462
        %5508 = vmatpush1.bf16.msra.mxu0 %v3461
        %5509 = vmatprep.subr.bf16.mxu0 %v3466
        %5510 = vmatpush1.bf16.msra.mxu0 %v3465
        %5511 = vmatprep.subr.bf16.mxu0 %v3470
        %5512 = vmatpush1.bf16.msra.mxu0 %v3469
        %5513 = vmatprep.subr.bf16.mxu0 %v3474
        %5514 = vmatpush1.bf16.msra.mxu0 %v3473
        %5515 = vmatprep.subr.bf16.mxu0 %v3478
        %5516 = vmatpush1.bf16.msra.mxu0 %v3477
        %5517 = vmatprep.subr.bf16.mxu0 %v3482
        %5518 = vmatpush1.bf16.msra.mxu0 %v3481
        %5519 = vmatprep.subr.bf16.mxu0 %v3486
        %5520 = vmatpush1.bf16.msra.mxu0 %v3485
        %5521 = vmatprep.subr.bf16.mxu0 %v3490
        %5522 = vmatpush1.bf16.msra.mxu0 %v3489
        %5523 = vmatprep.subr.bf16.mxu0 %v3494
        %5524 = vmatpush1.bf16.msra.mxu0 %v3493
        %5525 = vmatprep.subr.bf16.mxu0 %v3498
        %5526 = vmatpush1.bf16.msra.mxu0 %v3497
        %5527 = vmatprep.subr.bf16.mxu0 %v3502
        %5528 = vmatpush1.bf16.msra.mxu0 %v3501
        %5529 = vmatprep.subr.bf16.mxu0 %v3506
        %5530 = vmatpush1.bf16.msra.mxu0 %v3505
        %5531 = vmatprep.subr.bf16.mxu0 %v3510
        %5532 = vmatpush1.bf16.msra.mxu0 %v3509
        %5533 = vmatprep.subr.bf16.mxu0 %v3514
        %5534 = vmatpush1.bf16.msra.mxu0 %v3513
        %5535 = vmatprep.mubr.bf16.mxu0 %v334
        %5536 = vmatmul.mubr.bf16.gmra.mrb[0].mxu0 %v333
        %v5537 = vpop.f32.mrb[0].mxu0
        %v5538 = vadd.f32 %v1138, %v5537
        %v5539 = vpop.f32.mrb[0].mxu0
        %v5540 = vadd.f32 %v1142, %v5539
        %v5541 = vpop.f32.mrb[0].mxu0
        %v5542 = vadd.f32 %v1138, %v5541
        %v5543 = vpop.f32.mrb[0].mxu0
        %v5544 = vadd.f32 %v1142, %v5543
        %5545 = vdwg.mxu0
        %5546 = vmatprep.subr.bf16.mxu0 %v3518
        %5547 = vmatpush1.bf16.msra.mxu0 %v3517
        %5548 = vmatprep.subr.bf16.mxu0 %v3522
        %5549 = vmatpush1.bf16.msra.mxu0 %v3521
        %5550 = vmatprep.subr.bf16.mxu0 %v3526
        %5551 = vmatpush1.bf16.msra.mxu0 %v3525
        %5552 = vmatprep.subr.bf16.mxu0 %v3530
        %5553 = vmatpush1.bf16.msra.mxu0 %v3529
        %5554 = vmatprep.subr.bf16.mxu0 %v3534
        %5555 = vmatpush1.bf16.msra.mxu0 %v3533
        %5556 = vmatprep.subr.bf16.mxu0 %v3538
        %5557 = vmatpush1.bf16.msra.mxu0 %v3537
        %5558 = vmatprep.subr.bf16.mxu0 %v3542
        %5559 = vmatpush1.bf16.msra.mxu0 %v3541
        %5560 = vmatprep.subr.bf16.mxu0 %v3546
        %5561 = vmatpush1.bf16.msra.mxu0 %v3545
        %5562 = vmatprep.subr.bf16.mxu0 %v3550
        %5563 = vmatpush1.bf16.msra.mxu0 %v3549
        %5564 = vmatprep.subr.bf16.mxu0 %v3554
        %5565 = vmatpush1.bf16.msra.mxu0 %v3553
        %5566 = vmatprep.subr.bf16.mxu0 %v3558
        %5567 = vmatpush1.bf16.msra.mxu0 %v3557
        %5568 = vmatprep.subr.bf16.mxu0 %v3562
        %5569 = vmatpush1.bf16.msra.mxu0 %v3561
        %5570 = vmatprep.subr.bf16.mxu0 %v3566
        %5571 = vmatpush1.bf16.msra.mxu0 %v3565
        %5572 = vmatprep.subr.bf16.mxu0 %v3570
        %5573 = vmatpush1.bf16.msra.mxu0 %v3569
        %5574 = vmatprep.subr.bf16.mxu0 %v3574
        %5575 = vmatpush1.bf16.msra.mxu0 %v3573
        %5576 = vmatprep.subr.bf16.mxu0 %v3578
        %5577 = vmatpush1.bf16.msra.mxu0 %v3577
        %5578 = vmatprep.mubr.bf16.mxu0 %v336
        %5579 = vmatmul.mubr.bf16.gmra.mrb[0].mxu0 %v335
        %v5580 = vpop.f32.mrb[0].mxu0
        %v5581 = vadd.f32 %v5538, %v5580
        %v5582 = vpop.f32.mrb[0].mxu0
        %v5583 = vadd.f32 %v5540, %v5582
        %v5584 = vpop.f32.mrb[0].mxu0
        %v5585 = vadd.f32 %v5542, %v5584
        %v5586 = vpop.f32.mrb[0].mxu0
        %v5587 = vadd.f32 %v5544, %v5586
        %5588 = vdwg.mxu0
        %5589 = vmatprep.subr.bf16.mxu0 %v3582
        %5590 = vmatpush1.bf16.msra.mxu0 %v3581
        %5591 = vmatprep.subr.bf16.mxu0 %v3586
        %5592 = vmatpush1.bf16.msra.mxu0 %v3585
        %5593 = vmatprep.subr.bf16.mxu0 %v3590
        %5594 = vmatpush1.bf16.msra.mxu0 %v3589
        %5595 = vmatprep.subr.bf16.mxu0 %v3594
        %5596 = vmatpush1.bf16.msra.mxu0 %v3593
        %5597 = vmatprep.subr.bf16.mxu0 %v3598
        %5598 = vmatpush1.bf16.msra.mxu0 %v3597
        %5599 = vmatprep.subr.bf16.mxu0 %v3602
        %5600 = vmatpush1.bf16.msra.mxu0 %v3601
        %5601 = vmatprep.subr.bf16.mxu0 %v3606
        %5602 = vmatpush1.bf16.msra.mxu0 %v3605
        %5603 = vmatprep.subr.bf16.mxu0 %v3610
        %5604 = vmatpush1.bf16.msra.mxu0 %v3609
        %5605 = vmatprep.subr.bf16.mxu0 %v3614
        %5606 = vmatpush1.bf16.msra.mxu0 %v3613
        %5607 = vmatprep.subr.bf16.mxu0 %v3618
        %5608 = vmatpush1.bf16.msra.mxu0 %v3617
        %5609 = vmatprep.subr.bf16.mxu0 %v3622
        %5610 = vmatpush1.bf16.msra.mxu0 %v3621
        %5611 = vmatprep.subr.bf16.mxu0 %v3626
        %5612 = vmatpush1.bf16.msra.mxu0 %v3625
        %5613 = vmatprep.subr.bf16.mxu0 %v3630
        %5614 = vmatpush1.bf16.msra.mxu0 %v3629
        %5615 = vmatprep.subr.bf16.mxu0 %v3634
        %5616 = vmatpush1.bf16.msra.mxu0 %v3633
        %5617 = vmatprep.subr.bf16.mxu0 %v3638
        %5618 = vmatpush1.bf16.msra.mxu0 %v3637
        %5619 = vmatprep.subr.bf16.mxu0 %v3642
        %5620 = vmatpush1.bf16.msra.mxu0 %v3641
        %5621 = vmatprep.mubr.bf16.mxu0 %v338
        %5622 = vmatmul.mubr.bf16.gmra.mrb[0].mxu0 %v337
        %v5623 = vpop.f32.mrb[0].mxu0
        %v5624 = vadd.f32 %v5581, %v5623
        %v5625 = vpop.f32.mrb[0].mxu0
        %v5626 = vadd.f32 %v5583, %v5625
        %v5627 = vpop.f32.mrb[0].mxu0
        %v5628 = vadd.f32 %v5585, %v5627
        %v5629 = vpop.f32.mrb[0].mxu0
        %v5630 = vadd.f32 %v5587, %v5629
        %5631 = vdwg.mxu0
        %5632 = vmatprep.subr.bf16.mxu0 %v3646
        %5633 = vmatpush1.bf16.msra.mxu0 %v3645
        %5634 = vmatprep.subr.bf16.mxu0 %v3650
        %5635 = vmatpush1.bf16.msra.mxu0 %v3649
        %5636 = vmatprep.subr.bf16.mxu0 %v3654
        %5637 = vmatpush1.bf16.msra.mxu0 %v3653
        %5638 = vmatprep.subr.bf16.mxu0 %v3658
        %5639 = vmatpush1.bf16.msra.mxu0 %v3657
        %5640 = vmatprep.subr.bf16.mxu0 %v3662
        %5641 = vmatpush1.bf16.msra.mxu0 %v3661
        %5642 = vmatprep.subr.bf16.mxu0 %v3666
        %5643 = vmatpush1.bf16.msra.mxu0 %v3665
        %5644 = vmatprep.subr.bf16.mxu0 %v3670
        %5645 = vmatpush1.bf16.msra.mxu0 %v3669
        %5646 = vmatprep.subr.bf16.mxu0 %v3674
        %5647 = vmatpush1.bf16.msra.mxu0 %v3673
        %5648 = vmatprep.subr.bf16.mxu0 %v3678
        %5649 = vmatpush1.bf16.msra.mxu0 %v3677
        %5650 = vmatprep.subr.bf16.mxu0 %v3682
        %5651 = vmatpush1.bf16.msra.mxu0 %v3681
        %5652 = vmatprep.subr.bf16.mxu0 %v3686
        %5653 = vmatpush1.bf16.msra.mxu0 %v3685
        %5654 = vmatprep.subr.bf16.mxu0 %v3690
        %5655 = vmatpush1.bf16.msra.mxu0 %v3689
        %5656 = vmatprep.subr.bf16.mxu0 %v3694
        %5657 = vmatpush1.bf16.msra.mxu0 %v3693
        %5658 = vmatprep.subr.bf16.mxu0 %v3698
        %5659 = vmatpush1.bf16.msra.mxu0 %v3697
        %5660 = vmatprep.subr.bf16.mxu0 %v3702
        %5661 = vmatpush1.bf16.msra.mxu0 %v3701
        %5662 = vmatprep.subr.bf16.mxu0 %v3706
        %5663 = vmatpush1.bf16.msra.mxu0 %v3705
        %5664 = vmatprep.mubr.bf16.mxu0 %v340
        %5665 = vmatmul.mubr.bf16.gmra.mrb[0].mxu0 %v339
        %v5666 = vpop.f32.mrb[0].mxu0
        %v5667 = vadd.f32 %v5624, %v5666
        %v5668 = vpop.f32.mrb[0].mxu0
        %v5669 = vadd.f32 %v5626, %v5668
        %v5670 = vpop.f32.mrb[0].mxu0
        %v5671 = vadd.f32 %v5628, %v5670
        %v5672 = vpop.f32.mrb[0].mxu0
        %v5673 = vadd.f32 %v5630, %v5672
        %5674 = vdwg.mxu0
        %5675 = vmatprep.subr.bf16.mxu0 %v3710
        %5676 = vmatpush1.bf16.msra.mxu0 %v3709
        %5677 = vmatprep.subr.bf16.mxu0 %v3714
        %5678 = vmatpush1.bf16.msra.mxu0 %v3713
        %5679 = vmatprep.subr.bf16.mxu0 %v3718
        %5680 = vmatpush1.bf16.msra.mxu0 %v3717
        %5681 = vmatprep.subr.bf16.mxu0 %v3722
        %5682 = vmatpush1.bf16.msra.mxu0 %v3721
        %5683 = vmatprep.subr.bf16.mxu0 %v3726
        %5684 = vmatpush1.bf16.msra.mxu0 %v3725
        %5685 = vmatprep.subr.bf16.mxu0 %v3730
        %5686 = vmatpush1.bf16.msra.mxu0 %v3729
        %5687 = vmatprep.subr.bf16.mxu0 %v3734
        %5688 = vmatpush1.bf16.msra.mxu0 %v3733
        %5689 = vmatprep.subr.bf16.mxu0 %v3738
        %5690 = vmatpush1.bf16.msra.mxu0 %v3737
        %5691 = vmatprep.subr.bf16.mxu0 %v3742
        %5692 = vmatpush1.bf16.msra.mxu0 %v3741
        %5693 = vmatprep.subr.bf16.mxu0 %v3746
        %5694 = vmatpush1.bf16.msra.mxu0 %v3745
        %5695 = vmatprep.subr.bf16.mxu0 %v3750
        %5696 = vmatpush1.bf16.msra.mxu0 %v3749
        %5697 = vmatprep.subr.bf16.mxu0 %v3754
        %5698 = vmatpush1.bf16.msra.mxu0 %v3753
        %5699 = vmatprep.subr.bf16.mxu0 %v3758
        %5700 = vmatpush1.bf16.msra.mxu0 %v3757
        %5701 = vmatprep.subr.bf16.mxu0 %v3762
        %5702 = vmatpush1.bf16.msra.mxu0 %v3761
        %5703 = vmatprep.subr.bf16.mxu0 %v3766
        %5704 = vmatpush1.bf16.msra.mxu0 %v3765
        %5705 = vmatprep.subr.bf16.mxu0 %v3770
        %5706 = vmatpush1.bf16.msra.mxu0 %v3769
        %5707 = vmatprep.mubr.bf16.mxu0 %v342
        %5708 = vmatmul.mubr.bf16.gmra.mrb[0].mxu0 %v341
        %v5709 = vpop.f32.mrb[0].mxu0
        %v5710 = vadd.f32 %v5667, %v5709
        %v5711 = vpop.f32.mrb[0].mxu0
        %v5712 = vadd.f32 %v5669, %v5711
        %v5713 = vpop.f32.mrb[0].mxu0
        %v5714 = vadd.f32 %v5671, %v5713
        %v5715 = vpop.f32.mrb[0].mxu0
        %v5716 = vadd.f32 %v5673, %v5715
        %5717 = vdwg.mxu0
        %5718 = vmatprep.subr.bf16.mxu0 %v3774
        %5719 = vmatpush1.bf16.msra.mxu0 %v3773
        %5720 = vmatprep.subr.bf16.mxu0 %v3778
        %5721 = vmatpush1.bf16.msra.mxu0 %v3777
        %5722 = vmatprep.subr.bf16.mxu0 %v3782
        %5723 = vmatpush1.bf16.msra.mxu0 %v3781
        %5724 = vmatprep.subr.bf16.mxu0 %v3786
        %5725 = vmatpush1.bf16.msra.mxu0 %v3785
        %5726 = vmatprep.subr.bf16.mxu0 %v3790
        %5727 = vmatpush1.bf16.msra.mxu0 %v3789
        %5728 = vmatprep.subr.bf16.mxu0 %v3794
        %5729 = vmatpush1.bf16.msra.mxu0 %v3793
        %5730 = vmatprep.subr.bf16.mxu0 %v3798
        %5731 = vmatpush1.bf16.msra.mxu0 %v3797
        %5732 = vmatprep.subr.bf16.mxu0 %v3802
        %5733 = vmatpush1.bf16.msra.mxu0 %v3801
        %5734 = vmatprep.subr.bf16.mxu0 %v3806
        %5735 = vmatpush1.bf16.msra.mxu0 %v3805
        %5736 = vmatprep.subr.bf16.mxu0 %v3810
        %5737 = vmatpush1.bf16.msra.mxu0 %v3809
        %5738 = vmatprep.subr.bf16.mxu0 %v3814
        %5739 = vmatpush1.bf16.msra.mxu0 %v3813
        %5740 = vmatprep.subr.bf16.mxu0 %v3818
        %5741 = vmatpush1.bf16.msra.mxu0 %v3817
        %5742 = vmatprep.subr.bf16.mxu0 %v3822
        %5743 = vmatpush1.bf16.msra.mxu0 %v3821
        %5744 = vmatprep.subr.bf16.mxu0 %v3826
        %5745 = vmatpush1.bf16.msra.mxu0 %v3825
        %5746 = vmatprep.subr.bf16.mxu0 %v3830
        %5747 = vmatpush1.bf16.msra.mxu0 %v3829
        %5748 = vmatprep.subr.bf16.mxu0 %v3834
        %5749 = vmatpush1.bf16.msra.mxu0 %v3833
        %5750 = vmatprep.mubr.bf16.mxu0 %v344
        %5751 = vmatmul.mubr.bf16.gmra.mrb[0].mxu0 %v343
        %v5752 = vpop.f32.mrb[0].mxu0
        %v5753 = vadd.f32 %v5710, %v5752
        %v5754 = vpop.f32.mrb[0].mxu0
        %v5755 = vadd.f32 %v5712, %v5754
        %v5756 = vpop.f32.mrb[0].mxu0
        %v5757 = vadd.f32 %v5714, %v5756
        %v5758 = vpop.f32.mrb[0].mxu0
        %v5759 = vadd.f32 %v5716, %v5758
        %5760 = vdwg.mxu0
        %5761 = vmatprep.subr.bf16.mxu0 %v3838
        %5762 = vmatpush1.bf16.msra.mxu0 %v3837
        %5763 = vmatprep.subr.bf16.mxu0 %v3842
        %5764 = vmatpush1.bf16.msra.mxu0 %v3841
        %5765 = vmatprep.subr.bf16.mxu0 %v3846
        %5766 = vmatpush1.bf16.msra.mxu0 %v3845
        %5767 = vmatprep.subr.bf16.mxu0 %v3850
        %5768 = vmatpush1.bf16.msra.mxu0 %v3849
        %5769 = vmatprep.subr.bf16.mxu0 %v3854
        %5770 = vmatpush1.bf16.msra.mxu0 %v3853
        %5771 = vmatprep.subr.bf16.mxu0 %v3858
        %5772 = vmatpush1.bf16.msra.mxu0 %v3857
        %5773 = vmatprep.subr.bf16.mxu0 %v3862
        %5774 = vmatpush1.bf16.msra.mxu0 %v3861
        %5775 = vmatprep.subr.bf16.mxu0 %v3866
        %5776 = vmatpush1.bf16.msra.mxu0 %v3865
        %5777 = vmatprep.subr.bf16.mxu0 %v3870
        %5778 = vmatpush1.bf16.msra.mxu0 %v3869
        %5779 = vmatprep.subr.bf16.mxu0 %v3874
        %5780 = vmatpush1.bf16.msra.mxu0 %v3873
        %5781 = vmatprep.subr.bf16.mxu0 %v3878
        %5782 = vmatpush1.bf16.msra.mxu0 %v3877
        %5783 = vmatprep.subr.bf16.mxu0 %v3882
        %5784 = vmatpush1.bf16.msra.mxu0 %v3881
        %5785 = vmatprep.subr.bf16.mxu0 %v3886
        %5786 = vmatpush1.bf16.msra.mxu0 %v3885
        %5787 = vmatprep.subr.bf16.mxu0 %v3890
        %5788 = vmatpush1.bf16.msra.mxu0 %v3889
        %5789 = vmatprep.subr.bf16.mxu0 %v3894
        %5790 = vmatpush1.bf16.msra.mxu0 %v3893
        %5791 = vmatprep.subr.bf16.mxu0 %v3898
        %5792 = vmatpush1.bf16.msra.mxu0 %v3897
        %5793 = vmatprep.mubr.bf16.mxu0 %v346
        %5794 = vmatmul.mubr.bf16.gmra.mrb[0].mxu0 %v345
        %v5795 = vpop.f32.mrb[0].mxu0
        %v5796 = vadd.f32 %v5753, %v5795
        %v5797 = vpop.f32.mrb[0].mxu0
        %v5798 = vadd.f32 %v5755, %v5797
        %v5799 = vpop.f32.mrb[0].mxu0
        %v5800 = vadd.f32 %v5757, %v5799
        %v5801 = vpop.f32.mrb[0].mxu0
        %v5802 = vadd.f32 %v5759, %v5801
        %5803 = vdwg.mxu0
        %5804 = vmatprep.subr.bf16.mxu0 %v3902
        %5805 = vmatpush1.bf16.msra.mxu0 %v3901
        %5806 = vmatprep.subr.bf16.mxu0 %v3906
        %5807 = vmatpush1.bf16.msra.mxu0 %v3905
        %5808 = vmatprep.subr.bf16.mxu0 %v3910
        %5809 = vmatpush1.bf16.msra.mxu0 %v3909
        %5810 = vmatprep.subr.bf16.mxu0 %v3914
        %5811 = vmatpush1.bf16.msra.mxu0 %v3913
        %5812 = vmatprep.subr.bf16.mxu0 %v3918
        %5813 = vmatpush1.bf16.msra.mxu0 %v3917
        %5814 = vmatprep.subr.bf16.mxu0 %v3922
        %5815 = vmatpush1.bf16.msra.mxu0 %v3921
        %5816 = vmatprep.subr.bf16.mxu0 %v3926
        %5817 = vmatpush1.bf16.msra.mxu0 %v3925
        %5818 = vmatprep.subr.bf16.mxu0 %v3930
        %5819 = vmatpush1.bf16.msra.mxu0 %v3929
        %5820 = vmatprep.subr.bf16.mxu0 %v3934
        %5821 = vmatpush1.bf16.msra.mxu0 %v3933
        %5822 = vmatprep.subr.bf16.mxu0 %v3938
        %5823 = vmatpush1.bf16.msra.mxu0 %v3937
        %5824 = vmatprep.subr.bf16.mxu0 %v3942
        %5825 = vmatpush1.bf16.msra.mxu0 %v3941
        %5826 = vmatprep.subr.bf16.mxu0 %v3946
        %5827 = vmatpush1.bf16.msra.mxu0 %v3945
        %5828 = vmatprep.subr.bf16.mxu0 %v3950
        %5829 = vmatpush1.bf16.msra.mxu0 %v3949
        %5830 = vmatprep.subr.bf16.mxu0 %v3954
        %5831 = vmatpush1.bf16.msra.mxu0 %v3953
        %5832 = vmatprep.subr.bf16.mxu0 %v3958
        %5833 = vmatpush1.bf16.msra.mxu0 %v3957
        %5834 = vmatprep.subr.bf16.mxu0 %v3962
        %5835 = vmatpush1.bf16.msra.mxu0 %v3961
        %5836 = vmatprep.mubr.bf16.mxu0 %v348
        %5837 = vmatmul.mubr.bf16.gmra.mrb[0].mxu0 %v347
        %v5838 = vpop.f32.mrb[0].mxu0
        %v5839 = vadd.f32 %v5796, %v5838
        %v5840 = vpop.f32.mrb[0].mxu0
        %v5841 = vadd.f32 %v5798, %v5840
        %v5842 = vpop.f32.mrb[0].mxu0
        %v5843 = vadd.f32 %v5800, %v5842
        %v5844 = vpop.f32.mrb[0].mxu0
        %v5845 = vadd.f32 %v5802, %v5844
        %5846 = vdwg.mxu0
        %5847 = vmatprep.subr.bf16.mxu0 %v3966
        %5848 = vmatpush1.bf16.msra.mxu0 %v3965
        %5849 = vmatprep.subr.bf16.mxu0 %v3970
        %5850 = vmatpush1.bf16.msra.mxu0 %v3969
        %5851 = vmatprep.subr.bf16.mxu0 %v3974
        %5852 = vmatpush1.bf16.msra.mxu0 %v3973
        %5853 = vmatprep.subr.bf16.mxu0 %v3978
        %5854 = vmatpush1.bf16.msra.mxu0 %v3977
        %5855 = vmatprep.subr.bf16.mxu0 %v3982
        %5856 = vmatpush1.bf16.msra.mxu0 %v3981
        %5857 = vmatprep.subr.bf16.mxu0 %v3986
        %5858 = vmatpush1.bf16.msra.mxu0 %v3985
        %5859 = vmatprep.subr.bf16.mxu0 %v3990
        %5860 = vmatpush1.bf16.msra.mxu0 %v3989
        %5861 = vmatprep.subr.bf16.mxu0 %v3994
        %5862 = vmatpush1.bf16.msra.mxu0 %v3993
        %5863 = vmatprep.subr.bf16.mxu0 %v3998
        %5864 = vmatpush1.bf16.msra.mxu0 %v3997
        %5865 = vmatprep.subr.bf16.mxu0 %v4002
        %5866 = vmatpush1.bf16.msra.mxu0 %v4001
        %5867 = vmatprep.subr.bf16.mxu0 %v4006
        %5868 = vmatpush1.bf16.msra.mxu0 %v4005
        %5869 = vmatprep.subr.bf16.mxu0 %v4010
        %5870 = vmatpush1.bf16.msra.mxu0 %v4009
        %5871 = vmatprep.subr.bf16.mxu0 %v4014
        %5872 = vmatpush1.bf16.msra.mxu0 %v4013
        %5873 = vmatprep.subr.bf16.mxu0 %v4018
        %5874 = vmatpush1.bf16.msra.mxu0 %v4017
        %5875 = vmatprep.subr.bf16.mxu0 %v4022
        %5876 = vmatpush1.bf16.msra.mxu0 %v4021
        %5877 = vmatprep.subr.bf16.mxu0 %v4026
        %5878 = vmatpush1.bf16.msra.mxu0 %v4025
        %5879 = vmatprep.mubr.bf16.mxu0 %v350
        %5880 = vmatmul.mubr.bf16.gmra.mrb[0].mxu0 %v349
        %v5881 = vpop.f32.mrb[0].mxu0
        %v5882 = vadd.f32 %v5839, %v5881
        %v5883 = vpop.f32.mrb[0].mxu0
        %v5884 = vadd.f32 %v5841, %v5883
        %v5885 = vpop.f32.mrb[0].mxu0
        %v5886 = vadd.f32 %v5843, %v5885
        %v5887 = vpop.f32.mrb[0].mxu0
        %v5888 = vadd.f32 %v5845, %v5887
        %5889 = vdwg.mxu0
        %5890 = vmatprep.subr.bf16.mxu0 %v4030
        %5891 = vmatpush1.bf16.msra.mxu0 %v4029
        %5892 = vmatprep.subr.bf16.mxu0 %v4034
        %5893 = vmatpush1.bf16.msra.mxu0 %v4033
        %5894 = vmatprep.subr.bf16.mxu0 %v4038
        %5895 = vmatpush1.bf16.msra.mxu0 %v4037
        %5896 = vmatprep.subr.bf16.mxu0 %v4042
        %5897 = vmatpush1.bf16.msra.mxu0 %v4041
        %5898 = vmatprep.subr.bf16.mxu0 %v4046
        %5899 = vmatpush1.bf16.msra.mxu0 %v4045
        %5900 = vmatprep.subr.bf16.mxu0 %v4050
        %5901 = vmatpush1.bf16.msra.mxu0 %v4049
        %5902 = vmatprep.subr.bf16.mxu0 %v4054
        %5903 = vmatpush1.bf16.msra.mxu0 %v4053
        %5904 = vmatprep.subr.bf16.mxu0 %v4058
        %5905 = vmatpush1.bf16.msra.mxu0 %v4057
        %5906 = vmatprep.subr.bf16.mxu0 %v4062
        %5907 = vmatpush1.bf16.msra.mxu0 %v4061
        %5908 = vmatprep.subr.bf16.mxu0 %v4066
        %5909 = vmatpush1.bf16.msra.mxu0 %v4065
        %5910 = vmatprep.subr.bf16.mxu0 %v4070
        %5911 = vmatpush1.bf16.msra.mxu0 %v4069
        %5912 = vmatprep.subr.bf16.mxu0 %v4074
        %5913 = vmatpush1.bf16.msra.mxu0 %v4073
        %5914 = vmatprep.subr.bf16.mxu0 %v4078
        %5915 = vmatpush1.bf16.msra.mxu0 %v4077
        %5916 = vmatprep.subr.bf16.mxu0 %v4082
        %5917 = vmatpush1.bf16.msra.mxu0 %v4081
        %5918 = vmatprep.subr.bf16.mxu0 %v4086
        %5919 = vmatpush1.bf16.msra.mxu0 %v4085
        %5920 = vmatprep.subr.bf16.mxu0 %v4090
        %5921 = vmatpush1.bf16.msra.mxu0 %v4089
        %5922 = vmatprep.mubr.bf16.mxu0 %v352
        %5923 = vmatmul.mubr.bf16.gmra.mrb[0].mxu0 %v351
        %v5924 = vpop.f32.mrb[0].mxu0
        %v5925 = vadd.f32 %v5882, %v5924
        %v5926 = vpop.f32.mrb[0].mxu0
        %v5927 = vadd.f32 %v5884, %v5926
        %v5928 = vpop.f32.mrb[0].mxu0
        %v5929 = vadd.f32 %v5886, %v5928
        %v5930 = vpop.f32.mrb[0].mxu0
        %v5931 = vadd.f32 %v5888, %v5930
        %5932 = vdwg.mxu0
        %5933 = vmatprep.subr.bf16.mxu0 %v4094
        %5934 = vmatpush1.bf16.msra.mxu0 %v4093
        %5935 = vmatprep.subr.bf16.mxu0 %v4098
        %5936 = vmatpush1.bf16.msra.mxu0 %v4097
        %5937 = vmatprep.subr.bf16.mxu0 %v4102
        %5938 = vmatpush1.bf16.msra.mxu0 %v4101
        %5939 = vmatprep.subr.bf16.mxu0 %v4106
        %5940 = vmatpush1.bf16.msra.mxu0 %v4105
        %5941 = vmatprep.subr.bf16.mxu0 %v4110
        %5942 = vmatpush1.bf16.msra.mxu0 %v4109
        %5943 = vmatprep.subr.bf16.mxu0 %v4114
        %5944 = vmatpush1.bf16.msra.mxu0 %v4113
        %5945 = vmatprep.subr.bf16.mxu0 %v4118
        %5946 = vmatpush1.bf16.msra.mxu0 %v4117
        %5947 = vmatprep.subr.bf16.mxu0 %v4122
        %5948 = vmatpush1.bf16.msra.mxu0 %v4121
        %5949 = vmatprep.subr.bf16.mxu0 %v4126
        %5950 = vmatpush1.bf16.msra.mxu0 %v4125
        %5951 = vmatprep.subr.bf16.mxu0 %v4130
        %5952 = vmatpush1.bf16.msra.mxu0 %v4129
        %5953 = vmatprep.subr.bf16.mxu0 %v4134
        %5954 = vmatpush1.bf16.msra.mxu0 %v4133
        %5955 = vmatprep.subr.bf16.mxu0 %v4138
        %5956 = vmatpush1.bf16.msra.mxu0 %v4137
        %5957 = vmatprep.subr.bf16.mxu0 %v4142
        %5958 = vmatpush1.bf16.msra.mxu0 %v4141
        %5959 = vmatprep.subr.bf16.mxu0 %v4146
        %5960 = vmatpush1.bf16.msra.mxu0 %v4145
        %5961 = vmatprep.subr.bf16.mxu0 %v4150
        %5962 = vmatpush1.bf16.msra.mxu0 %v4149
        %5963 = vmatprep.subr.bf16.mxu0 %v4154
        %5964 = vmatpush1.bf16.msra.mxu0 %v4153
        %5965 = vmatprep.mubr.bf16.mxu0 %v354
        %5966 = vmatmul.mubr.bf16.gmra.mrb[0].mxu0 %v353
        %v5967 = vpop.f32.mrb[0].mxu0
        %v5968 = vadd.f32 %v5925, %v5967
        %v5969 = vpop.f32.mrb[0].mxu0
        %v5970 = vadd.f32 %v5927, %v5969
        %v5971 = vpop.f32.mrb[0].mxu0
        %v5972 = vadd.f32 %v5929, %v5971
        %v5973 = vpop.f32.mrb[0].mxu0
        %v5974 = vadd.f32 %v5931, %v5973
        %5975 = vdwg.mxu0
        %5976 = vmatprep.subr.bf16.mxu0 %v4158
        %5977 = vmatpush1.bf16.msra.mxu0 %v4157
        %5978 = vmatprep.subr.bf16.mxu0 %v4162
        %5979 = vmatpush1.bf16.msra.mxu0 %v4161
        %5980 = vmatprep.subr.bf16.mxu0 %v4166
        %5981 = vmatpush1.bf16.msra.mxu0 %v4165
        %5982 = vmatprep.subr.bf16.mxu0 %v4170
        %5983 = vmatpush1.bf16.msra.mxu0 %v4169
        %5984 = vmatprep.subr.bf16.mxu0 %v4174
        %5985 = vmatpush1.bf16.msra.mxu0 %v4173
        %5986 = vmatprep.subr.bf16.mxu0 %v4178
        %5987 = vmatpush1.bf16.msra.mxu0 %v4177
        %5988 = vmatprep.subr.bf16.mxu0 %v4182
        %5989 = vmatpush1.bf16.msra.mxu0 %v4181
        %5990 = vmatprep.subr.bf16.mxu0 %v4186
        %5991 = vmatpush1.bf16.msra.mxu0 %v4185
        %5992 = vmatprep.subr.bf16.mxu0 %v4190
        %5993 = vmatpush1.bf16.msra.mxu0 %v4189
        %5994 = vmatprep.subr.bf16.mxu0 %v4194
        %5995 = vmatpush1.bf16.msra.mxu0 %v4193
        %5996 = vmatprep.subr.bf16.mxu0 %v4198
        %5997 = vmatpush1.bf16.msra.mxu0 %v4197
        %5998 = vmatprep.subr.bf16.mxu0 %v4202
        %5999 = vmatpush1.bf16.msra.mxu0 %v4201
        %6000 = vmatprep.subr.bf16.mxu0 %v4206
        %6001 = vmatpush1.bf16.msra.mxu0 %v4205
        %6002 = vmatprep.subr.bf16.mxu0 %v4210
        %6003 = vmatpush1.bf16.msra.mxu0 %v4209
        %6004 = vmatprep.subr.bf16.mxu0 %v4214
        %6005 = vmatpush1.bf16.msra.mxu0 %v4213
        %6006 = vmatprep.subr.bf16.mxu0 %v4218
        %6007 = vmatpush1.bf16.msra.mxu0 %v4217
        %6008 = vmatprep.mubr.bf16.mxu0 %v356
        %6009 = vmatmul.mubr.bf16.gmra.mrb[0].mxu0 %v355
        %v6010 = vpop.f32.mrb[0].mxu0
        %v6011 = vadd.f32 %v5968, %v6010
        %v6012 = vpop.f32.mrb[0].mxu0
        %v6013 = vadd.f32 %v5970, %v6012
        %v6014 = vpop.f32.mrb[0].mxu0
        %v6015 = vadd.f32 %v5972, %v6014
        %v6016 = vpop.f32.mrb[0].mxu0
        %v6017 = vadd.f32 %v5974, %v6016
        %6018 = vdwg.mxu0
        %v6019 = vmax.f32 %v5495, 0.0
        %v6020 = vmax.f32 %v5497, 0.0
        %v6021 = vmax.f32 %v6011, 0.0
        %v6022 = vmax.f32 %v6013, 0.0
        %v6023 = vmax.f32 %v5499, 0.0
        %v6024 = vmax.f32 %v5501, 0.0
        %v6025 = vmax.f32 %v6015, 0.0
        %v6026 = vmax.f32 %v6017, 0.0
        %6027 = vst [vmem:[%s277] sm:$0xff] %v6019
        %6028 = vst [vmem:[%s277 + $0x8] sm:$0xff] %v6020
        %6029 = vst [vmem:[%s277 + $0x10] sm:$0xff] %v6021
        %6030 = vst [vmem:[%s277 + $0x18] sm:$0xff] %v6022
        %6031 = vst [vmem:[%s277 + $0x20] sm:$0xff] %v6023
        %6032 = vst [vmem:[%s277 + $0x28] sm:$0xff] %v6024
        %6033 = vst [vmem:[%s277 + $0x30] sm:$0xff] %v6025
        %6034 = vst [vmem:[%s277 + $0x38] sm:$0xff] %v6026
        %s6035 = sand.u32 %s132, 1
        %s6036 = scalar_lea.sflag [#allocation4], %s6035
        %s6037 = sand.u32 %s132, 1
        %s6038 = smul.addr %s6037, 64
        %s6039 = scalar_lea.vmem [#allocation8], %s6038
        // Predicated region
        $region45: #{tpu_custom_call.1} parent=31 // pred_check
          %p6040 = pneg %p142
        $region46: #{tpu_custom_call.1} parent=31 // pred_check_branch
          %6042 = sbr.rel (%p6040) target = $region48
        $region47: #{tpu_custom_call.1} parent=31 // pred_region
          %s6043 = smul.u32 2, %s26
          %s6044 = smul.u32 4, %s27
          %s6046 = ssub.s32 1024, 1024
          %6047 = vsyncadd %s6036, %s6046
          %s6048 = smul.addr %s6043, 8
          %s6049 = sadd.s32 %s6044, %s6048
          %s6050 = smul.addr %s6049, 128
          %s6051 = scalar_lea.hbm %s3, %s6050
          %s6052 = sshll.u32 %s6039, 4
          %s6053 = int_to_ptr.vmem [resolvable:$true] %s6052
          %6058 = dma.vmem_to_hbm [thread:$0]  %s6053, 1024, %s6051, %s6036, 512, 1024, 32
        $region48: #{tpu_custom_call.1} parent=31 // pred_fallthru
          _
      $region32: #{tpu_custom_call.1} parent=5 // pred_fallthru
        _
      %p6059 = scmp.le.s32.totalorder 2, %s16
      // Predicated region
      $region49: #{tpu_custom_call.1} parent=5 // pred_check
        %p6060 = pneg %p6059
      $region50: #{tpu_custom_call.1} parent=5 // pred_check_branch
        %6062 = sbr.rel (%p6060) target = $region52
      $region51: #{tpu_custom_call.1} parent=5 // pred_region
        %s6063 = ssub.s32 %s16, 2
        // Predicated region
        $region53: #{tpu_custom_call.1} parent=51 // pred_check
          %p6064 = pneg %p148
        $region54: #{tpu_custom_call.1} parent=51 // pred_check_branch
          %6066 = sbr.rel (%p6064) target = $region56
        $region55: #{tpu_custom_call.1} parent=51 // pred_region
          %s6067 = sand.u32 %s133, 1
          %s6068 = scalar_lea.sflag [#allocation4], %s6067
          %s6069 = sand.u32 %s133, 1
          %s6070 = smul.addr %s6069, 64
          %s6071 = scalar_lea.vmem [#allocation8], %s6070
          %6072 = dma.done %s6068, 1024
        $region56: #{tpu_custom_call.1} parent=51 // pred_fallthru
          _
      $region52: #{tpu_custom_call.1} parent=5 // pred_fallthru
        _
    $region6: #{tpu_custom_call.1} parent=1 // loop_footer
      %s20 = sadd.s32 1, %s16
    $region7: #{tpu_custom_call.1} parent=1 // loop_footer_branch
      %15 = sbr.rel target = $region3
    $region8: #{tpu_custom_call.1} parent=1 // loop_exit
      _
    %6073 = vsyncpa [#allocation3], 1
    %s6074 = scalar_lea.sflag [#allocation3], 1
    %6075 = vsyncpa %s6074, 1
    %6076 = vsyncpa [#allocation6], 1
    %s6077 = scalar_lea.sflag [#allocation6], 1
    %6078 = vsyncpa %s6077, 1
    %6079 = vsyncpa [#allocation4], 1
    %s6080 = scalar_lea.sflag [#allocation4], 1
    %6081 = vsyncpa %s6080, 1

</llo_original>
